<compile_context>
chip_gen: v7x
topology: tpu7x:2x2x1
jax: 0.10.0
libtpu: 0.0.40
codegen_flags: <defaults>
</compile_context>

<pallas_src>
import functools

import jax
import jax.numpy as jnp
from jax.experimental import pallas as pl
from jax.experimental.pallas import tpu as pltpu

LANE = 128  # lane-dim padding quantum


# ---------------------------------------------------------------------------
# Pallas kernels
# ---------------------------------------------------------------------------
def _conv_pool_kernel(p_ref, w_ref, b_ref, o_ref, *, P):
    """Fused conv-as-matmul + bias + ReLU + 2x2 maxpool for one sample.

    p_ref: (4*P, Kpad) bf16 im2col patches, rows grouped corner-major
           (corner c rows = [c*P, (c+1)*P)).
    w_ref: (Kpad, 128) bf16, b_ref: (1, 128) f32, o_ref: (P, 128).
    pool(relu(conv+b)) == relu(max_corners(conv) + b)  (ReLU monotone).
    """
    w = w_ref[...]
    y = jnp.dot(p_ref[0:P, :], w, preferred_element_type=jnp.float32)
    for c in range(1, 4):
        yc = jnp.dot(p_ref[c * P:(c + 1) * P, :], w,
                     preferred_element_type=jnp.float32)
        y = jnp.maximum(y, yc)
    y = jnp.maximum(y + b_ref[...], 0.0)
    o_ref[...] = y.astype(o_ref.dtype)


def _fc_stack_kernel(x_ref, w1_ref, b1_ref, w2_ref, b2_ref, w3_ref, b3_ref,
                     o_ref):
    """fc1 -> ReLU -> fc2 -> ReLU -> fc3, weights resident, no HBM intermediates."""
    h = jnp.dot(x_ref[...], w1_ref[...], preferred_element_type=jnp.float32)
    h = jnp.maximum(h + b1_ref[...], 0.0).astype(jnp.bfloat16)
    h = jnp.dot(h, w2_ref[...], preferred_element_type=jnp.float32)
    h = jnp.maximum(h + b2_ref[...], 0.0).astype(jnp.bfloat16)
    y = jnp.dot(h, w3_ref[...], preferred_element_type=jnp.float32) + b3_ref[...]
    o_ref[...] = y.astype(o_ref.dtype)


# ---------------------------------------------------------------------------
# Pallas wrappers
# ---------------------------------------------------------------------------
def conv_pool_stage(patches, w, b, *, P):
    """patches: (B, 4*P, Kpad) bf16 -> pooled activation (B, P, 128) bf16."""
    B, rows, kp = patches.shape
    assert rows == 4 * P
    kernel = functools.partial(_conv_pool_kernel, P=P)
    return pl.pallas_call(
        kernel,
        out_shape=jax.ShapeDtypeStruct((B, P, LANE), jnp.bfloat16),
        grid=(B,),
        in_specs=[
            pl.BlockSpec((None, rows, kp), lambda bi: (bi, 0, 0)),
            pl.BlockSpec((kp, LANE), lambda bi: (0, 0)),   # weight: VMEM-resident
            pl.BlockSpec((1, LANE), lambda bi: (0, 0)),    # bias:   VMEM-resident
        ],
        out_specs=pl.BlockSpec((None, P, LANE), lambda bi: (bi, 0, 0)),
        compiler_params=pltpu.CompilerParams(
            dimension_semantics=("parallel",),
            vmem_limit_bytes=32 * 1024 * 1024,
        ),
    )(patches, w, b)


def fc_stack(x, w1, b1, w2, b2, w3, b3):
    """x: (B, 25*128) bf16 -> logits (B, 128) f32 (first 10 lanes valid)."""
    B = x.shape[0]
    return pl.pallas_call(
        _fc_stack_kernel,
        out_shape=jax.ShapeDtypeStruct((B, LANE), jnp.float32),
        in_specs=[
            pl.BlockSpec(x.shape, lambda: (0, 0)),
            pl.BlockSpec(w1.shape, lambda: (0, 0)),
            pl.BlockSpec(b1.shape, lambda: (0, 0)),
            pl.BlockSpec(w2.shape, lambda: (0, 0)),
            pl.BlockSpec(b2.shape, lambda: (0, 0)),
            pl.BlockSpec(w3.shape, lambda: (0, 0)),
            pl.BlockSpec(b3.shape, lambda: (0, 0)),
        ],
        out_specs=pl.BlockSpec((B, LANE), lambda: (0, 0)),
        compiler_params=pltpu.CompilerParams(
            vmem_limit_bytes=32 * 1024 * 1024,
        ),
    )(x, w1, b1, w2, b2, w3, b3)


# ---------------------------------------------------------------------------
# XLA-side layout glue: im2col with corner-major row ordering
# ---------------------------------------------------------------------------
def im2col_pool_order(x, kh, kw, k_pad):
    """x: (B, H, W, C) NHWC -> patches (B, 4*P, k_pad).

    P = (H-kh+1)//2 * (W-kw+1)//2. Row index = corner*P + ph*pw_n + pw where
    corner = di*2 + dj and the conv output position is (2*ph+di, 2*pw+dj).
    Columns are ordered (kh, kw, C) then zero-padded to k_pad.
    """
    B, H, W, C = x.shape
    oh, ow = H - kh + 1, W - kw + 1
    ph_n, pw_n = oh // 2, ow // 2
    P = ph_n * pw_n
    K = kh * kw * C
    cols = jnp.stack(
        [x[:, i:i + oh, j:j + ow, :] for i in range(kh) for j in range(kw)],
        axis=3,
    ).reshape(B, oh, ow, K)
    cols = cols[:, :2 * ph_n, :2 * pw_n, :]
    cols = cols.reshape(B, ph_n, 2, pw_n, 2, K)
    cols = jnp.transpose(cols, (0, 2, 4, 1, 3, 5)).reshape(B, 4 * P, K)
    if k_pad > K:
        cols = jnp.pad(cols, ((0, 0), (0, 0), (0, k_pad - K)))
    return cols


# ---------------------------------------------------------------------------
# Parameters: raw (PyTorch layout) + one-time layout preparation
# ---------------------------------------------------------------------------
def init_raw_params(key):
    ks = jax.random.split(key, 10)

    def w(k, shape, fan_in):
        return jax.random.normal(k, shape, jnp.float32) / jnp.sqrt(fan_in)

    return {
        "conv1_w": w(ks[0], (6, 3, 5, 5), 3 * 5 * 5),
        "conv1_b": w(ks[1], (6,), 3 * 5 * 5),
        "conv2_w": w(ks[2], (16, 6, 5, 5), 6 * 5 * 5),
        "conv2_b": w(ks[3], (16,), 6 * 5 * 5),
        "fc1_w":  w(ks[4], (120, 400), 400),
        "fc1_b":  w(ks[5], (120,), 400),
        "fc2_w":  w(ks[6], (84, 120), 120),
        "fc2_b":  w(ks[7], (84,), 120),
        "fc3_w":  w(ks[8], (10, 84), 84),
        "fc3_b":  w(ks[9], (10,), 84),
    }


def prepare_params(raw):
    """One-time weight layout: transposes, 128-lane padding, K padding, and
    the NCHW-flatten permutation folded into fc1's weight matrix."""
    def conv_w(w, k_pad):
        cout, cin, kh, kw = w.shape
        wm = jnp.transpose(w, (2, 3, 1, 0)).reshape(kh * kw * cin, cout)
        wm = jnp.pad(wm, ((0, k_pad - kh * kw * cin), (0, LANE - cout)))
        return wm.astype(jnp.bfloat16)

    def pad_bias(b):
        return jnp.pad(b, (0, LANE - b.shape[0])).reshape(1, LANE).astype(jnp.float32)

    def fc_w(w):  # PyTorch (out, in) -> padded (128, 128), acting as x @ W
        out_f, in_f = w.shape
        wt = jnp.transpose(w)
        wt = jnp.pad(wt, ((0, LANE - in_f), (0, LANE - out_f)))
        return wt.astype(jnp.bfloat16)

    # fc1: conv2-stage output per sample is laid out (s = h*5+w, lane = c),
    # lanes padded to 128; PyTorch flatten index is f = c*25 + s.  Fold that
    # permutation into the weight: row (s*128 + c) of W1 = fc1_w.T[c*25 + s].
    w1t = jnp.transpose(raw["fc1_w"])                # (400, 120), row f = c*25+s
    w1t = w1t.reshape(16, 25, 120)                   # (c, s, n)
    w1t = jnp.transpose(w1t, (1, 0, 2))              # (s, c, n)
    w1t = jnp.pad(w1t, ((0, 0), (0, LANE - 16), (0, LANE - 120)))
    w1 = w1t.reshape(25 * LANE, LANE).astype(jnp.bfloat16)

    return {
        "conv1_w": conv_w(raw["conv1_w"], 128),      # K: 75  -> 128
        "conv1_b": pad_bias(raw["conv1_b"]),
        "conv2_w": conv_w(raw["conv2_w"], 256),      # K: 150 -> 256
        "conv2_b": pad_bias(raw["conv2_b"]),
        "fc1_w": w1,                                 # (3200, 128)
        "fc1_b": pad_bias(raw["fc1_b"]),
        "fc2_w": fc_w(raw["fc2_w"]),                 # (128, 128)
        "fc2_b": pad_bias(raw["fc2_b"]),
        "fc3_w": fc_w(raw["fc3_w"]),                 # (128, 128)
        "fc3_b": pad_bias(raw["fc3_b"]),
    }


# ---------------------------------------------------------------------------
# Forward pass
# ---------------------------------------------------------------------------
def net_forward(x_nchw, p):
    B = x_nchw.shape[0]
    x = jnp.transpose(x_nchw, (0, 2, 3, 1))                        # (B,32,32,3)

    # conv1 + ReLU + pool  (fused kernel): (B, 784, 128) -> (B, 196, 128)
    pat1 = im2col_pool_order(x, 5, 5, 128).astype(jnp.bfloat16)
    a1 = conv_pool_stage(pat1, p["conv1_w"], p["conv1_b"], P=14 * 14)

    # conv2 + ReLU + pool  (fused kernel): (B, 100, 256) -> (B, 25, 128)
    act1 = a1[:, :, :6].reshape(B, 14, 14, 6)                      # NHWC, bf16
    pat2 = im2col_pool_order(act1, 5, 5, 256)
    a2 = conv_pool_stage(pat2, p["conv2_w"], p["conv2_b"], P=5 * 5)

    # fc1 -> ReLU -> fc2 -> ReLU -> fc3  (fused kernel); the PyTorch
    # x.view(-1, 400) permutation is already folded into fc1_w.
    x_fc = a2.reshape(B, 25 * LANE)                                # (B, 3200)
    logits = fc_stack(x_fc, p["fc1_w"], p["fc1_b"], p["fc2_w"], p["fc2_b"],
                      p["fc3_w"], p["fc3_b"])                      # (B, 128) f32
    return logits[:, :10]                                          # (B, 10)


if __name__ == "__main__":
    key = jax.random.PRNGKey(0)
    k_x, k_p = jax.random.split(key)
    # Net requires 32x32 spatial input (16*5*5 flatten); small batch of 2.
    x = jax.random.normal(k_x, (2, 3, 32, 32), jnp.float32)
    params = prepare_params(init_raw_params(k_p))

    out = jax.jit(net_forward)(x, params)
    out = jax.block_until_ready(out)
    assert out.shape == (2, 10) and out.dtype == jnp.float32
    assert bool(jnp.all(jnp.isfinite(out)))
    print("KERNEL_OK")
</pallas_src>

<mosaic_0001>
module attributes {stable_mosaic.version = 11 : i64} {
  func.func @_conv_pool_kernel(%arg0: i32, %arg1: memref<1x784x128xbf16, #tpu.memory_space<vmem>>, %arg2: memref<128x128xbf16, #tpu.memory_space<vmem>>, %arg3: memref<1x128xf32, #tpu.memory_space<vmem>>, %arg4: memref<1x196x128xbf16, #tpu.memory_space<vmem>>) attributes {dimension_semantics = [#tpu.dimension_semantics<parallel>], iteration_bounds = array<i64: 2>, scalar_prefetch = 0 : i64, scratch_operands = 0 : i64, tpu.core_type = #tpu.core_type<tc>, window_params = [{transform_indices = @transform_0, window_bounds = array<i64: 1, 784, 128>}, {pipeline_mode = #tpu.pipeline_mode<synchronous>, transform_indices = @transform_1, window_bounds = array<i64: 128, 128>}, {pipeline_mode = #tpu.pipeline_mode<synchronous>, transform_indices = @transform_2, window_bounds = array<i64: 1, 128>}, {transform_indices = @transform_3, window_bounds = array<i64: 1, 196, 128>}]} {
    %c0 = arith.constant 0 : index
    %c0_0 = arith.constant 0 : index
    %0 = vector.load %arg2[%c0, %c0_0] : memref<128x128xbf16, #tpu.memory_space<vmem>>, vector<128x128xbf16>
    %c0_1 = arith.constant 0 : index
    %c0_2 = arith.constant 0 : index
    %c0_3 = arith.constant 0 : index
    %1 = vector.load %arg1[%c0_1, %c0_2, %c0_3] : memref<1x784x128xbf16, #tpu.memory_space<vmem>>, vector<1x196x128xbf16>
    %2 = vector.shape_cast %1 : vector<1x196x128xbf16> to vector<196x128xbf16>
    %cst = arith.constant dense<0.000000e+00> : vector<196x128xf32>
    %3 = tpu.matmul %2, %0, %cst {dimension_numbers = #tpu.dot_dimension_numbers<[1], [0], [0], [1], [0, 0, 1, 1], [], []>} : vector<196x128xbf16>, vector<128x128xbf16>, vector<196x128xf32> -> vector<196x128xf32>
    %c0_4 = arith.constant 0 : index
    %c196 = arith.constant 196 : index
    %c0_5 = arith.constant 0 : index
    %4 = vector.load %arg1[%c0_4, %c196, %c0_5] : memref<1x784x128xbf16, #tpu.memory_space<vmem>>, vector<1x196x128xbf16>
    %5 = vector.shape_cast %4 : vector<1x196x128xbf16> to vector<196x128xbf16>
    %cst_6 = arith.constant dense<0.000000e+00> : vector<196x128xf32>
    %6 = tpu.matmul %5, %0, %cst_6 {dimension_numbers = #tpu.dot_dimension_numbers<[1], [0], [0], [1], [0, 0, 1, 1], [], []>} : vector<196x128xbf16>, vector<128x128xbf16>, vector<196x128xf32> -> vector<196x128xf32>
    %7 = arith.maximumf %3, %6 : vector<196x128xf32>
    %c0_7 = arith.constant 0 : index
    %c392 = arith.constant 392 : index
    %c0_8 = arith.constant 0 : index
    %8 = vector.load %arg1[%c0_7, %c392, %c0_8] : memref<1x784x128xbf16, #tpu.memory_space<vmem>>, vector<1x196x128xbf16>
    %9 = vector.shape_cast %8 : vector<1x196x128xbf16> to vector<196x128xbf16>
    %cst_9 = arith.constant dense<0.000000e+00> : vector<196x128xf32>
    %10 = tpu.matmul %9, %0, %cst_9 {dimension_numbers = #tpu.dot_dimension_numbers<[1], [0], [0], [1], [0, 0, 1, 1], [], []>} : vector<196x128xbf16>, vector<128x128xbf16>, vector<196x128xf32> -> vector<196x128xf32>
    %11 = arith.maximumf %7, %10 : vector<196x128xf32>
    %c0_10 = arith.constant 0 : index
    %c588 = arith.constant 588 : index
    %c0_11 = arith.constant 0 : index
    %12 = vector.load %arg1[%c0_10, %c588, %c0_11] : memref<1x784x128xbf16, #tpu.memory_space<vmem>>, vector<1x196x128xbf16>
    %13 = vector.shape_cast %12 : vector<1x196x128xbf16> to vector<196x128xbf16>
    %cst_12 = arith.constant dense<0.000000e+00> : vector<196x128xf32>
    %14 = tpu.matmul %13, %0, %cst_12 {dimension_numbers = #tpu.dot_dimension_numbers<[1], [0], [0], [1], [0, 0, 1, 1], [], []>} : vector<196x128xbf16>, vector<128x128xbf16>, vector<196x128xf32> -> vector<196x128xf32>
    %15 = arith.maximumf %11, %14 : vector<196x128xf32>
    %c0_13 = arith.constant 0 : index
    %c0_14 = arith.constant 0 : index
    %16 = vector.load %arg3[%c0_13, %c0_14] : memref<1x128xf32, #tpu.memory_space<vmem>>, vector<1x128xf32>
    %17 = vector.broadcast %16 : vector<1x128xf32> to vector<196x128xf32>
    %18 = arith.addf %15, %17 : vector<196x128xf32>
    %cst_15 = arith.constant 0.000000e+00 : f32
    %19 = vector.broadcast %cst_15 : f32 to vector<196x128xf32>
    %20 = arith.maximumf %18, %19 : vector<196x128xf32>
    %21 = arith.truncf %20 : vector<196x128xf32> to vector<196x128xbf16>
    %c0_16 = arith.constant 0 : index
    %c0_17 = arith.constant 0 : index
    %c0_18 = arith.constant 0 : index
    %22 = vector.load %arg4[%c0_16, %c0_17, %c0_18] : memref<1x196x128xbf16, #tpu.memory_space<vmem>>, vector<1x196x128xbf16>
    %23 = vector.shape_cast %22 : vector<1x196x128xbf16> to vector<196x128xbf16>
    %24 = vector.shape_cast %21 : vector<196x128xbf16> to vector<1x196x128xbf16>
    tpu.vector_store %arg4[%c0_16, %c0_17, %c0_18], %24 {strides = array<i32>} : memref<1x196x128xbf16, #tpu.memory_space<vmem>>, vector<1x196x128xbf16>,
    return
  }
  func.func @transform_0(%arg0: i32) -> (i32, i32, i32) {
    %c0_i32 = arith.constant 0 : i32
    %c0_i32_0 = arith.constant 0 : i32
    %c0_i32_1 = arith.constant 0 : i32
    return %arg0, %c0_i32, %c0_i32_0 : i32, i32, i32
  }
  func.func @transform_1(%arg0: i32) -> (i32, i32) {
    %c0_i32 = arith.constant 0 : i32
    %c0_i32_0 = arith.constant 0 : i32
    %c0_i32_1 = arith.constant 0 : i32
    return %c0_i32, %c0_i32_0 : i32, i32
  }
  func.func @transform_2(%arg0: i32) -> (i32, i32) {
    %c0_i32 = arith.constant 0 : i32
    %c0_i32_0 = arith.constant 0 : i32
    %c0_i32_1 = arith.constant 0 : i32
    return %c0_i32, %c0_i32_0 : i32, i32
  }
  func.func @transform_3(%arg0: i32) -> (i32, i32, i32) {
    %c0_i32 = arith.constant 0 : i32
    %c0_i32_0 = arith.constant 0 : i32
    %c0_i32_1 = arith.constant 0 : i32
    return %arg0, %c0_i32, %c0_i32_0 : i32, i32, i32
  }
}

module attributes {stable_mosaic.version = 11 : i64} {
  func.func @_conv_pool_kernel(%arg0: i32, %arg1: memref<1x100x256xbf16, #tpu.memory_space<vmem>>, %arg2: memref<256x128xbf16, #tpu.memory_space<vmem>>, %arg3: memref<1x128xf32, #tpu.memory_space<vmem>>, %arg4: memref<1x25x128xbf16, #tpu.memory_space<vmem>>) attributes {dimension_semantics = [#tpu.dimension_semantics<parallel>], iteration_bounds = array<i64: 2>, scalar_prefetch = 0 : i64, scratch_operands = 0 : i64, tpu.core_type = #tpu.core_type<tc>, window_params = [{transform_indices = @transform_0, window_bounds = array<i64: 1, 100, 256>}, {pipeline_mode = #tpu.pipeline_mode<synchronous>, transform_indices = @transform_1, window_bounds = array<i64: 256, 128>}, {pipeline_mode = #tpu.pipeline_mode<synchronous>, transform_indices = @transform_2, window_bounds = array<i64: 1, 128>}, {transform_indices = @transform_3, window_bounds = array<i64: 1, 25, 128>}]} {
    %c0 = arith.constant 0 : index
    %c0_0 = arith.constant 0 : index
    %0 = vector.load %arg2[%c0, %c0_0] : memref<256x128xbf16, #tpu.memory_space<vmem>>, vector<256x128xbf16>
    %c0_1 = arith.constant 0 : index
    %c0_2 = arith.constant 0 : index
    %c0_3 = arith.constant 0 : index
    %1 = vector.load %arg1[%c0_1, %c0_2, %c0_3] : memref<1x100x256xbf16, #tpu.memory_space<vmem>>, vector<1x25x256xbf16>
    %2 = vector.shape_cast %1 : vector<1x25x256xbf16> to vector<25x256xbf16>
    %cst = arith.constant dense<0.000000e+00> : vector<25x128xf32>
    %3 = tpu.matmul %2, %0, %cst {dimension_numbers = #tpu.dot_dimension_numbers<[1], [0], [0], [1], [0, 0, 1, 1], [], []>} : vector<25x256xbf16>, vector<256x128xbf16>, vector<25x128xf32> -> vector<25x128xf32>
    %c0_4 = arith.constant 0 : index
    %c25 = arith.constant 25 : index
    %c0_5 = arith.constant 0 : index
    %4 = vector.load %arg1[%c0_4, %c25, %c0_5] : memref<1x100x256xbf16, #tpu.memory_space<vmem>>, vector<1x25x256xbf16>
    %5 = vector.shape_cast %4 : vector<1x25x256xbf16> to vector<25x256xbf16>
    %cst_6 = arith.constant dense<0.000000e+00> : vector<25x128xf32>
    %6 = tpu.matmul %5, %0, %cst_6 {dimension_numbers = #tpu.dot_dimension_numbers<[1], [0], [0], [1], [0, 0, 1, 1], [], []>} : vector<25x256xbf16>, vector<256x128xbf16>, vector<25x128xf32> -> vector<25x128xf32>
    %7 = arith.maximumf %3, %6 : vector<25x128xf32>
    %c0_7 = arith.constant 0 : index
    %c50 = arith.constant 50 : index
    %c0_8 = arith.constant 0 : index
    %8 = vector.load %arg1[%c0_7, %c50, %c0_8] : memref<1x100x256xbf16, #tpu.memory_space<vmem>>, vector<1x25x256xbf16>
    %9 = vector.shape_cast %8 : vector<1x25x256xbf16> to vector<25x256xbf16>
    %cst_9 = arith.constant dense<0.000000e+00> : vector<25x128xf32>
    %10 = tpu.matmul %9, %0, %cst_9 {dimension_numbers = #tpu.dot_dimension_numbers<[1], [0], [0], [1], [0, 0, 1, 1], [], []>} : vector<25x256xbf16>, vector<256x128xbf16>, vector<25x128xf32> -> vector<25x128xf32>
    %11 = arith.maximumf %7, %10 : vector<25x128xf32>
    %c0_10 = arith.constant 0 : index
    %c75 = arith.constant 75 : index
    %c0_11 = arith.constant 0 : index
    %12 = vector.load %arg1[%c0_10, %c75, %c0_11] : memref<1x100x256xbf16, #tpu.memory_space<vmem>>, vector<1x25x256xbf16>
    %13 = vector.shape_cast %12 : vector<1x25x256xbf16> to vector<25x256xbf16>
    %cst_12 = arith.constant dense<0.000000e+00> : vector<25x128xf32>
    %14 = tpu.matmul %13, %0, %cst_12 {dimension_numbers = #tpu.dot_dimension_numbers<[1], [0], [0], [1], [0, 0, 1, 1], [], []>} : vector<25x256xbf16>, vector<256x128xbf16>, vector<25x128xf32> -> vector<25x128xf32>
    %15 = arith.maximumf %11, %14 : vector<25x128xf32>
    %c0_13 = arith.constant 0 : index
    %c0_14 = arith.constant 0 : index
    %16 = vector.load %arg3[%c0_13, %c0_14] : memref<1x128xf32, #tpu.memory_space<vmem>>, vector<1x128xf32>
    %17 = vector.broadcast %16 : vector<1x128xf32> to vector<25x128xf32>
    %18 = arith.addf %15, %17 : vector<25x128xf32>
    %cst_15 = arith.constant 0.000000e+00 : f32
    %19 = vector.broadcast %cst_15 : f32 to vector<25x128xf32>
    %20 = arith.maximumf %18, %19 : vector<25x128xf32>
    %21 = arith.truncf %20 : vector<25x128xf32> to vector<25x128xbf16>
    %c0_16 = arith.constant 0 : index
    %c0_17 = arith.constant 0 : index
    %c0_18 = arith.constant 0 : index
    %22 = vector.load %arg4[%c0_16, %c0_17, %c0_18] : memref<1x25x128xbf16, #tpu.memory_space<vmem>>, vector<1x25x128xbf16>
    %23 = vector.shape_cast %22 : vector<1x25x128xbf16> to vector<25x128xbf16>
    %24 = vector.shape_cast %21 : vector<25x128xbf16> to vector<1x25x128xbf16>
    tpu.vector_store %arg4[%c0_16, %c0_17, %c0_18], %24 {strides = array<i32>} : memref<1x25x128xbf16, #tpu.memory_space<vmem>>, vector<1x25x128xbf16>,
    return
  }
  func.func @transform_0(%arg0: i32) -> (i32, i32, i32) {
    %c0_i32 = arith.constant 0 : i32
    %c0_i32_0 = arith.constant 0 : i32
    %c0_i32_1 = arith.constant 0 : i32
    return %arg0, %c0_i32, %c0_i32_0 : i32, i32, i32
  }
  func.func @transform_1(%arg0: i32) -> (i32, i32) {
    %c0_i32 = arith.constant 0 : i32
    %c0_i32_0 = arith.constant 0 : i32
    %c0_i32_1 = arith.constant 0 : i32
    return %c0_i32, %c0_i32_0 : i32, i32
  }
  func.func @transform_2(%arg0: i32) -> (i32, i32) {
    %c0_i32 = arith.constant 0 : i32
    %c0_i32_0 = arith.constant 0 : i32
    %c0_i32_1 = arith.constant 0 : i32
    return %c0_i32, %c0_i32_0 : i32, i32
  }
  func.func @transform_3(%arg0: i32) -> (i32, i32, i32) {
    %c0_i32 = arith.constant 0 : i32
    %c0_i32_0 = arith.constant 0 : i32
    %c0_i32_1 = arith.constant 0 : i32
    return %arg0, %c0_i32, %c0_i32_0 : i32, i32, i32
  }
}

module attributes {stable_mosaic.version = 11 : i64} {
  func.func @_fc_stack_kernel(%arg0: memref<2x3200xbf16, #tpu.memory_space<vmem>>, %arg1: memref<3200x128xbf16, #tpu.memory_space<vmem>>, %arg2: memref<1x128xf32, #tpu.memory_space<vmem>>, %arg3: memref<128x128xbf16, #tpu.memory_space<vmem>>, %arg4: memref<1x128xf32, #tpu.memory_space<vmem>>, %arg5: memref<128x128xbf16, #tpu.memory_space<vmem>>, %arg6: memref<1x128xf32, #tpu.memory_space<vmem>>, %arg7: memref<2x128xf32, #tpu.memory_space<vmem>>) attributes {dimension_semantics = [], scalar_prefetch = 0 : i64, scratch_operands = 0 : i64, tpu.core_type = #tpu.core_type<tc>} {
    %c0 = arith.constant 0 : index
    %c0_0 = arith.constant 0 : index
    %0 = vector.load %arg0[%c0, %c0_0] : memref<2x3200xbf16, #tpu.memory_space<vmem>>, vector<2x3200xbf16>
    %c0_1 = arith.constant 0 : index
    %c0_2 = arith.constant 0 : index
    %1 = vector.load %arg1[%c0_1, %c0_2] : memref<3200x128xbf16, #tpu.memory_space<vmem>>, vector<3200x128xbf16>
    %cst = arith.constant dense<0.000000e+00> : vector<2x128xf32>
    %2 = tpu.matmul %0, %1, %cst {dimension_numbers = #tpu.dot_dimension_numbers<[1], [0], [0], [1], [0, 0, 1, 1], [], []>} : vector<2x3200xbf16>, vector<3200x128xbf16>, vector<2x128xf32> -> vector<2x128xf32>
    %c0_3 = arith.constant 0 : index
    %c0_4 = arith.constant 0 : index
    %3 = vector.load %arg2[%c0_3, %c0_4] : memref<1x128xf32, #tpu.memory_space<vmem>>, vector<1x128xf32>
    %4 = vector.broadcast %3 : vector<1x128xf32> to vector<2x128xf32>
    %5 = arith.addf %2, %4 : vector<2x128xf32>
    %cst_5 = arith.constant 0.000000e+00 : f32
    %6 = vector.broadcast %cst_5 : f32 to vector<2x128xf32>
    %7 = arith.maximumf %5, %6 : vector<2x128xf32>
    %8 = arith.truncf %7 : vector<2x128xf32> to vector<2x128xbf16>
    %c0_6 = arith.constant 0 : index
    %c0_7 = arith.constant 0 : index
    %9 = vector.load %arg3[%c0_6, %c0_7] : memref<128x128xbf16, #tpu.memory_space<vmem>>, vector<128x128xbf16>
    %cst_8 = arith.constant dense<0.000000e+00> : vector<2x128xf32>
    %10 = tpu.matmul %8, %9, %cst_8 {dimension_numbers = #tpu.dot_dimension_numbers<[1], [0], [0], [1], [0, 0, 1, 1], [], []>} : vector<2x128xbf16>, vector<128x128xbf16>, vector<2x128xf32> -> vector<2x128xf32>
    %c0_9 = arith.constant 0 : index
    %c0_10 = arith.constant 0 : index
    %11 = vector.load %arg4[%c0_9, %c0_10] : memref<1x128xf32, #tpu.memory_space<vmem>>, vector<1x128xf32>
    %12 = vector.broadcast %11 : vector<1x128xf32> to vector<2x128xf32>
    %13 = arith.addf %10, %12 : vector<2x128xf32>
    %cst_11 = arith.constant 0.000000e+00 : f32
    %14 = vector.broadcast %cst_11 : f32 to vector<2x128xf32>
    %15 = arith.maximumf %13, %14 : vector<2x128xf32>
    %16 = arith.truncf %15 : vector<2x128xf32> to vector<2x128xbf16>
    %c0_12 = arith.constant 0 : index
    %c0_13 = arith.constant 0 : index
    %17 = vector.load %arg5[%c0_12, %c0_13] : memref<128x128xbf16, #tpu.memory_space<vmem>>, vector<128x128xbf16>
    %cst_14 = arith.constant dense<0.000000e+00> : vector<2x128xf32>
    %18 = tpu.matmul %16, %17, %cst_14 {dimension_numbers = #tpu.dot_dimension_numbers<[1], [0], [0], [1], [0, 0, 1, 1], [], []>} : vector<2x128xbf16>, vector<128x128xbf16>, vector<2x128xf32> -> vector<2x128xf32>
    %c0_15 = arith.constant 0 : index
    %c0_16 = arith.constant 0 : index
    %19 = vector.load %arg6[%c0_15, %c0_16] : memref<1x128xf32, #tpu.memory_space<vmem>>, vector<1x128xf32>
    %20 = vector.broadcast %19 : vector<1x128xf32> to vector<2x128xf32>
    %21 = arith.addf %18, %20 : vector<2x128xf32>
    %c0_17 = arith.constant 0 : index
    %c0_18 = arith.constant 0 : index
    %22 = vector.load %arg7[%c0_17, %c0_18] : memref<2x128xf32, #tpu.memory_space<vmem>>, vector<2x128xf32>
    tpu.vector_store %arg7[%c0_17, %c0_18], %21 {strides = array<i32>} : memref<2x128xf32, #tpu.memory_space<vmem>>, vector<2x128xf32>,
    return
  }
}

</mosaic_0001>

<llo_original>
// kernel: net_forward.3
$region0: #{net_forward.3}
  #allocation0 [shape = 'u32[]', space=smem, size = 0x4, offset = 0x4, fixed_abs, tag = 'smem constant byte address 0x4 - core index']
  #allocation1 [shape = 'u32[144,128]{1,0:T(1,128)}', space=vmem, size = 0x12000, scoped, tag = 'internal scratch']
  %s0 = inlined_call_operand.vmem [shape: bf16[2,784,128], index: 0, kind: input, shape index: {}]
  %s1 = inlined_call_operand.vmem [shape: bf16[128,128], index: 1, kind: input, shape index: {}]
  %s2 = inlined_call_operand.vmem [shape: f32[1,128], index: 2, kind: input, shape index: {}]
  %s3 = inlined_call_operand.vmem [shape: bf16[2,196,128], index: 3, kind: output, shape index: {}]
  %s4 = sld [smem:[#allocation0]]
  $region45: #{net_forward.3} parent=0
    _
  %s6 = ssub.s32 1, %s4
  %s7 = scalar_select 0, %s6, %s4
  loop: start=0, step=1, limit=4
  $region2: #{net_forward.3} parent=0 // loop_pre_header
    _
  $region3: #{net_forward.3} parent=0 // loop_header
    %s9 = sphi 0, %s13
    %p10 = scmp.ge.s32.totalorder %s9, 4
    %s19 = sphi 0, %s21
    %s22 = sphi 0, %s19
    %s23 = sphi 0, %s22
    %s39 = sphi 0, %s23
    %s43 = sphi 0, %s43
    %s45 = sphi 0, %s43
    %s46 = sphi 0, %s45
    %s60 = sphi 0, %s46
    %s64 = sphi 0, %s64
    %s66 = sphi 0, %s64
    %s67 = sphi 0, %s66
    %s81 = sphi 0, %s67
    %s87 = sphi 0, %s89
    %s90 = sphi 0, %s87
    %s91 = sphi 0, %s90
    %s107 = sphi 0, %s91
  $region4: #{net_forward.3} parent=0 // loop_header_branch
    %12 = sbr.rel (%p10) target = $region8
  $region5: #{net_forward.3} parent=0 // loop_body
    %s14 = ssub.s32 %s9, 1
    %s15 = ssub.s32 %s9, 2
    %s16 = sadd.s32 %s9, 1
    %s17 = ssub.s32 %s9, %s16
    %p18 = scmp.eq.s32.totalorder %s17, 0
    %s20 = sadd.s32 %s19, 1
    %s21 = scalar_select %p18, %s19, %s20
    %p24 = pneg %p18
    %p25 = scmp.eq.s32.totalorder %s9, 1
    %p26 = por %p24, %p25
    %p27 = scmp.ne.s32.totalorder %s19, %s22
    %p28 = scmp.eq.s32.totalorder %s9, 0
    %p29 = por %p27, %p28
    %p30 = scmp.ne.s32.totalorder %s19, %s22
    %p31 = scmp.eq.s32.totalorder %s14, 1
    %p32 = por %p30, %p31
    %p33 = scmp.ne.s32.totalorder %s22, %s23
    %p34 = scmp.eq.s32.totalorder %s14, 0
    %p35 = por %p33, %p34
    %p36 = scmp.ne.s32.totalorder %s22, %s23
    %p37 = scmp.eq.s32.totalorder %s15, 1
    %p38 = por %p36, %p37
    %p40 = scmp.ne.s32.totalorder %s23, %s39
    %p41 = scmp.eq.s32.totalorder %s15, 0
    %p42 = por %p40, %p41
    %s44 = sadd.s32 %s43, 1
    %p47 = scmp.eq.s32.totalorder %s9, 1
    %p48 = scmp.ne.s32.totalorder %s43, %s45
    %p49 = scmp.eq.s32.totalorder %s9, 0
    %p50 = por %p48, %p49
    %p51 = scmp.ne.s32.totalorder %s43, %s45
    %p52 = scmp.eq.s32.totalorder %s14, 1
    %p53 = por %p51, %p52
    %p54 = scmp.ne.s32.totalorder %s45, %s46
    %p55 = scmp.eq.s32.totalorder %s14, 0
    %p56 = por %p54, %p55
    %p57 = scmp.ne.s32.totalorder %s45, %s46
    %p58 = scmp.eq.s32.totalorder %s15, 1
    %p59 = por %p57, %p58
    %p61 = scmp.ne.s32.totalorder %s46, %s60
    %p62 = scmp.eq.s32.totalorder %s15, 0
    %p63 = por %p61, %p62
    %s65 = sadd.s32 %s64, 1
    %p68 = scmp.eq.s32.totalorder %s9, 1
    %p69 = scmp.ne.s32.totalorder %s64, %s66
    %p70 = scmp.eq.s32.totalorder %s9, 0
    %p71 = por %p69, %p70
    %p72 = scmp.ne.s32.totalorder %s64, %s66
    %p73 = scmp.eq.s32.totalorder %s14, 1
    %p74 = por %p72, %p73
    %p75 = scmp.ne.s32.totalorder %s66, %s67
    %p76 = scmp.eq.s32.totalorder %s14, 0
    %p77 = por %p75, %p76
    %p78 = scmp.ne.s32.totalorder %s66, %s67
    %p79 = scmp.eq.s32.totalorder %s15, 1
    %p80 = por %p78, %p79
    %p82 = scmp.ne.s32.totalorder %s67, %s81
    %p83 = scmp.eq.s32.totalorder %s15, 0
    %p84 = por %p82, %p83
    %s85 = ssub.s32 %s9, %s16
    %p86 = scmp.eq.s32.totalorder %s85, 0
    %s88 = sadd.s32 %s87, 1
    %s89 = scalar_select %p86, %s87, %s88
    %p92 = pneg %p86
    %p93 = scmp.eq.s32.totalorder %s9, 1
    %p94 = por %p92, %p93
    %p95 = scmp.ne.s32.totalorder %s87, %s90
    %p96 = scmp.eq.s32.totalorder %s9, 0
    %p97 = por %p95, %p96
    %p98 = scmp.ne.s32.totalorder %s87, %s90
    %p99 = scmp.eq.s32.totalorder %s14, 1
    %p100 = por %p98, %p99
    %p101 = scmp.ne.s32.totalorder %s90, %s91
    %p102 = scmp.eq.s32.totalorder %s14, 0
    %p103 = por %p101, %p102
    %p104 = scmp.ne.s32.totalorder %s90, %s91
    %p105 = scmp.eq.s32.totalorder %s15, 1
    %p106 = por %p104, %p105
    %p108 = scmp.ne.s32.totalorder %s91, %s107
    %p109 = scmp.eq.s32.totalorder %s15, 0
    %p110 = por %p108, %p109
    %p111 = scmp.le.s32.totalorder 1, %s9
    %p112 = scmp.lt.s32.totalorder %s9, 3
    %p113 = pnand %p111, %p112
    %p114 = pneg %p113
    // Predicated region
    $region9: #{net_forward.3} parent=5 // pred_check
      _
    $region10: #{net_forward.3} parent=5 // pred_check_branch
      %116 = sbr.rel (%p113) target = $region12
    $region11: #{net_forward.3} parent=5 // pred_region
      %s117 = ssub.s32 %s9, 1
      // Predicated region
      $region13: #{net_forward.3} parent=11 // pred_check
        %p118 = pneg %p56
      $region14: #{net_forward.3} parent=11 // pred_check_branch
        %120 = sbr.rel (%p118) target = $region16
      $region15: #{net_forward.3} parent=11 // pred_region
        _
      $region16: #{net_forward.3} parent=11 // pred_fallthru
        _
      // Predicated region
      $region17: #{net_forward.3} parent=11 // pred_check
        %p121 = pneg %p77
      $region18: #{net_forward.3} parent=11 // pred_check_branch
        %123 = sbr.rel (%p121) target = $region20
      $region19: #{net_forward.3} parent=11 // pred_region
        _
      $region20: #{net_forward.3} parent=11 // pred_fallthru
        _
    $region12: #{net_forward.3} parent=5 // pred_fallthru
      _
    %p124 = scmp.lt.s32.totalorder %s9, 2
    // Predicated region
    $region21: #{net_forward.3} parent=5 // pred_check
      %p125 = pneg %p124
    $region22: #{net_forward.3} parent=5 // pred_check_branch
      %127 = sbr.rel (%p125) target = $region24
    $region23: #{net_forward.3} parent=5 // pred_region
      // Predicated region
      $region25: #{net_forward.3} parent=23 // pred_check
        %p128 = pneg %p29
      $region26: #{net_forward.3} parent=23 // pred_check_branch
        %130 = sbr.rel (%p128) target = $region28
      $region27: #{net_forward.3} parent=23 // pred_region
        %p131 = scmp.lt.s32.totalorder %s9, 1
        %s132 = scalar_select %p131, %s9, 1
        %s133 = smul.addr %s132, 98
        %s134 = smul.addr %s133, 4
        %s135 = scalar_lea.vmem %s0, %s134
      $region28: #{net_forward.3} parent=23 // pred_fallthru
        _
    $region24: #{net_forward.3} parent=5 // pred_fallthru
      _
    %p136 = scmp.le.s32.totalorder 1, %s9
    %p137 = scmp.lt.s32.totalorder %s9, 3
    %p138 = pnand %p136, %p137
    %p139 = pneg %p138
    // Predicated region
    $region29: #{net_forward.3} parent=5 // pred_check
      _
    $region30: #{net_forward.3} parent=5 // pred_check_branch
      %141 = sbr.rel (%p138) target = $region32
    $region31: #{net_forward.3} parent=5 // pred_region
      %s142 = ssub.s32 %s9, 1
      %p143 = scmp.lt.s32.totalorder %s14, 1
      %s144 = scalar_select %p143, %s14, 1
      %s145 = smul.addr %s144, 98
      %s146 = smul.addr %s145, 4
      %s147 = scalar_lea.vmem %s0, %s146
      %p148 = pneg %p35
      %p149 = pneg %p32
      %p150 = pneg %p56
      %p151 = pneg %p53
      %p152 = pneg %p77
      %p153 = pneg %p74
      %p154 = pneg %p103
      %p155 = pneg %p100
      %p156 = scmp.lt.s32.totalorder %s14, 1
      %s157 = scalar_select %p156, %s14, 1
      %s158 = smul.addr %s157, 25
      %s159 = smul.addr %s158, 4
      %s160 = scalar_lea.vmem %s3, %s159
      %p161 = scmp.lt.s32.totalorder %s14, 1
      %s162 = scalar_select %p161, %s14, 1
      %s163 = smul.addr %s162, 98
      %s164 = smul.addr %s163, 4
      %s165 = scalar_lea.vmem %s0, %s164
      %p166 = scmp.lt.s32.totalorder %s14, 1
      %s167 = scalar_select %p166, %s14, 1
      %s168 = smul.addr %s167, 25
      %s169 = smul.addr %s168, 4
      %s170 = scalar_lea.vmem %s3, %s169
      %v172 = vld [vmem:[%s1] sm:$0xf]
      %v173 = vld [vmem:[%s1 + $0x4] sm:$0xf]
      %v174 = vld [vmem:[%s1 + $0x8] sm:$0xf]
      %v175 = vld [vmem:[%s1 + $0xc] sm:$0xf]
      %v176 = vld [vmem:[%s1 + $0x10] sm:$0xf]
      %v177 = vld [vmem:[%s1 + $0x14] sm:$0xf]
      %v178 = vld [vmem:[%s1 + $0x18] sm:$0xf]
      %v179 = vld [vmem:[%s1 + $0x1c] sm:$0xf]
      %v180 = vld [vmem:[%s1 + $0x20] sm:$0xf]
      %v181 = vld [vmem:[%s1 + $0x24] sm:$0xf]
      %v182 = vld [vmem:[%s1 + $0x28] sm:$0xf]
      %v183 = vld [vmem:[%s1 + $0x2c] sm:$0xf]
      %v184 = vld [vmem:[%s1 + $0x30] sm:$0xf]
      %v185 = vld [vmem:[%s1 + $0x34] sm:$0xf]
      %v186 = vld [vmem:[%s1 + $0x38] sm:$0xf]
      %v187 = vld [vmem:[%s1 + $0x3c] sm:$0xf]
      %v188 = vld [vmem:[%s165] sm:$0xf]
      %v189 = vld [vmem:[%s165 + $0x4] sm:$0xf]
      %v190 = vld [vmem:[%s165 + $0x8] sm:$0xf]
      %v191 = vld [vmem:[%s165 + $0xc] sm:$0xf]
      %v192 = vld [vmem:[%s165 + $0x10] sm:$0xf]
      %v193 = vld [vmem:[%s165 + $0x14] sm:$0xf]
      %v194 = vld [vmem:[%s165 + $0x18] sm:$0xf]
      %v195 = vld [vmem:[%s165 + $0x1c] sm:$0xf]
      %v196 = vld [vmem:[%s165 + $0x20] sm:$0xf]
      %v197 = vld [vmem:[%s165 + $0x24] sm:$0xf]
      %v198 = vld [vmem:[%s165 + $0x28] sm:$0xf]
      %v199 = vld [vmem:[%s165 + $0x2c] sm:$0xf]
      %v200 = vld [vmem:[%s165 + $0x30] sm:$0xf]
      %v201 = vld [vmem:[%s165 + $0x34] sm:$0xf]
      %v202 = vld [vmem:[%s165 + $0x38] sm:$0xf]
      %v203 = vld [vmem:[%s165 + $0x3c] sm:$0xf]
      %v204 = vld [vmem:[%s165 + $0x40] sm:$0xf]
      %v205 = vld [vmem:[%s165 + $0x44] sm:$0xf]
      %v206 = vld [vmem:[%s165 + $0x48] sm:$0xf]
      %v207 = vld [vmem:[%s165 + $0x4c] sm:$0xf]
      %v208 = vld [vmem:[%s165 + $0x50] sm:$0xf]
      %v209 = vld [vmem:[%s165 + $0x54] sm:$0xf]
      %v210 = vld [vmem:[%s165 + $0x58] sm:$0xf]
      %v211 = vld [vmem:[%s165 + $0x5c] sm:$0xf]
      %v212 = vld [vmem:[%s165 + $0x60] sm:$0x3]
      %v238 = vunpack.c.l.b16 %v188
      %v239 = vunpack.c.l.b16 %v189
      %v240 = vunpack.c.l.b16 %v190
      %v241 = vunpack.c.l.b16 %v191
      %v242 = vunpack.c.l.b16 %v192
      %v243 = vunpack.c.l.b16 %v193
      %v244 = vunpack.c.l.b16 %v194
      %v245 = vunpack.c.l.b16 %v195
      %v246 = vunpack.c.l.b16 %v196
      %v247 = vunpack.c.l.b16 %v197
      %v248 = vunpack.c.l.b16 %v198
      %v249 = vunpack.c.l.b16 %v199
      %v250 = vunpack.c.l.b16 %v200
      %v251 = vunpack.c.l.b16 %v201
      %v252 = vunpack.c.l.b16 %v202
      %v253 = vunpack.c.l.b16 %v203
      %v254 = vunpack.c.l.b16 %v204
      %v255 = vunpack.c.l.b16 %v205
      %v256 = vunpack.c.l.b16 %v206
      %v257 = vunpack.c.l.b16 %v207
      %v258 = vunpack.c.l.b16 %v208
      %v259 = vunpack.c.l.b16 %v209
      %v260 = vunpack.c.l.b16 %v210
      %v261 = vunpack.c.l.b16 %v211
      %v262 = vunpack.c.l.b16 %v212
      %v263 = vpack.c.b16 %v239, %v238
      %v264 = vpack.c.b16 %v241, %v240
      %v265 = vpack.c.b16 %v243, %v242
      %v266 = vpack.c.b16 %v245, %v244
      %v267 = vpack.c.b16 %v247, %v246
      %v268 = vpack.c.b16 %v249, %v248
      %v269 = vpack.c.b16 %v251, %v250
      %v270 = vpack.c.b16 %v253, %v252
      %v271 = vpack.c.b16 %v255, %v254
      %v272 = vpack.c.b16 %v257, %v256
      %v273 = vpack.c.b16 %v259, %v258
      %v274 = vpack.c.b16 %v261, %v260
      %v275 = vpack.c.b16 %v262, %v262
      %v305 = vunpack.c.l.b16 %v172
      %v306 = vunpack.c.l.b16 %v173
      %v307 = vunpack.c.l.b16 %v174
      %v308 = vunpack.c.l.b16 %v175
      %v309 = vunpack.c.l.b16 %v176
      %v310 = vunpack.c.l.b16 %v177
      %v311 = vunpack.c.l.b16 %v178
      %v312 = vunpack.c.l.b16 %v179
      %v313 = vunpack.c.l.b16 %v180
      %v314 = vunpack.c.l.b16 %v181
      %v315 = vunpack.c.l.b16 %v182
      %v316 = vunpack.c.l.b16 %v183
      %v317 = vunpack.c.l.b16 %v184
      %v318 = vunpack.c.l.b16 %v185
      %v319 = vunpack.c.l.b16 %v186
      %v320 = vunpack.c.l.b16 %v187
      %v321 = vpack.c.b16 %v306, %v305
      %v322 = vpack.c.b16 %v308, %v307
      %v323 = vpack.c.b16 %v310, %v309
      %v324 = vpack.c.b16 %v312, %v311
      %v325 = vpack.c.b16 %v314, %v313
      %v326 = vpack.c.b16 %v316, %v315
      %v327 = vpack.c.b16 %v318, %v317
      %v328 = vpack.c.b16 %v320, %v319
      %337 = vmatprep.subr.bf16.mxu0 0
      %338 = vmatpush1.bf16.msra.mxu0 %v321
      %339 = vmatprep.subr.bf16.mxu0 0
      %340 = vmatpush1.bf16.msra.mxu0 %v322
      %341 = vmatprep.subr.bf16.mxu0 0
      %342 = vmatpush1.bf16.msra.mxu0 %v323
      %343 = vmatprep.subr.bf16.mxu0 0
      %344 = vmatpush1.bf16.msra.mxu0 %v324
      %345 = vmatprep.subr.bf16.mxu0 0
      %346 = vmatpush1.bf16.msra.mxu0 %v325
      %347 = vmatprep.subr.bf16.mxu0 0
      %348 = vmatpush1.bf16.msra.mxu0 %v326
      %349 = vmatprep.subr.bf16.mxu0 0
      %350 = vmatpush1.bf16.msra.mxu0 %v327
      %351 = vmatprep.subr.bf16.mxu0 0
      %352 = vmatpush1.bf16.msra.mxu0 %v328
      %353 = vmatprep.subr.bf16.mxu0 0
      %354 = vmatpush1.bf16.msra.mxu0 0
      %355 = vmatprep.subr.bf16.mxu0 0
      %356 = vmatpush1.bf16.msra.mxu0 0
      %357 = vmatprep.subr.bf16.mxu0 0
      %358 = vmatpush1.bf16.msra.mxu0 0
      %359 = vmatprep.subr.bf16.mxu0 0
      %360 = vmatpush1.bf16.msra.mxu0 0
      %361 = vmatprep.subr.bf16.mxu0 0
      %362 = vmatpush1.bf16.msra.mxu0 0
      %363 = vmatprep.subr.bf16.mxu0 0
      %364 = vmatpush1.bf16.msra.mxu0 0
      %365 = vmatprep.subr.bf16.mxu0 0
      %366 = vmatpush1.bf16.msra.mxu0 0
      %367 = vmatprep.subr.bf16.mxu0 0
      %368 = vmatpush1.bf16.msra.mxu0 0
      %369 = vmatprep.mubr.bf16.mxu0 0
      %370 = vmatmul.mubr.bf16.gmra.mrb[0].mxu0 %v263
      %v371 = vpop.f32.mrb[0].mxu0
      %v372 = vadd.f32 0.0, %v371
      %v373 = vpop.f32.mrb[0].mxu0
      %v374 = vpop.f32.mrb[0].mxu0
      %v375 = vadd.f32 0.0, %v374
      %v376 = vpop.f32.mrb[0].mxu0
      %377 = vmatprep.mubr.bf16.mxu0 0
      %378 = vmatmul.mubr.bf16.gmra.mrb[0].mxu0 %v264
      %v379 = vpop.f32.mrb[0].mxu0
      %v380 = vadd.f32 0.0, %v379
      %v381 = vpop.f32.mrb[0].mxu0
      %v382 = vpop.f32.mrb[0].mxu0
      %v383 = vadd.f32 0.0, %v382
      %v384 = vpop.f32.mrb[0].mxu0
      %385 = vmatprep.mubr.bf16.mxu0 0
      %386 = vmatmul.mubr.bf16.gmra.mrb[0].mxu0 %v265
      %v387 = vpop.f32.mrb[0].mxu0
      %v388 = vadd.f32 0.0, %v387
      %v389 = vpop.f32.mrb[0].mxu0
      %v390 = vpop.f32.mrb[0].mxu0
      %v391 = vadd.f32 0.0, %v390
      %v392 = vpop.f32.mrb[0].mxu0
      %393 = vmatprep.mubr.bf16.mxu0 0
      %394 = vmatmul.mubr.bf16.gmra.mrb[0].mxu0 %v266
      %v395 = vpop.f32.mrb[0].mxu0
      %v396 = vadd.f32 0.0, %v395
      %v397 = vpop.f32.mrb[0].mxu0
      %v398 = vpop.f32.mrb[0].mxu0
      %v399 = vadd.f32 0.0, %v398
      %v400 = vpop.f32.mrb[0].mxu0
      %401 = vmatprep.mubr.bf16.mxu0 0
      %402 = vmatmul.mubr.bf16.gmra.mrb[0].mxu0 %v267
      %v403 = vpop.f32.mrb[0].mxu0
      %v404 = vadd.f32 0.0, %v403
      %v405 = vpop.f32.mrb[0].mxu0
      %v406 = vpop.f32.mrb[0].mxu0
      %v407 = vadd.f32 0.0, %v406
      %v408 = vpop.f32.mrb[0].mxu0
      %409 = vmatprep.mubr.bf16.mxu0 0
      %410 = vmatmul.mubr.bf16.gmra.mrb[0].mxu0 %v268
      %v411 = vpop.f32.mrb[0].mxu0
      %v412 = vadd.f32 0.0, %v411
      %v413 = vpop.f32.mrb[0].mxu0
      %v414 = vpop.f32.mrb[0].mxu0
      %v415 = vadd.f32 0.0, %v414
      %v416 = vpop.f32.mrb[0].mxu0
      %417 = vmatprep.mubr.bf16.mxu0 0
      %418 = vmatmul.mubr.bf16.gmra.mrb[0].mxu0 %v269
      %v419 = vpop.f32.mrb[0].mxu0
      %v420 = vadd.f32 0.0, %v419
      %v421 = vpop.f32.mrb[0].mxu0
      %v422 = vpop.f32.mrb[0].mxu0
      %v423 = vadd.f32 0.0, %v422
      %v424 = vpop.f32.mrb[0].mxu0
      %425 = vmatprep.mubr.bf16.mxu0 0
      %426 = vmatmul.mubr.bf16.gmra.mrb[0].mxu0 %v270
      %v427 = vpop.f32.mrb[0].mxu0
      %v428 = vadd.f32 0.0, %v427
      %v429 = vpop.f32.mrb[0].mxu0
      %v430 = vpop.f32.mrb[0].mxu0
      %v431 = vadd.f32 0.0, %v430
      %v432 = vpop.f32.mrb[0].mxu0
      %433 = vmatprep.mubr.bf16.mxu0 0
      %434 = vmatmul.mubr.bf16.gmra.mrb[0].mxu0 %v271
      %v435 = vpop.f32.mrb[0].mxu0
      %v436 = vadd.f32 0.0, %v435
      %v437 = vpop.f32.mrb[0].mxu0
      %v438 = vpop.f32.mrb[0].mxu0
      %v439 = vadd.f32 0.0, %v438
      %v440 = vpop.f32.mrb[0].mxu0
      %441 = vmatprep.mubr.bf16.mxu0 0
      %442 = vmatmul.mubr.bf16.gmra.mrb[0].mxu0 %v272
      %v443 = vpop.f32.mrb[0].mxu0
      %v444 = vadd.f32 0.0, %v443
      %v445 = vpop.f32.mrb[0].mxu0
      %v446 = vpop.f32.mrb[0].mxu0
      %v447 = vadd.f32 0.0, %v446
      %v448 = vpop.f32.mrb[0].mxu0
      %449 = vmatprep.mubr.bf16.mxu0 0
      %450 = vmatmul.mubr.bf16.gmra.mrb[0].mxu0 %v273
      %v451 = vpop.f32.mrb[0].mxu0
      %v452 = vadd.f32 0.0, %v451
      %v453 = vpop.f32.mrb[0].mxu0
      %v454 = vpop.f32.mrb[0].mxu0
      %v455 = vadd.f32 0.0, %v454
      %v456 = vpop.f32.mrb[0].mxu0
      %457 = vmatprep.mubr.bf16.mxu0 0
      %458 = vmatmul.mubr.bf16.gmra.mrb[0].mxu0 %v274
      %v459 = vpop.f32.mrb[0].mxu0
      %v460 = vadd.f32 0.0, %v459
      %v461 = vpop.f32.mrb[0].mxu0
      %v462 = vpop.f32.mrb[0].mxu0
      %v463 = vadd.f32 0.0, %v462
      %v464 = vpop.f32.mrb[0].mxu0
      %465 = vmatprep.mubr.bf16.mxu0 0
      %466 = vmatmul.mubr.bf16.gmra.mrb[0].mxu0 %v275
      %v467 = vpop.f32.mrb[0].mxu0
      %v468 = vadd.f32 0.0, %v467
      %v469 = vpop.f32.mrb[0].mxu0
      %v470 = vpop.f32.mrb[0].mxu0
      %v471 = vpop.f32.mrb[0].mxu0
      %472 = vdwg.mxu0
      %v473 = vld [vmem:[%s165 + $0x60] sm:$0xc]
      %v474 = vld [vmem:[%s165 + $0x64] sm:$0xf]
      %v475 = vld [vmem:[%s165 + $0x68] sm:$0xf]
      %v476 = vld [vmem:[%s165 + $0x6c] sm:$0xf]
      %v477 = vld [vmem:[%s165 + $0x70] sm:$0xf]
      %v478 = vld [vmem:[%s165 + $0x74] sm:$0xf]
      %v479 = vld [vmem:[%s165 + $0x78] sm:$0xf]
      %v480 = vld [vmem:[%s165 + $0x7c] sm:$0xf]
      %v481 = vld [vmem:[%s165 + $0x80] sm:$0xf]
      %v482 = vld [vmem:[%s165 + $0x84] sm:$0xf]
      %v483 = vld [vmem:[%s165 + $0x88] sm:$0xf]
      %v484 = vld [vmem:[%s165 + $0x8c] sm:$0xf]
      %v485 = vld [vmem:[%s165 + $0x90] sm:$0xf]
      %v486 = vld [vmem:[%s165 + $0x94] sm:$0xf]
      %v487 = vld [vmem:[%s165 + $0x98] sm:$0xf]
      %v488 = vld [vmem:[%s165 + $0x9c] sm:$0xf]
      %v489 = vld [vmem:[%s165 + $0xa0] sm:$0xf]
      %v490 = vld [vmem:[%s165 + $0xa4] sm:$0xf]
      %v491 = vld [vmem:[%s165 + $0xa8] sm:$0xf]
      %v492 = vld [vmem:[%s165 + $0xac] sm:$0xf]
      %v493 = vld [vmem:[%s165 + $0xb0] sm:$0xf]
      %v494 = vld [vmem:[%s165 + $0xb4] sm:$0xf]
      %v495 = vld [vmem:[%s165 + $0xb8] sm:$0xf]
      %v496 = vld [vmem:[%s165 + $0xbc] sm:$0xf]
      %v497 = vld [vmem:[%s165 + $0xc0] sm:$0xf]
      %v523 = vunpack.c.l.b16 %v473
      %v524 = vunpack.c.l.b16 %v474
      %v525 = vunpack.c.l.b16 %v475
      %v526 = vunpack.c.l.b16 %v476
      %v527 = vunpack.c.l.b16 %v477
      %v528 = vunpack.c.l.b16 %v478
      %v529 = vunpack.c.l.b16 %v479
      %v530 = vunpack.c.l.b16 %v480
      %v531 = vunpack.c.l.b16 %v481
      %v532 = vunpack.c.l.b16 %v482
      %v533 = vunpack.c.l.b16 %v483
      %v534 = vunpack.c.l.b16 %v484
      %v535 = vunpack.c.l.b16 %v485
      %v536 = vunpack.c.l.b16 %v486
      %v537 = vunpack.c.l.b16 %v487
      %v538 = vunpack.c.l.b16 %v488
      %v539 = vunpack.c.l.b16 %v489
      %v540 = vunpack.c.l.b16 %v490
      %v541 = vunpack.c.l.b16 %v491
      %v542 = vunpack.c.l.b16 %v492
      %v543 = vunpack.c.l.b16 %v493
      %v544 = vunpack.c.l.b16 %v494
      %v545 = vunpack.c.l.b16 %v495
      %v546 = vunpack.c.l.b16 %v496
      %v547 = vunpack.c.l.b16 %v497
      %v548 = vpack.c.b16 %v524, %v523
      %v549 = vpack.c.b16 %v526, %v525
      %v550 = vpack.c.b16 %v528, %v527
      %v551 = vpack.c.b16 %v530, %v529
      %v552 = vpack.c.b16 %v532, %v531
      %v553 = vpack.c.b16 %v534, %v533
      %v554 = vpack.c.b16 %v536, %v535
      %v555 = vpack.c.b16 %v538, %v537
      %v556 = vpack.c.b16 %v540, %v539
      %v557 = vpack.c.b16 %v542, %v541
      %v558 = vpack.c.b16 %v544, %v543
      %v559 = vpack.c.b16 %v546, %v545
      %v560 = vpack.c.b16 %v547, %v547
      %vm561 = vcmask 1045504
      %v562 = vrot.slane %v548, 2
      %v563 = vrot.slane %v549, 2
      %v564 = vsel %vm561, %v562, %v563
      %v565 = vrot.slane %v550, 2
      %v566 = vsel %vm561, %v563, %v565
      %v567 = vrot.slane %v551, 2
      %v568 = vsel %vm561, %v565, %v567
      %v569 = vrot.slane %v552, 2
      %v570 = vsel %vm561, %v567, %v569
      %v571 = vrot.slane %v553, 2
      %v572 = vsel %vm561, %v569, %v571
      %v573 = vrot.slane %v554, 2
      %v574 = vsel %vm561, %v571, %v573
      %v575 = vrot.slane %v555, 2
      %v576 = vsel %vm561, %v573, %v575
      %v577 = vrot.slane %v556, 2
      %v578 = vsel %vm561, %v575, %v577
      %v579 = vrot.slane %v557, 2
      %v580 = vsel %vm561, %v577, %v579
      %v581 = vrot.slane %v558, 2
      %v582 = vsel %vm561, %v579, %v581
      %v583 = vrot.slane %v559, 2
      %v584 = vsel %vm561, %v581, %v583
      %v585 = vrot.slane %v560, 2
      %v586 = vsel %vm561, %v583, %v585
      %600 = vmatprep.subr.bf16.mxu0 0
      %601 = vmatpush1.bf16.msra.mxu0 %v321
      %602 = vmatprep.subr.bf16.mxu0 0
      %603 = vmatpush1.bf16.msra.mxu0 %v322
      %604 = vmatprep.subr.bf16.mxu0 0
      %605 = vmatpush1.bf16.msra.mxu0 %v323
      %606 = vmatprep.subr.bf16.mxu0 0
      %607 = vmatpush1.bf16.msra.mxu0 %v324
      %608 = vmatprep.subr.bf16.mxu0 0
      %609 = vmatpush1.bf16.msra.mxu0 %v325
      %610 = vmatprep.subr.bf16.mxu0 0
      %611 = vmatpush1.bf16.msra.mxu0 %v326
      %612 = vmatprep.subr.bf16.mxu0 0
      %613 = vmatpush1.bf16.msra.mxu0 %v327
      %614 = vmatprep.subr.bf16.mxu0 0
      %615 = vmatpush1.bf16.msra.mxu0 %v328
      %616 = vmatprep.subr.bf16.mxu0 0
      %617 = vmatpush1.bf16.msra.mxu0 0
      %618 = vmatprep.subr.bf16.mxu0 0
      %619 = vmatpush1.bf16.msra.mxu0 0
      %620 = vmatprep.subr.bf16.mxu0 0
      %621 = vmatpush1.bf16.msra.mxu0 0
      %622 = vmatprep.subr.bf16.mxu0 0
      %623 = vmatpush1.bf16.msra.mxu0 0
      %624 = vmatprep.subr.bf16.mxu0 0
      %625 = vmatpush1.bf16.msra.mxu0 0
      %626 = vmatprep.subr.bf16.mxu0 0
      %627 = vmatpush1.bf16.msra.mxu0 0
      %628 = vmatprep.subr.bf16.mxu0 0
      %629 = vmatpush1.bf16.msra.mxu0 0
      %630 = vmatprep.subr.bf16.mxu0 0
      %631 = vmatpush1.bf16.msra.mxu0 0
      %632 = vmatprep.mubr.bf16.mxu0 0
      %633 = vmatmul.mubr.bf16.gmra.mrb[0].mxu0 %v564
      %v634 = vpop.f32.mrb[0].mxu0
      %v635 = vadd.f32 0.0, %v634
      %v636 = vpop.f32.mrb[0].mxu0
      %v637 = vpop.f32.mrb[0].mxu0
      %v638 = vadd.f32 0.0, %v637
      %v639 = vpop.f32.mrb[0].mxu0
      %640 = vmatprep.mubr.bf16.mxu0 0
      %641 = vmatmul.mubr.bf16.gmra.mrb[0].mxu0 %v566
      %v642 = vpop.f32.mrb[0].mxu0
      %v643 = vadd.f32 0.0, %v642
      %v644 = vpop.f32.mrb[0].mxu0
      %v645 = vpop.f32.mrb[0].mxu0
      %v646 = vadd.f32 0.0, %v645
      %v647 = vpop.f32.mrb[0].mxu0
      %648 = vmatprep.mubr.bf16.mxu0 0
      %649 = vmatmul.mubr.bf16.gmra.mrb[0].mxu0 %v568
      %v650 = vpop.f32.mrb[0].mxu0
      %v651 = vadd.f32 0.0, %v650
      %v652 = vpop.f32.mrb[0].mxu0
      %v653 = vpop.f32.mrb[0].mxu0
      %v654 = vadd.f32 0.0, %v653
      %v655 = vpop.f32.mrb[0].mxu0
      %656 = vmatprep.mubr.bf16.mxu0 0
      %657 = vmatmul.mubr.bf16.gmra.mrb[0].mxu0 %v570
      %v658 = vpop.f32.mrb[0].mxu0
      %v659 = vadd.f32 0.0, %v658
      %v660 = vpop.f32.mrb[0].mxu0
      %v661 = vpop.f32.mrb[0].mxu0
      %v662 = vadd.f32 0.0, %v661
      %v663 = vpop.f32.mrb[0].mxu0
      %664 = vmatprep.mubr.bf16.mxu0 0
      %665 = vmatmul.mubr.bf16.gmra.mrb[0].mxu0 %v572
      %v666 = vpop.f32.mrb[0].mxu0
      %v667 = vadd.f32 0.0, %v666
      %v668 = vpop.f32.mrb[0].mxu0
      %v669 = vpop.f32.mrb[0].mxu0
      %v670 = vadd.f32 0.0, %v669
      %v671 = vpop.f32.mrb[0].mxu0
      %672 = vmatprep.mubr.bf16.mxu0 0
      %673 = vmatmul.mubr.bf16.gmra.mrb[0].mxu0 %v574
      %v674 = vpop.f32.mrb[0].mxu0
      %v675 = vadd.f32 0.0, %v674
      %v676 = vpop.f32.mrb[0].mxu0
      %v677 = vpop.f32.mrb[0].mxu0
      %v678 = vadd.f32 0.0, %v677
      %v679 = vpop.f32.mrb[0].mxu0
      %680 = vmatprep.mubr.bf16.mxu0 0
      %681 = vmatmul.mubr.bf16.gmra.mrb[0].mxu0 %v576
      %v682 = vpop.f32.mrb[0].mxu0
      %v683 = vadd.f32 0.0, %v682
      %v684 = vpop.f32.mrb[0].mxu0
      %v685 = vpop.f32.mrb[0].mxu0
      %v686 = vadd.f32 0.0, %v685
      %v687 = vpop.f32.mrb[0].mxu0
      %688 = vmatprep.mubr.bf16.mxu0 0
      %689 = vmatmul.mubr.bf16.gmra.mrb[0].mxu0 %v578
      %v690 = vpop.f32.mrb[0].mxu0
      %v691 = vadd.f32 0.0, %v690
      %v692 = vpop.f32.mrb[0].mxu0
      %v693 = vpop.f32.mrb[0].mxu0
      %v694 = vadd.f32 0.0, %v693
      %v695 = vpop.f32.mrb[0].mxu0
      %696 = vmatprep.mubr.bf16.mxu0 0
      %697 = vmatmul.mubr.bf16.gmra.mrb[0].mxu0 %v580
      %v698 = vpop.f32.mrb[0].mxu0
      %v699 = vadd.f32 0.0, %v698
      %v700 = vpop.f32.mrb[0].mxu0
      %v701 = vpop.f32.mrb[0].mxu0
      %v702 = vadd.f32 0.0, %v701
      %v703 = vpop.f32.mrb[0].mxu0
      %704 = vmatprep.mubr.bf16.mxu0 0
      %705 = vmatmul.mubr.bf16.gmra.mrb[0].mxu0 %v582
      %v706 = vpop.f32.mrb[0].mxu0
      %v707 = vadd.f32 0.0, %v706
      %v708 = vpop.f32.mrb[0].mxu0
      %v709 = vpop.f32.mrb[0].mxu0
      %v710 = vadd.f32 0.0, %v709
      %v711 = vpop.f32.mrb[0].mxu0
      %712 = vmatprep.mubr.bf16.mxu0 0
      %713 = vmatmul.mubr.bf16.gmra.mrb[0].mxu0 %v584
      %v714 = vpop.f32.mrb[0].mxu0
      %v715 = vadd.f32 0.0, %v714
      %v716 = vpop.f32.mrb[0].mxu0
      %v717 = vpop.f32.mrb[0].mxu0
      %v718 = vadd.f32 0.0, %v717
      %v719 = vpop.f32.mrb[0].mxu0
      %720 = vmatprep.mubr.bf16.mxu0 0
      %721 = vmatmul.mubr.bf16.gmra.mrb[0].mxu0 %v586
      %v722 = vpop.f32.mrb[0].mxu0
      %v723 = vadd.f32 0.0, %v722
      %v724 = vpop.f32.mrb[0].mxu0
      %v725 = vpop.f32.mrb[0].mxu0
      %v726 = vadd.f32 0.0, %v725
      %v727 = vpop.f32.mrb[0].mxu0
      %728 = vmatprep.mubr.bf16.mxu0 0
      %729 = vmatmul.mubr.bf16.gmra.mrb[0].mxu0 %v585
      %v730 = vpop.f32.mrb[0].mxu0
      %v731 = vadd.f32 0.0, %v730
      %v732 = vpop.f32.mrb[0].mxu0
      %v733 = vpop.f32.mrb[0].mxu0
      %v734 = vpop.f32.mrb[0].mxu0
      %735 = vdwg.mxu0
      %v736 = vmax.f32 %v372, %v635
      %v737 = vmax.f32 %v375, %v638
      %v738 = vmax.f32 %v380, %v643
      %v739 = vmax.f32 %v383, %v646
      %v740 = vmax.f32 %v388, %v651
      %v741 = vmax.f32 %v391, %v654
      %v742 = vmax.f32 %v396, %v659
      %v743 = vmax.f32 %v399, %v662
      %v744 = vmax.f32 %v404, %v667
      %v745 = vmax.f32 %v407, %v670
      %v746 = vmax.f32 %v412, %v675
      %v747 = vmax.f32 %v415, %v678
      %v748 = vmax.f32 %v420, %v683
      %v749 = vmax.f32 %v423, %v686
      %v750 = vmax.f32 %v428, %v691
      %v751 = vmax.f32 %v431, %v694
      %v752 = vmax.f32 %v436, %v699
      %v753 = vmax.f32 %v439, %v702
      %v754 = vmax.f32 %v444, %v707
      %v755 = vmax.f32 %v447, %v710
      %v756 = vmax.f32 %v452, %v715
      %v757 = vmax.f32 %v455, %v718
      %v758 = vmax.f32 %v460, %v723
      %v759 = vmax.f32 %v463, %v726
      %v760 = vmax.f32 %v468, %v731
      %v761 = vld [vmem:[%s165 + $0xc4] sm:$0xf]
      %v762 = vld [vmem:[%s165 + $0xc8] sm:$0xf]
      %v763 = vld [vmem:[%s165 + $0xcc] sm:$0xf]
      %v764 = vld [vmem:[%s165 + $0xd0] sm:$0xf]
      %v765 = vld [vmem:[%s165 + $0xd4] sm:$0xf]
      %v766 = vld [vmem:[%s165 + $0xd8] sm:$0xf]
      %v767 = vld [vmem:[%s165 + $0xdc] sm:$0xf]
      %v768 = vld [vmem:[%s165 + $0xe0] sm:$0xf]
      %v769 = vld [vmem:[%s165 + $0xe4] sm:$0xf]
      %v770 = vld [vmem:[%s165 + $0xe8] sm:$0xf]
      %v771 = vld [vmem:[%s165 + $0xec] sm:$0xf]
      %v772 = vld [vmem:[%s165 + $0xf0] sm:$0xf]
      %v773 = vld [vmem:[%s165 + $0xf4] sm:$0xf]
      %v774 = vld [vmem:[%s165 + $0xf8] sm:$0xf]
      %v775 = vld [vmem:[%s165 + $0xfc] sm:$0xf]
      %v776 = vld [vmem:[%s165 + $0x100] sm:$0xf]
      %v777 = vld [vmem:[%s165 + $0x104] sm:$0xf]
      %v778 = vld [vmem:[%s165 + $0x108] sm:$0xf]
      %v779 = vld [vmem:[%s165 + $0x10c] sm:$0xf]
      %v780 = vld [vmem:[%s165 + $0x110] sm:$0xf]
      %v781 = vld [vmem:[%s165 + $0x114] sm:$0xf]
      %v782 = vld [vmem:[%s165 + $0x118] sm:$0xf]
      %v783 = vld [vmem:[%s165 + $0x11c] sm:$0xf]
      %v784 = vld [vmem:[%s165 + $0x120] sm:$0xf]
      %v785 = vld [vmem:[%s165 + $0x124] sm:$0x3]
      %v811 = vunpack.c.l.b16 %v761
      %v812 = vunpack.c.l.b16 %v762
      %v813 = vunpack.c.l.b16 %v763
      %v814 = vunpack.c.l.b16 %v764
      %v815 = vunpack.c.l.b16 %v765
      %v816 = vunpack.c.l.b16 %v766
      %v817 = vunpack.c.l.b16 %v767
      %v818 = vunpack.c.l.b16 %v768
      %v819 = vunpack.c.l.b16 %v769
      %v820 = vunpack.c.l.b16 %v770
      %v821 = vunpack.c.l.b16 %v771
      %v822 = vunpack.c.l.b16 %v772
      %v823 = vunpack.c.l.b16 %v773
      %v824 = vunpack.c.l.b16 %v774
      %v825 = vunpack.c.l.b16 %v775
      %v826 = vunpack.c.l.b16 %v776
      %v827 = vunpack.c.l.b16 %v777
      %v828 = vunpack.c.l.b16 %v778
      %v829 = vunpack.c.l.b16 %v779
      %v830 = vunpack.c.l.b16 %v780
      %v831 = vunpack.c.l.b16 %v781
      %v832 = vunpack.c.l.b16 %v782
      %v833 = vunpack.c.l.b16 %v783
      %v834 = vunpack.c.l.b16 %v784
      %v835 = vunpack.c.l.b16 %v785
      %v836 = vpack.c.b16 %v812, %v811
      %v837 = vpack.c.b16 %v814, %v813
      %v838 = vpack.c.b16 %v816, %v815
      %v839 = vpack.c.b16 %v818, %v817
      %v840 = vpack.c.b16 %v820, %v819
      %v841 = vpack.c.b16 %v822, %v821
      %v842 = vpack.c.b16 %v824, %v823
      %v843 = vpack.c.b16 %v826, %v825
      %v844 = vpack.c.b16 %v828, %v827
      %v845 = vpack.c.b16 %v830, %v829
      %v846 = vpack.c.b16 %v832, %v831
      %v847 = vpack.c.b16 %v834, %v833
      %v848 = vpack.c.b16 %v835, %v835
      %862 = vmatprep.subr.bf16.mxu0 0
      %863 = vmatpush1.bf16.msra.mxu0 %v321
      %864 = vmatprep.subr.bf16.mxu0 0
      %865 = vmatpush1.bf16.msra.mxu0 %v322
      %866 = vmatprep.subr.bf16.mxu0 0
      %867 = vmatpush1.bf16.msra.mxu0 %v323
      %868 = vmatprep.subr.bf16.mxu0 0
      %869 = vmatpush1.bf16.msra.mxu0 %v324
      %870 = vmatprep.subr.bf16.mxu0 0
      %871 = vmatpush1.bf16.msra.mxu0 %v325
      %872 = vmatprep.subr.bf16.mxu0 0
      %873 = vmatpush1.bf16.msra.mxu0 %v326
      %874 = vmatprep.subr.bf16.mxu0 0
      %875 = vmatpush1.bf16.msra.mxu0 %v327
      %876 = vmatprep.subr.bf16.mxu0 0
      %877 = vmatpush1.bf16.msra.mxu0 %v328
      %878 = vmatprep.subr.bf16.mxu0 0
      %879 = vmatpush1.bf16.msra.mxu0 0
      %880 = vmatprep.subr.bf16.mxu0 0
      %881 = vmatpush1.bf16.msra.mxu0 0
      %882 = vmatprep.subr.bf16.mxu0 0
      %883 = vmatpush1.bf16.msra.mxu0 0
      %884 = vmatprep.subr.bf16.mxu0 0
      %885 = vmatpush1.bf16.msra.mxu0 0
      %886 = vmatprep.subr.bf16.mxu0 0
      %887 = vmatpush1.bf16.msra.mxu0 0
      %888 = vmatprep.subr.bf16.mxu0 0
      %889 = vmatpush1.bf16.msra.mxu0 0
      %890 = vmatprep.subr.bf16.mxu0 0
      %891 = vmatpush1.bf16.msra.mxu0 0
      %892 = vmatprep.subr.bf16.mxu0 0
      %893 = vmatpush1.bf16.msra.mxu0 0
      %894 = vmatprep.mubr.bf16.mxu0 0
      %895 = vmatmul.mubr.bf16.gmra.mrb[0].mxu0 %v836
      %v896 = vpop.f32.mrb[0].mxu0
      %v897 = vadd.f32 0.0, %v896
      %v898 = vpop.f32.mrb[0].mxu0
      %v899 = vpop.f32.mrb[0].mxu0
      %v900 = vadd.f32 0.0, %v899
      %v901 = vpop.f32.mrb[0].mxu0
      %902 = vmatprep.mubr.bf16.mxu0 0
      %903 = vmatmul.mubr.bf16.gmra.mrb[0].mxu0 %v837
      %v904 = vpop.f32.mrb[0].mxu0
      %v905 = vadd.f32 0.0, %v904
      %v906 = vpop.f32.mrb[0].mxu0
      %v907 = vpop.f32.mrb[0].mxu0
      %v908 = vadd.f32 0.0, %v907
      %v909 = vpop.f32.mrb[0].mxu0
      %910 = vmatprep.mubr.bf16.mxu0 0
      %911 = vmatmul.mubr.bf16.gmra.mrb[0].mxu0 %v838
      %v912 = vpop.f32.mrb[0].mxu0
      %v913 = vadd.f32 0.0, %v912
      %v914 = vpop.f32.mrb[0].mxu0
      %v915 = vpop.f32.mrb[0].mxu0
      %v916 = vadd.f32 0.0, %v915
      %v917 = vpop.f32.mrb[0].mxu0
      %918 = vmatprep.mubr.bf16.mxu0 0
      %919 = vmatmul.mubr.bf16.gmra.mrb[0].mxu0 %v839
      %v920 = vpop.f32.mrb[0].mxu0
      %v921 = vadd.f32 0.0, %v920
      %v922 = vpop.f32.mrb[0].mxu0
      %v923 = vpop.f32.mrb[0].mxu0
      %v924 = vadd.f32 0.0, %v923
      %v925 = vpop.f32.mrb[0].mxu0
      %926 = vmatprep.mubr.bf16.mxu0 0
      %927 = vmatmul.mubr.bf16.gmra.mrb[0].mxu0 %v840
      %v928 = vpop.f32.mrb[0].mxu0
      %v929 = vadd.f32 0.0, %v928
      %v930 = vpop.f32.mrb[0].mxu0
      %v931 = vpop.f32.mrb[0].mxu0
      %v932 = vadd.f32 0.0, %v931
      %v933 = vpop.f32.mrb[0].mxu0
      %934 = vmatprep.mubr.bf16.mxu0 0
      %935 = vmatmul.mubr.bf16.gmra.mrb[0].mxu0 %v841
      %v936 = vpop.f32.mrb[0].mxu0
      %v937 = vadd.f32 0.0, %v936
      %v938 = vpop.f32.mrb[0].mxu0
      %v939 = vpop.f32.mrb[0].mxu0
      %v940 = vadd.f32 0.0, %v939
      %v941 = vpop.f32.mrb[0].mxu0
      %942 = vmatprep.mubr.bf16.mxu0 0
      %943 = vmatmul.mubr.bf16.gmra.mrb[0].mxu0 %v842
      %v944 = vpop.f32.mrb[0].mxu0
      %v945 = vadd.f32 0.0, %v944
      %v946 = vpop.f32.mrb[0].mxu0
      %v947 = vpop.f32.mrb[0].mxu0
      %v948 = vadd.f32 0.0, %v947
      %v949 = vpop.f32.mrb[0].mxu0
      %950 = vmatprep.mubr.bf16.mxu0 0
      %951 = vmatmul.mubr.bf16.gmra.mrb[0].mxu0 %v843
      %v952 = vpop.f32.mrb[0].mxu0
      %v953 = vadd.f32 0.0, %v952
      %v954 = vpop.f32.mrb[0].mxu0
      %v955 = vpop.f32.mrb[0].mxu0
      %v956 = vadd.f32 0.0, %v955
      %v957 = vpop.f32.mrb[0].mxu0
      %958 = vmatprep.mubr.bf16.mxu0 0
      %959 = vmatmul.mubr.bf16.gmra.mrb[0].mxu0 %v844
      %v960 = vpop.f32.mrb[0].mxu0
      %v961 = vadd.f32 0.0, %v960
      %v962 = vpop.f32.mrb[0].mxu0
      %v963 = vpop.f32.mrb[0].mxu0
      %v964 = vadd.f32 0.0, %v963
      %v965 = vpop.f32.mrb[0].mxu0
      %966 = vmatprep.mubr.bf16.mxu0 0
      %967 = vmatmul.mubr.bf16.gmra.mrb[0].mxu0 %v845
      %v968 = vpop.f32.mrb[0].mxu0
      %v969 = vadd.f32 0.0, %v968
      %v970 = vpop.f32.mrb[0].mxu0
      %v971 = vpop.f32.mrb[0].mxu0
      %v972 = vadd.f32 0.0, %v971
      %v973 = vpop.f32.mrb[0].mxu0
      %974 = vmatprep.mubr.bf16.mxu0 0
      %975 = vmatmul.mubr.bf16.gmra.mrb[0].mxu0 %v846
      %v976 = vpop.f32.mrb[0].mxu0
      %v977 = vadd.f32 0.0, %v976
      %v978 = vpop.f32.mrb[0].mxu0
      %v979 = vpop.f32.mrb[0].mxu0
      %v980 = vadd.f32 0.0, %v979
      %v981 = vpop.f32.mrb[0].mxu0
      %982 = vmatprep.mubr.bf16.mxu0 0
      %983 = vmatmul.mubr.bf16.gmra.mrb[0].mxu0 %v847
      %v984 = vpop.f32.mrb[0].mxu0
      %v985 = vadd.f32 0.0, %v984
      %v986 = vpop.f32.mrb[0].mxu0
      %v987 = vpop.f32.mrb[0].mxu0
      %v988 = vadd.f32 0.0, %v987
      %v989 = vpop.f32.mrb[0].mxu0
      %990 = vmatprep.mubr.bf16.mxu0 0
      %991 = vmatmul.mubr.bf16.gmra.mrb[0].mxu0 %v848
      %v992 = vpop.f32.mrb[0].mxu0
      %v993 = vadd.f32 0.0, %v992
      %v994 = vpop.f32.mrb[0].mxu0
      %v995 = vpop.f32.mrb[0].mxu0
      %v996 = vpop.f32.mrb[0].mxu0
      %997 = vdwg.mxu0
      %v998 = vmax.f32 %v736, %v897
      %v999 = vmax.f32 %v737, %v900
      %v1000 = vmax.f32 %v738, %v905
      %v1001 = vmax.f32 %v739, %v908
      %v1002 = vmax.f32 %v740, %v913
      %v1003 = vmax.f32 %v741, %v916
      %v1004 = vmax.f32 %v742, %v921
      %v1005 = vmax.f32 %v743, %v924
      %v1006 = vmax.f32 %v744, %v929
      %v1007 = vmax.f32 %v745, %v932
      %v1008 = vmax.f32 %v746, %v937
      %v1009 = vmax.f32 %v747, %v940
      %v1010 = vmax.f32 %v748, %v945
      %v1011 = vmax.f32 %v749, %v948
      %v1012 = vmax.f32 %v750, %v953
      %v1013 = vmax.f32 %v751, %v956
      %v1014 = vmax.f32 %v752, %v961
      %v1015 = vmax.f32 %v753, %v964
      %v1016 = vmax.f32 %v754, %v969
      %v1017 = vmax.f32 %v755, %v972
      %v1018 = vmax.f32 %v756, %v977
      %v1019 = vmax.f32 %v757, %v980
      %v1020 = vmax.f32 %v758, %v985
      %v1021 = vmax.f32 %v759, %v988
      %v1022 = vmax.f32 %v760, %v993
      %v1023 = vld [vmem:[%s165 + $0x124] sm:$0xc]
      %v1024 = vld [vmem:[%s165 + $0x128] sm:$0xf]
      %v1025 = vld [vmem:[%s165 + $0x12c] sm:$0xf]
      %v1026 = vld [vmem:[%s165 + $0x130] sm:$0xf]
      %v1027 = vld [vmem:[%s165 + $0x134] sm:$0xf]
      %v1028 = vld [vmem:[%s165 + $0x138] sm:$0xf]
      %v1029 = vld [vmem:[%s165 + $0x13c] sm:$0xf]
      %v1030 = vld [vmem:[%s165 + $0x140] sm:$0xf]
      %v1031 = vld [vmem:[%s165 + $0x144] sm:$0xf]
      %v1032 = vld [vmem:[%s165 + $0x148] sm:$0xf]
      %v1033 = vld [vmem:[%s165 + $0x14c] sm:$0xf]
      %v1034 = vld [vmem:[%s165 + $0x150] sm:$0xf]
      %v1035 = vld [vmem:[%s165 + $0x154] sm:$0xf]
      %v1036 = vld [vmem:[%s165 + $0x158] sm:$0xf]
      %v1037 = vld [vmem:[%s165 + $0x15c] sm:$0xf]
      %v1038 = vld [vmem:[%s165 + $0x160] sm:$0xf]
      %v1039 = vld [vmem:[%s165 + $0x164] sm:$0xf]
      %v1040 = vld [vmem:[%s165 + $0x168] sm:$0xf]
      %v1041 = vld [vmem:[%s165 + $0x16c] sm:$0xf]
      %v1042 = vld [vmem:[%s165 + $0x170] sm:$0xf]
      %v1043 = vld [vmem:[%s165 + $0x174] sm:$0xf]
      %v1044 = vld [vmem:[%s165 + $0x178] sm:$0xf]
      %v1045 = vld [vmem:[%s165 + $0x17c] sm:$0xf]
      %v1046 = vld [vmem:[%s165 + $0x180] sm:$0xf]
      %v1047 = vld [vmem:[%s165 + $0x184] sm:$0xf]
      %v1073 = vunpack.c.l.b16 %v1023
      %v1074 = vunpack.c.l.b16 %v1024
      %v1075 = vunpack.c.l.b16 %v1025
      %v1076 = vunpack.c.l.b16 %v1026
      %v1077 = vunpack.c.l.b16 %v1027
      %v1078 = vunpack.c.l.b16 %v1028
      %v1079 = vunpack.c.l.b16 %v1029
      %v1080 = vunpack.c.l.b16 %v1030
      %v1081 = vunpack.c.l.b16 %v1031
      %v1082 = vunpack.c.l.b16 %v1032
      %v1083 = vunpack.c.l.b16 %v1033
      %v1084 = vunpack.c.l.b16 %v1034
      %v1085 = vunpack.c.l.b16 %v1035
      %v1086 = vunpack.c.l.b16 %v1036
      %v1087 = vunpack.c.l.b16 %v1037
      %v1088 = vunpack.c.l.b16 %v1038
      %v1089 = vunpack.c.l.b16 %v1039
      %v1090 = vunpack.c.l.b16 %v1040
      %v1091 = vunpack.c.l.b16 %v1041
      %v1092 = vunpack.c.l.b16 %v1042
      %v1093 = vunpack.c.l.b16 %v1043
      %v1094 = vunpack.c.l.b16 %v1044
      %v1095 = vunpack.c.l.b16 %v1045
      %v1096 = vunpack.c.l.b16 %v1046
      %v1097 = vunpack.c.l.b16 %v1047
      %v1098 = vpack.c.b16 %v1074, %v1073
      %v1099 = vpack.c.b16 %v1076, %v1075
      %v1100 = vpack.c.b16 %v1078, %v1077
      %v1101 = vpack.c.b16 %v1080, %v1079
      %v1102 = vpack.c.b16 %v1082, %v1081
      %v1103 = vpack.c.b16 %v1084, %v1083
      %v1104 = vpack.c.b16 %v1086, %v1085
      %v1105 = vpack.c.b16 %v1088, %v1087
      %v1106 = vpack.c.b16 %v1090, %v1089
      %v1107 = vpack.c.b16 %v1092, %v1091
      %v1108 = vpack.c.b16 %v1094, %v1093
      %v1109 = vpack.c.b16 %v1096, %v1095
      %v1110 = vpack.c.b16 %v1097, %v1097
      %v1111 = vrot.slane %v1098, 2
      %v1112 = vrot.slane %v1099, 2
      %v1113 = vsel %vm561, %v1111, %v1112
      %v1114 = vrot.slane %v1100, 2
      %v1115 = vsel %vm561, %v1112, %v1114
      %v1116 = vrot.slane %v1101, 2
      %v1117 = vsel %vm561, %v1114, %v1116
      %v1118 = vrot.slane %v1102, 2
      %v1119 = vsel %vm561, %v1116, %v1118
      %v1120 = vrot.slane %v1103, 2
      %v1121 = vsel %vm561, %v1118, %v1120
      %v1122 = vrot.slane %v1104, 2
      %v1123 = vsel %vm561, %v1120, %v1122
      %v1124 = vrot.slane %v1105, 2
      %v1125 = vsel %vm561, %v1122, %v1124
      %v1126 = vrot.slane %v1106, 2
      %v1127 = vsel %vm561, %v1124, %v1126
      %v1128 = vrot.slane %v1107, 2
      %v1129 = vsel %vm561, %v1126, %v1128
      %v1130 = vrot.slane %v1108, 2
      %v1131 = vsel %vm561, %v1128, %v1130
      %v1132 = vrot.slane %v1109, 2
      %v1133 = vsel %vm561, %v1130, %v1132
      %v1134 = vrot.slane %v1110, 2
      %v1135 = vsel %vm561, %v1132, %v1134
      %1149 = vmatprep.subr.bf16.mxu0 0
      %1150 = vmatpush1.bf16.msra.mxu0 %v321
      %1151 = vmatprep.subr.bf16.mxu0 0
      %1152 = vmatpush1.bf16.msra.mxu0 %v322
      %1153 = vmatprep.subr.bf16.mxu0 0
      %1154 = vmatpush1.bf16.msra.mxu0 %v323
      %1155 = vmatprep.subr.bf16.mxu0 0
      %1156 = vmatpush1.bf16.msra.mxu0 %v324
      %1157 = vmatprep.subr.bf16.mxu0 0
      %1158 = vmatpush1.bf16.msra.mxu0 %v325
      %1159 = vmatprep.subr.bf16.mxu0 0
      %1160 = vmatpush1.bf16.msra.mxu0 %v326
      %1161 = vmatprep.subr.bf16.mxu0 0
      %1162 = vmatpush1.bf16.msra.mxu0 %v327
      %1163 = vmatprep.subr.bf16.mxu0 0
      %1164 = vmatpush1.bf16.msra.mxu0 %v328
      %1165 = vmatprep.subr.bf16.mxu0 0
      %1166 = vmatpush1.bf16.msra.mxu0 0
      %1167 = vmatprep.subr.bf16.mxu0 0
      %1168 = vmatpush1.bf16.msra.mxu0 0
      %1169 = vmatprep.subr.bf16.mxu0 0
      %1170 = vmatpush1.bf16.msra.mxu0 0
      %1171 = vmatprep.subr.bf16.mxu0 0
      %1172 = vmatpush1.bf16.msra.mxu0 0
      %1173 = vmatprep.subr.bf16.mxu0 0
      %1174 = vmatpush1.bf16.msra.mxu0 0
      %1175 = vmatprep.subr.bf16.mxu0 0
      %1176 = vmatpush1.bf16.msra.mxu0 0
      %1177 = vmatprep.subr.bf16.mxu0 0
      %1178 = vmatpush1.bf16.msra.mxu0 0
      %1179 = vmatprep.subr.bf16.mxu0 0
      %1180 = vmatpush1.bf16.msra.mxu0 0
      %1181 = vmatprep.mubr.bf16.mxu0 0
      %1182 = vmatmul.mubr.bf16.gmra.mrb[0].mxu0 %v1113
      %v1183 = vpop.f32.mrb[0].mxu0
      %v1184 = vadd.f32 0.0, %v1183
      %v1185 = vpop.f32.mrb[0].mxu0
      %v1186 = vpop.f32.mrb[0].mxu0
      %v1187 = vadd.f32 0.0, %v1186
      %v1188 = vpop.f32.mrb[0].mxu0
      %1189 = vmatprep.mubr.bf16.mxu0 0
      %1190 = vmatmul.mubr.bf16.gmra.mrb[0].mxu0 %v1115
      %v1191 = vpop.f32.mrb[0].mxu0
      %v1192 = vadd.f32 0.0, %v1191
      %v1193 = vpop.f32.mrb[0].mxu0
      %v1194 = vpop.f32.mrb[0].mxu0
      %v1195 = vadd.f32 0.0, %v1194
      %v1196 = vpop.f32.mrb[0].mxu0
      %1197 = vmatprep.mubr.bf16.mxu0 0
      %1198 = vmatmul.mubr.bf16.gmra.mrb[0].mxu0 %v1117
      %v1199 = vpop.f32.mrb[0].mxu0
      %v1200 = vadd.f32 0.0, %v1199
      %v1201 = vpop.f32.mrb[0].mxu0
      %v1202 = vpop.f32.mrb[0].mxu0
      %v1203 = vadd.f32 0.0, %v1202
      %v1204 = vpop.f32.mrb[0].mxu0
      %1205 = vmatprep.mubr.bf16.mxu0 0
      %1206 = vmatmul.mubr.bf16.gmra.mrb[0].mxu0 %v1119
      %v1207 = vpop.f32.mrb[0].mxu0
      %v1208 = vadd.f32 0.0, %v1207
      %v1209 = vpop.f32.mrb[0].mxu0
      %v1210 = vpop.f32.mrb[0].mxu0
      %v1211 = vadd.f32 0.0, %v1210
      %v1212 = vpop.f32.mrb[0].mxu0
      %1213 = vmatprep.mubr.bf16.mxu0 0
      %1214 = vmatmul.mubr.bf16.gmra.mrb[0].mxu0 %v1121
      %v1215 = vpop.f32.mrb[0].mxu0
      %v1216 = vadd.f32 0.0, %v1215
      %v1217 = vpop.f32.mrb[0].mxu0
      %v1218 = vpop.f32.mrb[0].mxu0
      %v1219 = vadd.f32 0.0, %v1218
      %v1220 = vpop.f32.mrb[0].mxu0
      %1221 = vmatprep.mubr.bf16.mxu0 0
      %1222 = vmatmul.mubr.bf16.gmra.mrb[0].mxu0 %v1123
      %v1223 = vpop.f32.mrb[0].mxu0
      %v1224 = vadd.f32 0.0, %v1223
      %v1225 = vpop.f32.mrb[0].mxu0
      %v1226 = vpop.f32.mrb[0].mxu0
      %v1227 = vadd.f32 0.0, %v1226
      %v1228 = vpop.f32.mrb[0].mxu0
      %1229 = vmatprep.mubr.bf16.mxu0 0
      %1230 = vmatmul.mubr.bf16.gmra.mrb[0].mxu0 %v1125
      %v1231 = vpop.f32.mrb[0].mxu0
      %v1232 = vadd.f32 0.0, %v1231
      %v1233 = vpop.f32.mrb[0].mxu0
      %v1234 = vpop.f32.mrb[0].mxu0
      %v1235 = vadd.f32 0.0, %v1234
      %v1236 = vpop.f32.mrb[0].mxu0
      %1237 = vmatprep.mubr.bf16.mxu0 0
      %1238 = vmatmul.mubr.bf16.gmra.mrb[0].mxu0 %v1127
      %v1239 = vpop.f32.mrb[0].mxu0
      %v1240 = vadd.f32 0.0, %v1239
      %v1241 = vpop.f32.mrb[0].mxu0
      %v1242 = vpop.f32.mrb[0].mxu0
      %v1243 = vadd.f32 0.0, %v1242
      %v1244 = vpop.f32.mrb[0].mxu0
      %1245 = vmatprep.mubr.bf16.mxu0 0
      %1246 = vmatmul.mubr.bf16.gmra.mrb[0].mxu0 %v1129
      %v1247 = vpop.f32.mrb[0].mxu0
      %v1248 = vadd.f32 0.0, %v1247
      %v1249 = vpop.f32.mrb[0].mxu0
      %v1250 = vpop.f32.mrb[0].mxu0
      %v1251 = vadd.f32 0.0, %v1250
      %v1252 = vpop.f32.mrb[0].mxu0
      %1253 = vmatprep.mubr.bf16.mxu0 0
      %1254 = vmatmul.mubr.bf16.gmra.mrb[0].mxu0 %v1131
      %v1255 = vpop.f32.mrb[0].mxu0
      %v1256 = vadd.f32 0.0, %v1255
      %v1257 = vpop.f32.mrb[0].mxu0
      %v1258 = vpop.f32.mrb[0].mxu0
      %v1259 = vadd.f32 0.0, %v1258
      %v1260 = vpop.f32.mrb[0].mxu0
      %1261 = vmatprep.mubr.bf16.mxu0 0
      %1262 = vmatmul.mubr.bf16.gmra.mrb[0].mxu0 %v1133
      %v1263 = vpop.f32.mrb[0].mxu0
      %v1264 = vadd.f32 0.0, %v1263
      %v1265 = vpop.f32.mrb[0].mxu0
      %v1266 = vpop.f32.mrb[0].mxu0
      %v1267 = vadd.f32 0.0, %v1266
      %v1268 = vpop.f32.mrb[0].mxu0
      %1269 = vmatprep.mubr.bf16.mxu0 0
      %1270 = vmatmul.mubr.bf16.gmra.mrb[0].mxu0 %v1135
      %v1271 = vpop.f32.mrb[0].mxu0
      %v1272 = vadd.f32 0.0, %v1271
      %v1273 = vpop.f32.mrb[0].mxu0
      %v1274 = vpop.f32.mrb[0].mxu0
      %v1275 = vadd.f32 0.0, %v1274
      %v1276 = vpop.f32.mrb[0].mxu0
      %1277 = vmatprep.mubr.bf16.mxu0 0
      %1278 = vmatmul.mubr.bf16.gmra.mrb[0].mxu0 %v1134
      %v1279 = vpop.f32.mrb[0].mxu0
      %v1280 = vadd.f32 0.0, %v1279
      %v1281 = vpop.f32.mrb[0].mxu0
      %v1282 = vpop.f32.mrb[0].mxu0
      %v1283 = vpop.f32.mrb[0].mxu0
      %1284 = vdwg.mxu0
      %v1285 = vmax.f32 %v998, %v1184
      %v1286 = vmax.f32 %v999, %v1187
      %v1287 = vmax.f32 %v1000, %v1192
      %v1288 = vmax.f32 %v1001, %v1195
      %v1289 = vmax.f32 %v1002, %v1200
      %v1290 = vmax.f32 %v1003, %v1203
      %v1291 = vmax.f32 %v1004, %v1208
      %v1292 = vmax.f32 %v1005, %v1211
      %v1293 = vmax.f32 %v1006, %v1216
      %v1294 = vmax.f32 %v1007, %v1219
      %v1295 = vmax.f32 %v1008, %v1224
      %v1296 = vmax.f32 %v1009, %v1227
      %v1297 = vmax.f32 %v1010, %v1232
      %v1298 = vmax.f32 %v1011, %v1235
      %v1299 = vmax.f32 %v1012, %v1240
      %v1300 = vmax.f32 %v1013, %v1243
      %v1301 = vmax.f32 %v1014, %v1248
      %v1302 = vmax.f32 %v1015, %v1251
      %v1303 = vmax.f32 %v1016, %v1256
      %v1304 = vmax.f32 %v1017, %v1259
      %v1305 = vmax.f32 %v1018, %v1264
      %v1306 = vmax.f32 %v1019, %v1267
      %v1307 = vmax.f32 %v1020, %v1272
      %v1308 = vmax.f32 %v1021, %v1275
      %v1309 = vmax.f32 %v1022, %v1280
      %v1310 = vld [vmem:[%s2] sm:$0x1]
      %v1312 = vlaneseq
      %v1313 = vshrl.u32 %v1312, 7
      %v1314 = vsub.s32 0, %v1313
      %v1315 = vrot.slane %v1310, %v1314
      %v1317 = vadd.f32 %v1285, %v1315
      %v1318 = vadd.f32 %v1286, %v1315
      %v1319 = vadd.f32 %v1287, %v1315
      %v1320 = vadd.f32 %v1288, %v1315
      %v1321 = vadd.f32 %v1289, %v1315
      %v1322 = vadd.f32 %v1290, %v1315
      %v1323 = vadd.f32 %v1291, %v1315
      %v1324 = vadd.f32 %v1292, %v1315
      %v1325 = vadd.f32 %v1293, %v1315
      %v1326 = vadd.f32 %v1294, %v1315
      %v1327 = vadd.f32 %v1295, %v1315
      %v1328 = vadd.f32 %v1296, %v1315
      %v1329 = vadd.f32 %v1297, %v1315
      %v1330 = vadd.f32 %v1298, %v1315
      %v1331 = vadd.f32 %v1299, %v1315
      %v1332 = vadd.f32 %v1300, %v1315
      %v1333 = vadd.f32 %v1301, %v1315
      %v1334 = vadd.f32 %v1302, %v1315
      %v1335 = vadd.f32 %v1303, %v1315
      %v1336 = vadd.f32 %v1304, %v1315
      %v1337 = vadd.f32 %v1305, %v1315
      %v1338 = vadd.f32 %v1306, %v1315
      %v1339 = vadd.f32 %v1307, %v1315
      %v1340 = vadd.f32 %v1308, %v1315
      %v1341 = vadd.f32 %v1309, %v1315
      %v1342 = vmax.f32 %v1317, 0.0
      %v1343 = vmax.f32 %v1318, 0.0
      %v1344 = vmax.f32 %v1319, 0.0
      %v1345 = vmax.f32 %v1320, 0.0
      %v1346 = vmax.f32 %v1321, 0.0
      %v1347 = vmax.f32 %v1322, 0.0
      %v1348 = vmax.f32 %v1323, 0.0
      %v1349 = vmax.f32 %v1324, 0.0
      %v1350 = vmax.f32 %v1325, 0.0
      %v1351 = vmax.f32 %v1326, 0.0
      %v1352 = vmax.f32 %v1327, 0.0
      %v1353 = vmax.f32 %v1328, 0.0
      %v1354 = vmax.f32 %v1329, 0.0
      %v1355 = vmax.f32 %v1330, 0.0
      %v1356 = vmax.f32 %v1331, 0.0
      %v1357 = vmax.f32 %v1332, 0.0
      %v1358 = vmax.f32 %v1333, 0.0
      %v1359 = vmax.f32 %v1334, 0.0
      %v1360 = vmax.f32 %v1335, 0.0
      %v1361 = vmax.f32 %v1336, 0.0
      %v1362 = vmax.f32 %v1337, 0.0
      %v1363 = vmax.f32 %v1338, 0.0
      %v1364 = vmax.f32 %v1339, 0.0
      %v1365 = vmax.f32 %v1340, 0.0
      %v1366 = vmax.f32 %v1341, 0.0
      %v1367 = vpack.c.bf16 %v1343, %v1342
      %v1368 = vpack.c.bf16 %v1345, %v1344
      %v1369 = vpack.c.bf16 %v1347, %v1346
      %v1370 = vpack.c.bf16 %v1349, %v1348
      %v1371 = vpack.c.bf16 %v1351, %v1350
      %v1372 = vpack.c.bf16 %v1353, %v1352
      %v1373 = vpack.c.bf16 %v1355, %v1354
      %v1374 = vpack.c.bf16 %v1357, %v1356
      %v1375 = vpack.c.bf16 %v1359, %v1358
      %v1376 = vpack.c.bf16 %v1361, %v1360
      %v1377 = vpack.c.bf16 %v1363, %v1362
      %v1378 = vpack.c.bf16 %v1365, %v1364
      %v1379 = vpack.c.bf16 %v1366, %v1366
      %v1393 = vunpack.c.l.b16 %v1367
      %v1394 = vunpack.c.h.b16 %v1367
      %v1395 = vunpack.c.l.b16 %v1368
      %v1396 = vunpack.c.h.b16 %v1368
      %v1397 = vunpack.c.l.b16 %v1369
      %v1398 = vunpack.c.h.b16 %v1369
      %v1399 = vunpack.c.l.b16 %v1370
      %v1400 = vunpack.c.h.b16 %v1370
      %v1401 = vunpack.c.l.b16 %v1371
      %v1402 = vunpack.c.h.b16 %v1371
      %v1403 = vunpack.c.l.b16 %v1372
      %v1404 = vunpack.c.h.b16 %v1372
      %v1405 = vunpack.c.l.b16 %v1373
      %v1406 = vunpack.c.h.b16 %v1373
      %v1407 = vunpack.c.l.b16 %v1374
      %v1408 = vunpack.c.h.b16 %v1374
      %v1409 = vunpack.c.l.b16 %v1375
      %v1410 = vunpack.c.h.b16 %v1375
      %v1411 = vunpack.c.l.b16 %v1376
      %v1412 = vunpack.c.h.b16 %v1376
      %v1413 = vunpack.c.l.b16 %v1377
      %v1414 = vunpack.c.h.b16 %v1377
      %v1415 = vunpack.c.l.b16 %v1378
      %v1416 = vunpack.c.h.b16 %v1378
      %v1417 = vunpack.c.l.b16 %v1379
      %v1418 = vpack.c.b16 %v1393, %v1393
      %v1419 = vpack.c.b16 %v1394, %v1394
      %v1420 = vpack.c.b16 %v1395, %v1395
      %v1421 = vpack.c.b16 %v1396, %v1396
      %v1422 = vpack.c.b16 %v1397, %v1397
      %v1423 = vpack.c.b16 %v1398, %v1398
      %v1424 = vpack.c.b16 %v1399, %v1399
      %v1425 = vpack.c.b16 %v1400, %v1400
      %v1426 = vpack.c.b16 %v1401, %v1401
      %v1427 = vpack.c.b16 %v1402, %v1402
      %v1428 = vpack.c.b16 %v1403, %v1403
      %v1429 = vpack.c.b16 %v1404, %v1404
      %v1430 = vpack.c.b16 %v1405, %v1405
      %v1431 = vpack.c.b16 %v1406, %v1406
      %v1432 = vpack.c.b16 %v1407, %v1407
      %v1433 = vpack.c.b16 %v1408, %v1408
      %v1434 = vpack.c.b16 %v1409, %v1409
      %v1435 = vpack.c.b16 %v1410, %v1410
      %v1436 = vpack.c.b16 %v1411, %v1411
      %v1437 = vpack.c.b16 %v1412, %v1412
      %v1438 = vpack.c.b16 %v1413, %v1413
      %v1439 = vpack.c.b16 %v1414, %v1414
      %v1440 = vpack.c.b16 %v1415, %v1415
      %v1441 = vpack.c.b16 %v1416, %v1416
      %v1442 = vpack.c.b16 %v1417, %v1417
      %1468 = vst [vmem:[%s170] sm:$0xf] %v1418
      %1469 = vst [vmem:[%s170 + $0x4] sm:$0xf] %v1419
      %1470 = vst [vmem:[%s170 + $0x8] sm:$0xf] %v1420
      %1471 = vst [vmem:[%s170 + $0xc] sm:$0xf] %v1421
      %1472 = vst [vmem:[%s170 + $0x10] sm:$0xf] %v1422
      %1473 = vst [vmem:[%s170 + $0x14] sm:$0xf] %v1423
      %1474 = vst [vmem:[%s170 + $0x18] sm:$0xf] %v1424
      %1475 = vst [vmem:[%s170 + $0x1c] sm:$0xf] %v1425
      %1476 = vst [vmem:[%s170 + $0x20] sm:$0xf] %v1426
      %1477 = vst [vmem:[%s170 + $0x24] sm:$0xf] %v1427
      %1478 = vst [vmem:[%s170 + $0x28] sm:$0xf] %v1428
      %1479 = vst [vmem:[%s170 + $0x2c] sm:$0xf] %v1429
      %1480 = vst [vmem:[%s170 + $0x30] sm:$0xf] %v1430
      %1481 = vst [vmem:[%s170 + $0x34] sm:$0xf] %v1431
      %1482 = vst [vmem:[%s170 + $0x38] sm:$0xf] %v1432
      %1483 = vst [vmem:[%s170 + $0x3c] sm:$0xf] %v1433
      %1484 = vst [vmem:[%s170 + $0x40] sm:$0xf] %v1434
      %1485 = vst [vmem:[%s170 + $0x44] sm:$0xf] %v1435
      %1486 = vst [vmem:[%s170 + $0x48] sm:$0xf] %v1436
      %1487 = vst [vmem:[%s170 + $0x4c] sm:$0xf] %v1437
      %1488 = vst [vmem:[%s170 + $0x50] sm:$0xf] %v1438
      %1489 = vst [vmem:[%s170 + $0x54] sm:$0xf] %v1439
      %1490 = vst [vmem:[%s170 + $0x58] sm:$0xf] %v1440
      %1491 = vst [vmem:[%s170 + $0x5c] sm:$0xf] %v1441
      %1492 = vst [vmem:[%s170 + $0x60] sm:$0x3] %v1442
      %p1493 = scmp.lt.s32.totalorder %s14, 1
      %s1494 = scalar_select %p1493, %s14, 1
      %s1495 = smul.addr %s1494, 25
      %s1496 = smul.addr %s1495, 4
      %s1497 = scalar_lea.vmem %s3, %s1496
      // Predicated region
      $region33: #{net_forward.3} parent=31 // pred_check
        %p1498 = pneg %p100
      $region34: #{net_forward.3} parent=31 // pred_check_branch
        %1500 = sbr.rel (%p1498) target = $region36
      $region35: #{net_forward.3} parent=31 // pred_region
        _
      $region36: #{net_forward.3} parent=31 // pred_fallthru
        _
    $region32: #{net_forward.3} parent=5 // pred_fallthru
      _
    %p1501 = scmp.le.s32.totalorder 2, %s9
    // Predicated region
    $region37: #{net_forward.3} parent=5 // pred_check
      %p1502 = pneg %p1501
    $region38: #{net_forward.3} parent=5 // pred_check_branch
      %1504 = sbr.rel (%p1502) target = $region40
    $region39: #{net_forward.3} parent=5 // pred_region
      %s1505 = ssub.s32 %s9, 2
      // Predicated region
      $region41: #{net_forward.3} parent=39 // pred_check
        %p1506 = pneg %p106
      $region42: #{net_forward.3} parent=39 // pred_check_branch
        %1508 = sbr.rel (%p1506) target = $region44
      $region43: #{net_forward.3} parent=39 // pred_region
        %p1509 = scmp.lt.s32.totalorder %s15, 1
        %s1510 = scalar_select %p1509, %s15, 1
        %s1511 = smul.addr %s1510, 25
        %s1512 = smul.addr %s1511, 4
        %s1513 = scalar_lea.vmem %s3, %s1512
      $region44: #{net_forward.3} parent=39 // pred_fallthru
        _
    $region40: #{net_forward.3} parent=5 // pred_fallthru
      _
  $region6: #{net_forward.3} parent=0 // loop_footer
    %s13 = sadd.s32 1, %s9
  $region7: #{net_forward.3} parent=0 // loop_footer_branch
    %8 = sbr.rel target = $region3
  $region8: #{net_forward.3} parent=0 // loop_exit
    _

// kernel: net_forward.4
$region0: #{net_forward.4}
  #allocation0 [shape = 'u32[]', space=smem, size = 0x4, offset = 0x4, fixed_abs, tag = 'smem constant byte address 0x4 - core index']
  #allocation1 [shape = 'u32[144,128]{1,0:T(1,128)}', space=vmem, size = 0x12000, scoped, tag = 'internal scratch']
  %s0 = inlined_call_operand.vmem [shape: bf16[2,100,256], index: 0, kind: input, shape index: {}]
  %s1 = inlined_call_operand.vmem [shape: bf16[256,128], index: 1, kind: input, shape index: {}]
  %s2 = inlined_call_operand.vmem [shape: f32[1,128], index: 2, kind: input, shape index: {}]
  %s3 = inlined_call_operand.vmem [shape: bf16[2,25,128], index: 3, kind: output, shape index: {}]
  %s4 = sld [smem:[#allocation0]]
  $region45: #{net_forward.4} parent=0
    _
  %s6 = ssub.s32 1, %s4
  %s7 = scalar_select 0, %s6, %s4
  loop: start=0, step=1, limit=4
  $region2: #{net_forward.4} parent=0 // loop_pre_header
    _
  $region3: #{net_forward.4} parent=0 // loop_header
    %s9 = sphi 0, %s13
    %p10 = scmp.ge.s32.totalorder %s9, 4
    %s19 = sphi 0, %s21
    %s22 = sphi 0, %s19
    %s23 = sphi 0, %s22
    %s39 = sphi 0, %s23
    %s43 = sphi 0, %s43
    %s45 = sphi 0, %s43
    %s46 = sphi 0, %s45
    %s60 = sphi 0, %s46
    %s64 = sphi 0, %s64
    %s66 = sphi 0, %s64
    %s67 = sphi 0, %s66
    %s81 = sphi 0, %s67
    %s87 = sphi 0, %s89
    %s90 = sphi 0, %s87
    %s91 = sphi 0, %s90
    %s107 = sphi 0, %s91
  $region4: #{net_forward.4} parent=0 // loop_header_branch
    %12 = sbr.rel (%p10) target = $region8
  $region5: #{net_forward.4} parent=0 // loop_body
    %s14 = ssub.s32 %s9, 1
    %s15 = ssub.s32 %s9, 2
    %s16 = sadd.s32 %s9, 1
    %s17 = ssub.s32 %s9, %s16
    %p18 = scmp.eq.s32.totalorder %s17, 0
    %s20 = sadd.s32 %s19, 1
    %s21 = scalar_select %p18, %s19, %s20
    %p24 = pneg %p18
    %p25 = scmp.eq.s32.totalorder %s9, 1
    %p26 = por %p24, %p25
    %p27 = scmp.ne.s32.totalorder %s19, %s22
    %p28 = scmp.eq.s32.totalorder %s9, 0
    %p29 = por %p27, %p28
    %p30 = scmp.ne.s32.totalorder %s19, %s22
    %p31 = scmp.eq.s32.totalorder %s14, 1
    %p32 = por %p30, %p31
    %p33 = scmp.ne.s32.totalorder %s22, %s23
    %p34 = scmp.eq.s32.totalorder %s14, 0
    %p35 = por %p33, %p34
    %p36 = scmp.ne.s32.totalorder %s22, %s23
    %p37 = scmp.eq.s32.totalorder %s15, 1
    %p38 = por %p36, %p37
    %p40 = scmp.ne.s32.totalorder %s23, %s39
    %p41 = scmp.eq.s32.totalorder %s15, 0
    %p42 = por %p40, %p41
    %s44 = sadd.s32 %s43, 1
    %p47 = scmp.eq.s32.totalorder %s9, 1
    %p48 = scmp.ne.s32.totalorder %s43, %s45
    %p49 = scmp.eq.s32.totalorder %s9, 0
    %p50 = por %p48, %p49
    %p51 = scmp.ne.s32.totalorder %s43, %s45
    %p52 = scmp.eq.s32.totalorder %s14, 1
    %p53 = por %p51, %p52
    %p54 = scmp.ne.s32.totalorder %s45, %s46
    %p55 = scmp.eq.s32.totalorder %s14, 0
    %p56 = por %p54, %p55
    %p57 = scmp.ne.s32.totalorder %s45, %s46
    %p58 = scmp.eq.s32.totalorder %s15, 1
    %p59 = por %p57, %p58
    %p61 = scmp.ne.s32.totalorder %s46, %s60
    %p62 = scmp.eq.s32.totalorder %s15, 0
    %p63 = por %p61, %p62
    %s65 = sadd.s32 %s64, 1
    %p68 = scmp.eq.s32.totalorder %s9, 1
    %p69 = scmp.ne.s32.totalorder %s64, %s66
    %p70 = scmp.eq.s32.totalorder %s9, 0
    %p71 = por %p69, %p70
    %p72 = scmp.ne.s32.totalorder %s64, %s66
    %p73 = scmp.eq.s32.totalorder %s14, 1
    %p74 = por %p72, %p73
    %p75 = scmp.ne.s32.totalorder %s66, %s67
    %p76 = scmp.eq.s32.totalorder %s14, 0
    %p77 = por %p75, %p76
    %p78 = scmp.ne.s32.totalorder %s66, %s67
    %p79 = scmp.eq.s32.totalorder %s15, 1
    %p80 = por %p78, %p79
    %p82 = scmp.ne.s32.totalorder %s67, %s81
    %p83 = scmp.eq.s32.totalorder %s15, 0
    %p84 = por %p82, %p83
    %s85 = ssub.s32 %s9, %s16
    %p86 = scmp.eq.s32.totalorder %s85, 0
    %s88 = sadd.s32 %s87, 1
    %s89 = scalar_select %p86, %s87, %s88
    %p92 = pneg %p86
    %p93 = scmp.eq.s32.totalorder %s9, 1
    %p94 = por %p92, %p93
    %p95 = scmp.ne.s32.totalorder %s87, %s90
    %p96 = scmp.eq.s32.totalorder %s9, 0
    %p97 = por %p95, %p96
    %p98 = scmp.ne.s32.totalorder %s87, %s90
    %p99 = scmp.eq.s32.totalorder %s14, 1
    %p100 = por %p98, %p99
    %p101 = scmp.ne.s32.totalorder %s90, %s91
    %p102 = scmp.eq.s32.totalorder %s14, 0
    %p103 = por %p101, %p102
    %p104 = scmp.ne.s32.totalorder %s90, %s91
    %p105 = scmp.eq.s32.totalorder %s15, 1
    %p106 = por %p104, %p105
    %p108 = scmp.ne.s32.totalorder %s91, %s107
    %p109 = scmp.eq.s32.totalorder %s15, 0
    %p110 = por %p108, %p109
    %p111 = scmp.le.s32.totalorder 1, %s9
    %p112 = scmp.lt.s32.totalorder %s9, 3
    %p113 = pnand %p111, %p112
    %p114 = pneg %p113
    // Predicated region
    $region9: #{net_forward.4} parent=5 // pred_check
      _
    $region10: #{net_forward.4} parent=5 // pred_check_branch
      %116 = sbr.rel (%p113) target = $region12
    $region11: #{net_forward.4} parent=5 // pred_region
      %s117 = ssub.s32 %s9, 1
      // Predicated region
      $region13: #{net_forward.4} parent=11 // pred_check
        %p118 = pneg %p56
      $region14: #{net_forward.4} parent=11 // pred_check_branch
        %120 = sbr.rel (%p118) target = $region16
      $region15: #{net_forward.4} parent=11 // pred_region
        _
      $region16: #{net_forward.4} parent=11 // pred_fallthru
        _
      // Predicated region
      $region17: #{net_forward.4} parent=11 // pred_check
        %p121 = pneg %p77
      $region18: #{net_forward.4} parent=11 // pred_check_branch
        %123 = sbr.rel (%p121) target = $region20
      $region19: #{net_forward.4} parent=11 // pred_region
        _
      $region20: #{net_forward.4} parent=11 // pred_fallthru
        _
    $region12: #{net_forward.4} parent=5 // pred_fallthru
      _
    %p124 = scmp.lt.s32.totalorder %s9, 2
    // Predicated region
    $region21: #{net_forward.4} parent=5 // pred_check
      %p125 = pneg %p124
    $region22: #{net_forward.4} parent=5 // pred_check_branch
      %127 = sbr.rel (%p125) target = $region24
    $region23: #{net_forward.4} parent=5 // pred_region
      // Predicated region
      $region25: #{net_forward.4} parent=23 // pred_check
        %p128 = pneg %p29
      $region26: #{net_forward.4} parent=23 // pred_check_branch
        %130 = sbr.rel (%p128) target = $region28
      $region27: #{net_forward.4} parent=23 // pred_region
        %p131 = scmp.lt.s32.totalorder %s9, 1
        %s132 = scalar_select %p131, %s9, 1
        %s133 = smul.addr %s132, 26
        %s134 = smul.addr %s133, 4
        %s135 = scalar_lea.vmem %s0, %s134
      $region28: #{net_forward.4} parent=23 // pred_fallthru
        _
    $region24: #{net_forward.4} parent=5 // pred_fallthru
      _
    %p136 = scmp.le.s32.totalorder 1, %s9
    %p137 = scmp.lt.s32.totalorder %s9, 3
    %p138 = pnand %p136, %p137
    %p139 = pneg %p138
    // Predicated region
    $region29: #{net_forward.4} parent=5 // pred_check
      _
    $region30: #{net_forward.4} parent=5 // pred_check_branch
      %141 = sbr.rel (%p138) target = $region32
    $region31: #{net_forward.4} parent=5 // pred_region
      %s142 = ssub.s32 %s9, 1
      %p143 = scmp.lt.s32.totalorder %s14, 1
      %s144 = scalar_select %p143, %s14, 1
      %s145 = smul.addr %s144, 26
      %s146 = smul.addr %s145, 4
      %s147 = scalar_lea.vmem %s0, %s146
      %p148 = pneg %p35
      %p149 = pneg %p32
      %p150 = pneg %p56
      %p151 = pneg %p53
      %p152 = pneg %p77
      %p153 = pneg %p74
      %p154 = pneg %p103
      %p155 = pneg %p100
      %p156 = scmp.lt.s32.totalorder %s14, 1
      %s157 = scalar_select %p156, %s14, 1
      %s158 = smul.addr %s157, 4
      %s159 = smul.addr %s158, 4
      %s160 = scalar_lea.vmem %s3, %s159
      %p161 = scmp.lt.s32.totalorder %s14, 1
      %s162 = scalar_select %p161, %s14, 1
      %s163 = smul.addr %s162, 26
      %s164 = smul.addr %s163, 4
      %s165 = scalar_lea.vmem %s0, %s164
      %p166 = scmp.lt.s32.totalorder %s14, 1
      %s167 = scalar_select %p166, %s14, 1
      %s168 = smul.addr %s167, 4
      %s169 = smul.addr %s168, 4
      %s170 = scalar_lea.vmem %s3, %s169
      %v172 = vld [vmem:[%s1] sm:$0xf]
      %v173 = vld [vmem:[%s1 + $0x4] sm:$0xf]
      %v174 = vld [vmem:[%s1 + $0x8] sm:$0xf]
      %v175 = vld [vmem:[%s1 + $0xc] sm:$0xf]
      %v176 = vld [vmem:[%s1 + $0x10] sm:$0xf]
      %v177 = vld [vmem:[%s1 + $0x14] sm:$0xf]
      %v178 = vld [vmem:[%s1 + $0x18] sm:$0xf]
      %v179 = vld [vmem:[%s1 + $0x1c] sm:$0xf]
      %v180 = vld [vmem:[%s1 + $0x20] sm:$0xf]
      %v181 = vld [vmem:[%s1 + $0x24] sm:$0xf]
      %v182 = vld [vmem:[%s1 + $0x28] sm:$0xf]
      %v183 = vld [vmem:[%s1 + $0x2c] sm:$0xf]
      %v184 = vld [vmem:[%s1 + $0x30] sm:$0xf]
      %v185 = vld [vmem:[%s1 + $0x34] sm:$0xf]
      %v186 = vld [vmem:[%s1 + $0x38] sm:$0xf]
      %v187 = vld [vmem:[%s1 + $0x3c] sm:$0xf]
      %v188 = vld [vmem:[%s1 + $0x40] sm:$0xf]
      %v189 = vld [vmem:[%s1 + $0x44] sm:$0xf]
      %v190 = vld [vmem:[%s1 + $0x48] sm:$0xf]
      %v191 = vld [vmem:[%s1 + $0x4c] sm:$0xf]
      %v192 = vld [vmem:[%s1 + $0x50] sm:$0xf]
      %v193 = vld [vmem:[%s1 + $0x54] sm:$0xf]
      %v194 = vld [vmem:[%s1 + $0x58] sm:$0xf]
      %v195 = vld [vmem:[%s1 + $0x5c] sm:$0xf]
      %v196 = vld [vmem:[%s1 + $0x60] sm:$0xf]
      %v197 = vld [vmem:[%s1 + $0x64] sm:$0xf]
      %v198 = vld [vmem:[%s1 + $0x68] sm:$0xf]
      %v199 = vld [vmem:[%s1 + $0x6c] sm:$0xf]
      %v200 = vld [vmem:[%s1 + $0x70] sm:$0xf]
      %v201 = vld [vmem:[%s1 + $0x74] sm:$0xf]
      %v202 = vld [vmem:[%s1 + $0x78] sm:$0xf]
      %v203 = vld [vmem:[%s1 + $0x7c] sm:$0xf]
      %v204 = vld [vmem:[%s165] sm:$0xff]
      %v205 = vld [vmem:[%s165 + $0x8] sm:$0xff]
      %v206 = vld [vmem:[%s165 + $0x10] sm:$0xff]
      %v207 = vld [vmem:[%s165 + $0x18] sm:$0x11]
      %v212 = vunpack.c.l.b16 %v204
      %v213 = vunpack.c.h.b16 %v204
      %v214 = vunpack.c.l.b16 %v205
      %v215 = vunpack.c.h.b16 %v205
      %v216 = vunpack.c.l.b16 %v206
      %v217 = vunpack.c.h.b16 %v206
      %v218 = vunpack.c.l.b16 %v207
      %v219 = vunpack.c.h.b16 %v207
      %v220 = vpack.c.b16 %v214, %v212
      %v221 = vpack.c.b16 %v215, %v213
      %v222 = vpack.c.b16 %v218, %v216
      %v223 = vpack.c.b16 %v219, %v217
      %v260 = vunpack.c.l.b16 %v172
      %v261 = vunpack.c.l.b16 %v173
      %v262 = vunpack.c.l.b16 %v174
      %v263 = vunpack.c.l.b16 %v175
      %v264 = vunpack.c.l.b16 %v176
      %v265 = vunpack.c.l.b16 %v177
      %v266 = vunpack.c.l.b16 %v178
      %v267 = vunpack.c.l.b16 %v179
      %v268 = vunpack.c.l.b16 %v180
      %v269 = vunpack.c.l.b16 %v181
      %v270 = vunpack.c.l.b16 %v182
      %v271 = vunpack.c.l.b16 %v183
      %v272 = vunpack.c.l.b16 %v184
      %v273 = vunpack.c.l.b16 %v185
      %v274 = vunpack.c.l.b16 %v186
      %v275 = vunpack.c.l.b16 %v187
      %v276 = vunpack.c.l.b16 %v188
      %v277 = vunpack.c.l.b16 %v189
      %v278 = vunpack.c.l.b16 %v190
      %v279 = vunpack.c.l.b16 %v191
      %v280 = vunpack.c.l.b16 %v192
      %v281 = vunpack.c.l.b16 %v193
      %v282 = vunpack.c.l.b16 %v194
      %v283 = vunpack.c.l.b16 %v195
      %v284 = vunpack.c.l.b16 %v196
      %v285 = vunpack.c.l.b16 %v197
      %v286 = vunpack.c.l.b16 %v198
      %v287 = vunpack.c.l.b16 %v199
      %v288 = vunpack.c.l.b16 %v200
      %v289 = vunpack.c.l.b16 %v201
      %v290 = vunpack.c.l.b16 %v202
      %v291 = vunpack.c.l.b16 %v203
      %v292 = vpack.c.b16 %v261, %v260
      %v293 = vpack.c.b16 %v263, %v262
      %v294 = vpack.c.b16 %v265, %v264
      %v295 = vpack.c.b16 %v267, %v266
      %v296 = vpack.c.b16 %v269, %v268
      %v297 = vpack.c.b16 %v271, %v270
      %v298 = vpack.c.b16 %v273, %v272
      %v299 = vpack.c.b16 %v275, %v274
      %v300 = vpack.c.b16 %v277, %v276
      %v301 = vpack.c.b16 %v279, %v278
      %v302 = vpack.c.b16 %v281, %v280
      %v303 = vpack.c.b16 %v283, %v282
      %v304 = vpack.c.b16 %v285, %v284
      %v305 = vpack.c.b16 %v287, %v286
      %v306 = vpack.c.b16 %v289, %v288
      %v307 = vpack.c.b16 %v291, %v290
      %324 = vmatprep.subr.bf16.mxu0 0
      %325 = vmatpush1.bf16.msra.mxu0 %v292
      %326 = vmatprep.subr.bf16.mxu0 0
      %327 = vmatpush1.bf16.msra.mxu0 %v293
      %328 = vmatprep.subr.bf16.mxu0 0
      %329 = vmatpush1.bf16.msra.mxu0 %v294
      %330 = vmatprep.subr.bf16.mxu0 0
      %331 = vmatpush1.bf16.msra.mxu0 %v295
      %332 = vmatprep.subr.bf16.mxu0 0
      %333 = vmatpush1.bf16.msra.mxu0 %v296
      %334 = vmatprep.subr.bf16.mxu0 0
      %335 = vmatpush1.bf16.msra.mxu0 %v297
      %336 = vmatprep.subr.bf16.mxu0 0
      %337 = vmatpush1.bf16.msra.mxu0 %v298
      %338 = vmatprep.subr.bf16.mxu0 0
      %339 = vmatpush1.bf16.msra.mxu0 %v299
      %340 = vmatprep.subr.bf16.mxu0 0
      %341 = vmatpush1.bf16.msra.mxu0 %v300
      %342 = vmatprep.subr.bf16.mxu0 0
      %343 = vmatpush1.bf16.msra.mxu0 %v301
      %344 = vmatprep.subr.bf16.mxu0 0
      %345 = vmatpush1.bf16.msra.mxu0 %v302
      %346 = vmatprep.subr.bf16.mxu0 0
      %347 = vmatpush1.bf16.msra.mxu0 %v303
      %348 = vmatprep.subr.bf16.mxu0 0
      %349 = vmatpush1.bf16.msra.mxu0 %v304
      %350 = vmatprep.subr.bf16.mxu0 0
      %351 = vmatpush1.bf16.msra.mxu0 %v305
      %352 = vmatprep.subr.bf16.mxu0 0
      %353 = vmatpush1.bf16.msra.mxu0 %v306
      %354 = vmatprep.subr.bf16.mxu0 0
      %355 = vmatpush1.bf16.msra.mxu0 %v307
      %356 = vmatprep.mubr.bf16.mxu0 %v221
      %357 = vmatmul.mubr.bf16.gmra.mrb[0].mxu0 %v220
      %v358 = vpop.f32.mrb[0].mxu0
      %v359 = vadd.f32 0.0, %v358
      %v360 = vpop.f32.mrb[0].mxu0
      %v361 = vpop.f32.mrb[0].mxu0
      %v362 = vadd.f32 0.0, %v361
      %v363 = vpop.f32.mrb[0].mxu0
      %364 = vmatprep.mubr.bf16.mxu0 %v223
      %365 = vmatmul.mubr.bf16.gmra.mrb[0].mxu0 %v222
      %v366 = vpop.f32.mrb[0].mxu0
      %v367 = vadd.f32 0.0, %v366
      %v368 = vpop.f32.mrb[0].mxu0
      %v369 = vpop.f32.mrb[0].mxu0
      %v370 = vadd.f32 0.0, %v369
      %v371 = vpop.f32.mrb[0].mxu0
      %372 = vdwg.mxu0
      %v373 = vld [vmem:[%s165 + $0x18] sm:$0xff]
      %v374 = vld [vmem:[%s165 + $0x20] sm:$0xff]
      %v375 = vld [vmem:[%s165 + $0x28] sm:$0xff]
      %v376 = vld [vmem:[%s165 + $0x30] sm:$0x11]
      %v381 = vunpack.c.l.b16 %v373
      %v382 = vunpack.c.h.b16 %v373
      %v383 = vunpack.c.l.b16 %v374
      %v384 = vunpack.c.h.b16 %v374
      %v385 = vunpack.c.l.b16 %v375
      %v386 = vunpack.c.h.b16 %v375
      %v387 = vunpack.c.l.b16 %v376
      %v388 = vunpack.c.h.b16 %v376
      %v389 = vpack.c.b16 %v383, %v381
      %v390 = vpack.c.b16 %v384, %v382
      %v391 = vpack.c.b16 %v387, %v385
      %v392 = vpack.c.b16 %v388, %v386
      %vm393 = vsmask.f32 7424
      %v395 = vshrl.u32 %v389, 16
      %v397 = vshll.u32 %v389, 16
      %v399 = vrot.slane %v397, 1
      %v400 = vor.u32 %v395, %v399
      %v402 = vshll.u32 %v391, 16
      %v404 = vrot.slane %v402, 1
      %v405 = vsel %vm393, %v400, %v404
      %v407 = vshrl.u32 %v390, 16
      %v409 = vshll.u32 %v390, 16
      %v411 = vrot.slane %v409, 1
      %v412 = vor.u32 %v407, %v411
      %v414 = vshll.u32 %v392, 16
      %v416 = vrot.slane %v414, 1
      %v417 = vsel %vm393, %v412, %v416
      %v418 = vshrl.u32 %v391, 16
      %v420 = vor.u32 %v418, %v404
      %v421 = vshrl.u32 %v392, 16
      %v423 = vor.u32 %v421, %v416
      %428 = vmatprep.subr.bf16.mxu0 0
      %429 = vmatpush1.bf16.msra.mxu0 %v292
      %430 = vmatprep.subr.bf16.mxu0 0
      %431 = vmatpush1.bf16.msra.mxu0 %v293
      %432 = vmatprep.subr.bf16.mxu0 0
      %433 = vmatpush1.bf16.msra.mxu0 %v294
      %434 = vmatprep.subr.bf16.mxu0 0
      %435 = vmatpush1.bf16.msra.mxu0 %v295
      %436 = vmatprep.subr.bf16.mxu0 0
      %437 = vmatpush1.bf16.msra.mxu0 %v296
      %438 = vmatprep.subr.bf16.mxu0 0
      %439 = vmatpush1.bf16.msra.mxu0 %v297
      %440 = vmatprep.subr.bf16.mxu0 0
      %441 = vmatpush1.bf16.msra.mxu0 %v298
      %442 = vmatprep.subr.bf16.mxu0 0
      %443 = vmatpush1.bf16.msra.mxu0 %v299
      %444 = vmatprep.subr.bf16.mxu0 0
      %445 = vmatpush1.bf16.msra.mxu0 %v300
      %446 = vmatprep.subr.bf16.mxu0 0
      %447 = vmatpush1.bf16.msra.mxu0 %v301
      %448 = vmatprep.subr.bf16.mxu0 0
      %449 = vmatpush1.bf16.msra.mxu0 %v302
      %450 = vmatprep.subr.bf16.mxu0 0
      %451 = vmatpush1.bf16.msra.mxu0 %v303
      %452 = vmatprep.subr.bf16.mxu0 0
      %453 = vmatpush1.bf16.msra.mxu0 %v304
      %454 = vmatprep.subr.bf16.mxu0 0
      %455 = vmatpush1.bf16.msra.mxu0 %v305
      %456 = vmatprep.subr.bf16.mxu0 0
      %457 = vmatpush1.bf16.msra.mxu0 %v306
      %458 = vmatprep.subr.bf16.mxu0 0
      %459 = vmatpush1.bf16.msra.mxu0 %v307
      %460 = vmatprep.mubr.bf16.mxu0 %v417
      %461 = vmatmul.mubr.bf16.gmra.mrb[0].mxu0 %v405
      %v462 = vpop.f32.mrb[0].mxu0
      %v463 = vadd.f32 0.0, %v462
      %v464 = vpop.f32.mrb[0].mxu0
      %v465 = vpop.f32.mrb[0].mxu0
      %v466 = vadd.f32 0.0, %v465
      %v467 = vpop.f32.mrb[0].mxu0
      %468 = vmatprep.mubr.bf16.mxu0 %v423
      %469 = vmatmul.mubr.bf16.gmra.mrb[0].mxu0 %v420
      %v470 = vpop.f32.mrb[0].mxu0
      %v471 = vadd.f32 0.0, %v470
      %v472 = vpop.f32.mrb[0].mxu0
      %v473 = vpop.f32.mrb[0].mxu0
      %v474 = vadd.f32 0.0, %v473
      %v475 = vpop.f32.mrb[0].mxu0
      %476 = vdwg.mxu0
      %v477 = vmax.f32 %v359, %v463
      %v478 = vmax.f32 %v362, %v466
      %v479 = vmax.f32 %v367, %v471
      %v480 = vmax.f32 %v370, %v474
      %v481 = vld [vmem:[%s165 + $0x30] sm:$0xee]
      %v482 = vld [vmem:[%s165 + $0x38] sm:$0xff]
      %v483 = vld [vmem:[%s165 + $0x40] sm:$0xff]
      %v484 = vld [vmem:[%s165 + $0x48] sm:$0x33]
      %v489 = vunpack.c.l.b16 %v481
      %v490 = vunpack.c.h.b16 %v481
      %v491 = vunpack.c.l.b16 %v482
      %v492 = vunpack.c.h.b16 %v482
      %v493 = vunpack.c.l.b16 %v483
      %v494 = vunpack.c.h.b16 %v483
      %v495 = vunpack.c.l.b16 %v484
      %v496 = vunpack.c.h.b16 %v484
      %v497 = vpack.c.b16 %v491, %v489
      %v498 = vpack.c.b16 %v492, %v490
      %v499 = vpack.c.b16 %v495, %v493
      %v500 = vpack.c.b16 %v496, %v494
      %vm501 = vcmask 1046528
      %v502 = vrot.slane %v497, 1
      %v503 = vrot.slane %v499, 1
      %v504 = vsel %vm501, %v502, %v503
      %v505 = vrot.slane %v498, 1
      %v506 = vrot.slane %v500, 1
      %v507 = vsel %vm501, %v505, %v506
      %512 = vmatprep.subr.bf16.mxu0 0
      %513 = vmatpush1.bf16.msra.mxu0 %v292
      %514 = vmatprep.subr.bf16.mxu0 0
      %515 = vmatpush1.bf16.msra.mxu0 %v293
      %516 = vmatprep.subr.bf16.mxu0 0
      %517 = vmatpush1.bf16.msra.mxu0 %v294
      %518 = vmatprep.subr.bf16.mxu0 0
      %519 = vmatpush1.bf16.msra.mxu0 %v295
      %520 = vmatprep.subr.bf16.mxu0 0
      %521 = vmatpush1.bf16.msra.mxu0 %v296
      %522 = vmatprep.subr.bf16.mxu0 0
      %523 = vmatpush1.bf16.msra.mxu0 %v297
      %524 = vmatprep.subr.bf16.mxu0 0
      %525 = vmatpush1.bf16.msra.mxu0 %v298
      %526 = vmatprep.subr.bf16.mxu0 0
      %527 = vmatpush1.bf16.msra.mxu0 %v299
      %528 = vmatprep.subr.bf16.mxu0 0
      %529 = vmatpush1.bf16.msra.mxu0 %v300
      %530 = vmatprep.subr.bf16.mxu0 0
      %531 = vmatpush1.bf16.msra.mxu0 %v301
      %532 = vmatprep.subr.bf16.mxu0 0
      %533 = vmatpush1.bf16.msra.mxu0 %v302
      %534 = vmatprep.subr.bf16.mxu0 0
      %535 = vmatpush1.bf16.msra.mxu0 %v303
      %536 = vmatprep.subr.bf16.mxu0 0
      %537 = vmatpush1.bf16.msra.mxu0 %v304
      %538 = vmatprep.subr.bf16.mxu0 0
      %539 = vmatpush1.bf16.msra.mxu0 %v305
      %540 = vmatprep.subr.bf16.mxu0 0
      %541 = vmatpush1.bf16.msra.mxu0 %v306
      %542 = vmatprep.subr.bf16.mxu0 0
      %543 = vmatpush1.bf16.msra.mxu0 %v307
      %544 = vmatprep.mubr.bf16.mxu0 %v507
      %545 = vmatmul.mubr.bf16.gmra.mrb[0].mxu0 %v504
      %v546 = vpop.f32.mrb[0].mxu0
      %v547 = vadd.f32 0.0, %v546
      %v548 = vpop.f32.mrb[0].mxu0
      %v549 = vpop.f32.mrb[0].mxu0
      %v550 = vadd.f32 0.0, %v549
      %v551 = vpop.f32.mrb[0].mxu0
      %552 = vmatprep.mubr.bf16.mxu0 %v506
      %553 = vmatmul.mubr.bf16.gmra.mrb[0].mxu0 %v503
      %v554 = vpop.f32.mrb[0].mxu0
      %v555 = vadd.f32 0.0, %v554
      %v556 = vpop.f32.mrb[0].mxu0
      %v557 = vpop.f32.mrb[0].mxu0
      %v558 = vadd.f32 0.0, %v557
      %v559 = vpop.f32.mrb[0].mxu0
      %560 = vdwg.mxu0
      %v561 = vmax.f32 %v477, %v547
      %v562 = vmax.f32 %v478, %v550
      %v563 = vmax.f32 %v479, %v555
      %v564 = vmax.f32 %v480, %v558
      %v565 = vld [vmem:[%s165 + $0x48] sm:$0xee]
      %v566 = vld [vmem:[%s165 + $0x50] sm:$0xff]
      %v567 = vld [vmem:[%s165 + $0x58] sm:$0xff]
      %v568 = vld [vmem:[%s165 + $0x60] sm:$0x33]
      %v573 = vunpack.c.l.b16 %v565
      %v574 = vunpack.c.h.b16 %v565
      %v575 = vunpack.c.l.b16 %v566
      %v576 = vunpack.c.h.b16 %v566
      %v577 = vunpack.c.l.b16 %v567
      %v578 = vunpack.c.h.b16 %v567
      %v579 = vunpack.c.l.b16 %v568
      %v580 = vunpack.c.h.b16 %v568
      %v581 = vpack.c.b16 %v575, %v573
      %v582 = vpack.c.b16 %v576, %v574
      %v583 = vpack.c.b16 %v579, %v577
      %v584 = vpack.c.b16 %v580, %v578
      %vm585 = vsmask.f32 6400
      %v587 = vshrl.u32 %v581, 16
      %v589 = vrot.slane %v587, 1
      %v590 = vshll.u32 %v581, 16
      %v592 = vrot.slane %v590, 2
      %v593 = vor.u32 %v589, %v592
      %v595 = vshrl.u32 %v583, 16
      %v597 = vrot.slane %v595, 1
      %v598 = vshll.u32 %v583, 16
      %v600 = vrot.slane %v598, 2
      %v601 = vor.u32 %v597, %v600
      %v602 = vsel %vm585, %v593, %v601
      %v604 = vshrl.u32 %v582, 16
      %v606 = vrot.slane %v604, 1
      %v607 = vshll.u32 %v582, 16
      %v609 = vrot.slane %v607, 2
      %v610 = vor.u32 %v606, %v609
      %v612 = vshrl.u32 %v584, 16
      %v614 = vrot.slane %v612, 1
      %v615 = vshll.u32 %v584, 16
      %v617 = vrot.slane %v615, 2
      %v618 = vor.u32 %v614, %v617
      %v619 = vsel %vm585, %v610, %v618
      %624 = vmatprep.subr.bf16.mxu0 0
      %625 = vmatpush1.bf16.msra.mxu0 %v292
      %626 = vmatprep.subr.bf16.mxu0 0
      %627 = vmatpush1.bf16.msra.mxu0 %v293
      %628 = vmatprep.subr.bf16.mxu0 0
      %629 = vmatpush1.bf16.msra.mxu0 %v294
      %630 = vmatprep.subr.bf16.mxu0 0
      %631 = vmatpush1.bf16.msra.mxu0 %v295
      %632 = vmatprep.subr.bf16.mxu0 0
      %633 = vmatpush1.bf16.msra.mxu0 %v296
      %634 = vmatprep.subr.bf16.mxu0 0
      %635 = vmatpush1.bf16.msra.mxu0 %v297
      %636 = vmatprep.subr.bf16.mxu0 0
      %637 = vmatpush1.bf16.msra.mxu0 %v298
      %638 = vmatprep.subr.bf16.mxu0 0
      %639 = vmatpush1.bf16.msra.mxu0 %v299
      %640 = vmatprep.subr.bf16.mxu0 0
      %641 = vmatpush1.bf16.msra.mxu0 %v300
      %642 = vmatprep.subr.bf16.mxu0 0
      %643 = vmatpush1.bf16.msra.mxu0 %v301
      %644 = vmatprep.subr.bf16.mxu0 0
      %645 = vmatpush1.bf16.msra.mxu0 %v302
      %646 = vmatprep.subr.bf16.mxu0 0
      %647 = vmatpush1.bf16.msra.mxu0 %v303
      %648 = vmatprep.subr.bf16.mxu0 0
      %649 = vmatpush1.bf16.msra.mxu0 %v304
      %650 = vmatprep.subr.bf16.mxu0 0
      %651 = vmatpush1.bf16.msra.mxu0 %v305
      %652 = vmatprep.subr.bf16.mxu0 0
      %653 = vmatpush1.bf16.msra.mxu0 %v306
      %654 = vmatprep.subr.bf16.mxu0 0
      %655 = vmatpush1.bf16.msra.mxu0 %v307
      %656 = vmatprep.mubr.bf16.mxu0 %v619
      %657 = vmatmul.mubr.bf16.gmra.mrb[0].mxu0 %v602
      %v658 = vpop.f32.mrb[0].mxu0
      %v659 = vadd.f32 0.0, %v658
      %v660 = vpop.f32.mrb[0].mxu0
      %v661 = vpop.f32.mrb[0].mxu0
      %v662 = vadd.f32 0.0, %v661
      %v663 = vpop.f32.mrb[0].mxu0
      %664 = vmatprep.mubr.bf16.mxu0 %v618
      %665 = vmatmul.mubr.bf16.gmra.mrb[0].mxu0 %v601
      %v666 = vpop.f32.mrb[0].mxu0
      %v667 = vadd.f32 0.0, %v666
      %v668 = vpop.f32.mrb[0].mxu0
      %v669 = vpop.f32.mrb[0].mxu0
      %v670 = vadd.f32 0.0, %v669
      %v671 = vpop.f32.mrb[0].mxu0
      %672 = vdwg.mxu0
      %v673 = vmax.f32 %v561, %v659
      %v674 = vmax.f32 %v562, %v662
      %v675 = vmax.f32 %v563, %v667
      %v676 = vmax.f32 %v564, %v670
      %v677 = vld [vmem:[%s2] sm:$0x1]
      %v679 = vlaneseq
      %v680 = vshrl.u32 %v679, 7
      %v681 = vsub.s32 0, %v680
      %v682 = vrot.slane %v677, %v681
      %v684 = vadd.f32 %v673, %v682
      %v685 = vadd.f32 %v674, %v682
      %v686 = vadd.f32 %v675, %v682
      %v687 = vadd.f32 %v676, %v682
      %v688 = vmax.f32 %v684, 0.0
      %v689 = vmax.f32 %v685, 0.0
      %v690 = vmax.f32 %v686, 0.0
      %v691 = vmax.f32 %v687, 0.0
      %v692 = vpack.c.bf16 %v689, %v688
      %v693 = vpack.c.bf16 %v691, %v690
      %v696 = vunpack.c.l.b16 %v692
      %v697 = vunpack.c.h.b16 %v692
      %v698 = vunpack.c.l.b16 %v693
      %v699 = vunpack.c.h.b16 %v693
      %v700 = vpack.c.b16 %v696, %v696
      %v701 = vpack.c.b16 %v697, %v697
      %v702 = vpack.c.b16 %v698, %v698
      %v703 = vpack.c.b16 %v699, %v699
      %708 = vst [vmem:[%s170] sm:$0xf] %v700
      %709 = vst [vmem:[%s170 + $0x4] sm:$0xf] %v701
      %710 = vst [vmem:[%s170 + $0x8] sm:$0xf] %v702
      %vm711 = vcmask 1040384
      %vm712 = vsmask.f32 256
      %vm713 = vmand %vm711, %vm712
      %v714 = vld [vmem:[%s170 + $0xc] sm:$0x1]
      %v715 = vsel %vm713, %v703, %v714
      %716 = vst [vmem:[%s170 + $0xc] sm:$0x1] %v715
      %p717 = scmp.lt.s32.totalorder %s14, 1
      %s718 = scalar_select %p717, %s14, 1
      %s719 = smul.addr %s718, 4
      %s720 = smul.addr %s719, 4
      %s721 = scalar_lea.vmem %s3, %s720
      // Predicated region
      $region33: #{net_forward.4} parent=31 // pred_check
        %p722 = pneg %p100
      $region34: #{net_forward.4} parent=31 // pred_check_branch
        %724 = sbr.rel (%p722) target = $region36
      $region35: #{net_forward.4} parent=31 // pred_region
        _
      $region36: #{net_forward.4} parent=31 // pred_fallthru
        _
    $region32: #{net_forward.4} parent=5 // pred_fallthru
      _
    %p725 = scmp.le.s32.totalorder 2, %s9
    // Predicated region
    $region37: #{net_forward.4} parent=5 // pred_check
      %p726 = pneg %p725
    $region38: #{net_forward.4} parent=5 // pred_check_branch
      %728 = sbr.rel (%p726) target = $region40
    $region39: #{net_forward.4} parent=5 // pred_region
      %s729 = ssub.s32 %s9, 2
      // Predicated region
      $region41: #{net_forward.4} parent=39 // pred_check
        %p730 = pneg %p106
      $region42: #{net_forward.4} parent=39 // pred_check_branch
        %732 = sbr.rel (%p730) target = $region44
      $region43: #{net_forward.4} parent=39 // pred_region
        %p733 = scmp.lt.s32.totalorder %s15, 1
        %s734 = scalar_select %p733, %s15, 1
        %s735 = smul.addr %s734, 4
        %s736 = smul.addr %s735, 4
        %s737 = scalar_lea.vmem %s3, %s736
      $region44: #{net_forward.4} parent=39 // pred_fallthru
        _
    $region40: #{net_forward.4} parent=5 // pred_fallthru
      _
  $region6: #{net_forward.4} parent=0 // loop_footer
    %s13 = sadd.s32 1, %s9
  $region7: #{net_forward.4} parent=0 // loop_footer_branch
    %8 = sbr.rel target = $region3
  $region8: #{net_forward.4} parent=0 // loop_exit
    _

// kernel: net_forward.5
$region0: #{net_forward.5}
  #allocation0 [shape = 'u32[]', space=smem, size = 0x4, offset = 0x4, fixed_abs, tag = 'smem constant byte address 0x4 - core index']
  #allocation1 [shape = 'u32[144,128]{1,0:T(1,128)}', space=vmem, size = 0x12000, scoped, tag = 'internal scratch']
  %s0 = inlined_call_operand.vmem [shape: bf16[2,3200], index: 0, kind: input, shape index: {}]
  %s1 = inlined_call_operand.vmem [shape: bf16[3200,128], index: 1, kind: input, shape index: {}]
  %s2 = inlined_call_operand.vmem [shape: f32[1,128], index: 2, kind: input, shape index: {}]
  %s3 = inlined_call_operand.vmem [shape: bf16[128,128], index: 3, kind: input, shape index: {}]
  %s4 = inlined_call_operand.vmem [shape: f32[1,128], index: 4, kind: input, shape index: {}]
  %s5 = inlined_call_operand.vmem [shape: bf16[128,128], index: 5, kind: input, shape index: {}]
  %s6 = inlined_call_operand.vmem [shape: f32[1,128], index: 6, kind: input, shape index: {}]
  %s7 = inlined_call_operand.hbm [shape: f32[2,128], index: 7, kind: output, shape index: {}]
  %s8 = sld [smem:[#allocation0]]
  $region38: #{net_forward.5} parent=0
    _
  %s10 = ssub.s32 1, %s8
  %s11 = scalar_select 0, %s10, %s8
  $region1: #{net_forward.5} parent=0
    #allocation2 [shape = 'u8[1024]{0}', space=vmem, size = 0x400, scoped, tag = 'output window, operand 0, single buffered']
    #allocation3 [shape = 's32[1]{0}', space=sflag, size = 0x4, scoped, tag = 'scoped memory for net_forward.5']
    %12 = vsyncpa [#allocation3], 0
    // Predicated region
    $region2: #{net_forward.5} parent=1 // pred_check
      _
    $region3: #{net_forward.5} parent=1 // pred_check_branch
      %14 = sbr.rel (0) target = $region5
    $region4: #{net_forward.5} parent=1 // pred_region
      _
    $region5: #{net_forward.5} parent=1 // pred_fallthru
      _
    // Predicated region
    $region6: #{net_forward.5} parent=1 // pred_check
      _
    $region7: #{net_forward.5} parent=1 // pred_check_branch
      %16 = sbr.rel (0) target = $region9
    $region8: #{net_forward.5} parent=1 // pred_region
      _
    $region9: #{net_forward.5} parent=1 // pred_fallthru
      _
    // Predicated region
    $region10: #{net_forward.5} parent=1 // pred_check
      _
    $region11: #{net_forward.5} parent=1 // pred_check_branch
      %18 = sbr.rel (0) target = $region13
    $region12: #{net_forward.5} parent=1 // pred_region
      _
    $region13: #{net_forward.5} parent=1 // pred_fallthru
      _
    // Predicated region
    $region14: #{net_forward.5} parent=1 // pred_check
      _
    $region15: #{net_forward.5} parent=1 // pred_check_branch
      %20 = sbr.rel (0) target = $region17
    $region16: #{net_forward.5} parent=1 // pred_region
      _
    $region17: #{net_forward.5} parent=1 // pred_fallthru
      _
    // Predicated region
    $region18: #{net_forward.5} parent=1 // pred_check
      _
    $region19: #{net_forward.5} parent=1 // pred_check_branch
      %22 = sbr.rel (0) target = $region21
    $region20: #{net_forward.5} parent=1 // pred_region
      _
    $region21: #{net_forward.5} parent=1 // pred_fallthru
      _
    // Predicated region
    $region22: #{net_forward.5} parent=1 // pred_check
      _
    $region23: #{net_forward.5} parent=1 // pred_check_branch
      %24 = sbr.rel (0) target = $region25
    $region24: #{net_forward.5} parent=1 // pred_region
      _
    $region25: #{net_forward.5} parent=1 // pred_fallthru
      _
    // Predicated region
    $region26: #{net_forward.5} parent=1 // pred_check
      _
    $region27: #{net_forward.5} parent=1 // pred_check_branch
      %26 = sbr.rel (0) target = $region29
    $region28: #{net_forward.5} parent=1 // pred_region
      _
    $region29: #{net_forward.5} parent=1 // pred_fallthru
      _
    %v28 = vld [vmem:[%s0] sm:$0xff]
    %v29 = vld [vmem:[%s0 + $0x8] sm:$0xff]
    %v30 = vld [vmem:[%s0 + $0x10] sm:$0xff]
    %v31 = vld [vmem:[%s0 + $0x18] sm:$0x1]
    %v32 = vld [vmem:[%s1] sm:$0xf]
    %v33 = vld [vmem:[%s1 + $0x4] sm:$0xf]
    %v34 = vld [vmem:[%s1 + $0x8] sm:$0xf]
    %v35 = vld [vmem:[%s1 + $0xc] sm:$0xf]
    %v36 = vld [vmem:[%s1 + $0x10] sm:$0xf]
    %v37 = vld [vmem:[%s1 + $0x14] sm:$0xf]
    %v38 = vld [vmem:[%s1 + $0x18] sm:$0xf]
    %v39 = vld [vmem:[%s1 + $0x1c] sm:$0xf]
    %v40 = vld [vmem:[%s1 + $0x20] sm:$0xf]
    %v41 = vld [vmem:[%s1 + $0x24] sm:$0xf]
    %v42 = vld [vmem:[%s1 + $0x28] sm:$0xf]
    %v43 = vld [vmem:[%s1 + $0x2c] sm:$0xf]
    %v44 = vld [vmem:[%s1 + $0x30] sm:$0xf]
    %v45 = vld [vmem:[%s1 + $0x34] sm:$0xf]
    %v46 = vld [vmem:[%s1 + $0x38] sm:$0xf]
    %v47 = vld [vmem:[%s1 + $0x3c] sm:$0xf]
    %v48 = vld [vmem:[%s1 + $0x40] sm:$0xf]
    %v49 = vld [vmem:[%s1 + $0x44] sm:$0xf]
    %v50 = vld [vmem:[%s1 + $0x48] sm:$0xf]
    %v51 = vld [vmem:[%s1 + $0x4c] sm:$0xf]
    %v52 = vld [vmem:[%s1 + $0x50] sm:$0xf]
    %v53 = vld [vmem:[%s1 + $0x54] sm:$0xf]
    %v54 = vld [vmem:[%s1 + $0x58] sm:$0xf]
    %v55 = vld [vmem:[%s1 + $0x5c] sm:$0xf]
    %v56 = vld [vmem:[%s1 + $0x60] sm:$0xf]
    %v57 = vld [vmem:[%s1 + $0x64] sm:$0xf]
    %v58 = vld [vmem:[%s1 + $0x68] sm:$0xf]
    %v59 = vld [vmem:[%s1 + $0x6c] sm:$0xf]
    %v60 = vld [vmem:[%s1 + $0x70] sm:$0xf]
    %v61 = vld [vmem:[%s1 + $0x74] sm:$0xf]
    %v62 = vld [vmem:[%s1 + $0x78] sm:$0xf]
    %v63 = vld [vmem:[%s1 + $0x7c] sm:$0xf]
    %v64 = vld [vmem:[%s1 + $0x80] sm:$0xf]
    %v65 = vld [vmem:[%s1 + $0x84] sm:$0xf]
    %v66 = vld [vmem:[%s1 + $0x88] sm:$0xf]
    %v67 = vld [vmem:[%s1 + $0x8c] sm:$0xf]
    %v68 = vld [vmem:[%s1 + $0x90] sm:$0xf]
    %v69 = vld [vmem:[%s1 + $0x94] sm:$0xf]
    %v70 = vld [vmem:[%s1 + $0x98] sm:$0xf]
    %v71 = vld [vmem:[%s1 + $0x9c] sm:$0xf]
    %v72 = vld [vmem:[%s1 + $0xa0] sm:$0xf]
    %v73 = vld [vmem:[%s1 + $0xa4] sm:$0xf]
    %v74 = vld [vmem:[%s1 + $0xa8] sm:$0xf]
    %v75 = vld [vmem:[%s1 + $0xac] sm:$0xf]
    %v76 = vld [vmem:[%s1 + $0xb0] sm:$0xf]
    %v77 = vld [vmem:[%s1 + $0xb4] sm:$0xf]
    %v78 = vld [vmem:[%s1 + $0xb8] sm:$0xf]
    %v79 = vld [vmem:[%s1 + $0xbc] sm:$0xf]
    %v80 = vld [vmem:[%s1 + $0xc0] sm:$0xf]
    %v81 = vld [vmem:[%s1 + $0xc4] sm:$0xf]
    %v82 = vld [vmem:[%s1 + $0xc8] sm:$0xf]
    %v83 = vld [vmem:[%s1 + $0xcc] sm:$0xf]
    %v84 = vld [vmem:[%s1 + $0xd0] sm:$0xf]
    %v85 = vld [vmem:[%s1 + $0xd4] sm:$0xf]
    %v86 = vld [vmem:[%s1 + $0xd8] sm:$0xf]
    %v87 = vld [vmem:[%s1 + $0xdc] sm:$0xf]
    %v88 = vld [vmem:[%s1 + $0xe0] sm:$0xf]
    %v89 = vld [vmem:[%s1 + $0xe4] sm:$0xf]
    %v90 = vld [vmem:[%s1 + $0xe8] sm:$0xf]
    %v91 = vld [vmem:[%s1 + $0xec] sm:$0xf]
    %v92 = vld [vmem:[%s1 + $0xf0] sm:$0xf]
    %v93 = vld [vmem:[%s1 + $0xf4] sm:$0xf]
    %v94 = vld [vmem:[%s1 + $0xf8] sm:$0xf]
    %v95 = vld [vmem:[%s1 + $0xfc] sm:$0xf]
    %v96 = vld [vmem:[%s1 + $0x100] sm:$0xf]
    %v97 = vld [vmem:[%s1 + $0x104] sm:$0xf]
    %v98 = vld [vmem:[%s1 + $0x108] sm:$0xf]
    %v99 = vld [vmem:[%s1 + $0x10c] sm:$0xf]
    %v100 = vld [vmem:[%s1 + $0x110] sm:$0xf]
    %v101 = vld [vmem:[%s1 + $0x114] sm:$0xf]
    %v102 = vld [vmem:[%s1 + $0x118] sm:$0xf]
    %v103 = vld [vmem:[%s1 + $0x11c] sm:$0xf]
    %v104 = vld [vmem:[%s1 + $0x120] sm:$0xf]
    %v105 = vld [vmem:[%s1 + $0x124] sm:$0xf]
    %v106 = vld [vmem:[%s1 + $0x128] sm:$0xf]
    %v107 = vld [vmem:[%s1 + $0x12c] sm:$0xf]
    %v108 = vld [vmem:[%s1 + $0x130] sm:$0xf]
    %v109 = vld [vmem:[%s1 + $0x134] sm:$0xf]
    %v110 = vld [vmem:[%s1 + $0x138] sm:$0xf]
    %v111 = vld [vmem:[%s1 + $0x13c] sm:$0xf]
    %v112 = vld [vmem:[%s1 + $0x140] sm:$0xf]
    %v113 = vld [vmem:[%s1 + $0x144] sm:$0xf]
    %v114 = vld [vmem:[%s1 + $0x148] sm:$0xf]
    %v115 = vld [vmem:[%s1 + $0x14c] sm:$0xf]
    %v116 = vld [vmem:[%s1 + $0x150] sm:$0xf]
    %v117 = vld [vmem:[%s1 + $0x154] sm:$0xf]
    %v118 = vld [vmem:[%s1 + $0x158] sm:$0xf]
    %v119 = vld [vmem:[%s1 + $0x15c] sm:$0xf]
    %v120 = vld [vmem:[%s1 + $0x160] sm:$0xf]
    %v121 = vld [vmem:[%s1 + $0x164] sm:$0xf]
    %v122 = vld [vmem:[%s1 + $0x168] sm:$0xf]
    %v123 = vld [vmem:[%s1 + $0x16c] sm:$0xf]
    %v124 = vld [vmem:[%s1 + $0x170] sm:$0xf]
    %v125 = vld [vmem:[%s1 + $0x174] sm:$0xf]
    %v126 = vld [vmem:[%s1 + $0x178] sm:$0xf]
    %v127 = vld [vmem:[%s1 + $0x17c] sm:$0xf]
    %v128 = vld [vmem:[%s1 + $0x180] sm:$0xf]
    %v129 = vld [vmem:[%s1 + $0x184] sm:$0xf]
    %v130 = vld [vmem:[%s1 + $0x188] sm:$0xf]
    %v131 = vld [vmem:[%s1 + $0x18c] sm:$0xf]
    %v132 = vld [vmem:[%s1 + $0x190] sm:$0xf]
    %v133 = vld [vmem:[%s1 + $0x194] sm:$0xf]
    %v134 = vld [vmem:[%s1 + $0x198] sm:$0xf]
    %v135 = vld [vmem:[%s1 + $0x19c] sm:$0xf]
    %v136 = vld [vmem:[%s1 + $0x1a0] sm:$0xf]
    %v137 = vld [vmem:[%s1 + $0x1a4] sm:$0xf]
    %v138 = vld [vmem:[%s1 + $0x1a8] sm:$0xf]
    %v139 = vld [vmem:[%s1 + $0x1ac] sm:$0xf]
    %v140 = vld [vmem:[%s1 + $0x1b0] sm:$0xf]
    %v141 = vld [vmem:[%s1 + $0x1b4] sm:$0xf]
    %v142 = vld [vmem:[%s1 + $0x1b8] sm:$0xf]
    %v143 = vld [vmem:[%s1 + $0x1bc] sm:$0xf]
    %v144 = vld [vmem:[%s1 + $0x1c0] sm:$0xf]
    %v145 = vld [vmem:[%s1 + $0x1c4] sm:$0xf]
    %v146 = vld [vmem:[%s1 + $0x1c8] sm:$0xf]
    %v147 = vld [vmem:[%s1 + $0x1cc] sm:$0xf]
    %v148 = vld [vmem:[%s1 + $0x1d0] sm:$0xf]
    %v149 = vld [vmem:[%s1 + $0x1d4] sm:$0xf]
    %v150 = vld [vmem:[%s1 + $0x1d8] sm:$0xf]
    %v151 = vld [vmem:[%s1 + $0x1dc] sm:$0xf]
    %v152 = vld [vmem:[%s1 + $0x1e0] sm:$0xf]
    %v153 = vld [vmem:[%s1 + $0x1e4] sm:$0xf]
    %v154 = vld [vmem:[%s1 + $0x1e8] sm:$0xf]
    %v155 = vld [vmem:[%s1 + $0x1ec] sm:$0xf]
    %v156 = vld [vmem:[%s1 + $0x1f0] sm:$0xf]
    %v157 = vld [vmem:[%s1 + $0x1f4] sm:$0xf]
    %v158 = vld [vmem:[%s1 + $0x1f8] sm:$0xf]
    %v159 = vld [vmem:[%s1 + $0x1fc] sm:$0xf]
    %v160 = vld [vmem:[%s1 + $0x200] sm:$0xf]
    %v161 = vld [vmem:[%s1 + $0x204] sm:$0xf]
    %v162 = vld [vmem:[%s1 + $0x208] sm:$0xf]
    %v163 = vld [vmem:[%s1 + $0x20c] sm:$0xf]
    %v164 = vld [vmem:[%s1 + $0x210] sm:$0xf]
    %v165 = vld [vmem:[%s1 + $0x214] sm:$0xf]
    %v166 = vld [vmem:[%s1 + $0x218] sm:$0xf]
    %v167 = vld [vmem:[%s1 + $0x21c] sm:$0xf]
    %v168 = vld [vmem:[%s1 + $0x220] sm:$0xf]
    %v169 = vld [vmem:[%s1 + $0x224] sm:$0xf]
    %v170 = vld [vmem:[%s1 + $0x228] sm:$0xf]
    %v171 = vld [vmem:[%s1 + $0x22c] sm:$0xf]
    %v172 = vld [vmem:[%s1 + $0x230] sm:$0xf]
    %v173 = vld [vmem:[%s1 + $0x234] sm:$0xf]
    %v174 = vld [vmem:[%s1 + $0x238] sm:$0xf]
    %v175 = vld [vmem:[%s1 + $0x23c] sm:$0xf]
    %v176 = vld [vmem:[%s1 + $0x240] sm:$0xf]
    %v177 = vld [vmem:[%s1 + $0x244] sm:$0xf]
    %v178 = vld [vmem:[%s1 + $0x248] sm:$0xf]
    %v179 = vld [vmem:[%s1 + $0x24c] sm:$0xf]
    %v180 = vld [vmem:[%s1 + $0x250] sm:$0xf]
    %v181 = vld [vmem:[%s1 + $0x254] sm:$0xf]
    %v182 = vld [vmem:[%s1 + $0x258] sm:$0xf]
    %v183 = vld [vmem:[%s1 + $0x25c] sm:$0xf]
    %v184 = vld [vmem:[%s1 + $0x260] sm:$0xf]
    %v185 = vld [vmem:[%s1 + $0x264] sm:$0xf]
    %v186 = vld [vmem:[%s1 + $0x268] sm:$0xf]
    %v187 = vld [vmem:[%s1 + $0x26c] sm:$0xf]
    %v188 = vld [vmem:[%s1 + $0x270] sm:$0xf]
    %v189 = vld [vmem:[%s1 + $0x274] sm:$0xf]
    %v190 = vld [vmem:[%s1 + $0x278] sm:$0xf]
    %v191 = vld [vmem:[%s1 + $0x27c] sm:$0xf]
    %v192 = vld [vmem:[%s1 + $0x280] sm:$0xf]
    %v193 = vld [vmem:[%s1 + $0x284] sm:$0xf]
    %v194 = vld [vmem:[%s1 + $0x288] sm:$0xf]
    %v195 = vld [vmem:[%s1 + $0x28c] sm:$0xf]
    %v196 = vld [vmem:[%s1 + $0x290] sm:$0xf]
    %v197 = vld [vmem:[%s1 + $0x294] sm:$0xf]
    %v198 = vld [vmem:[%s1 + $0x298] sm:$0xf]
    %v199 = vld [vmem:[%s1 + $0x29c] sm:$0xf]
    %v200 = vld [vmem:[%s1 + $0x2a0] sm:$0xf]
    %v201 = vld [vmem:[%s1 + $0x2a4] sm:$0xf]
    %v202 = vld [vmem:[%s1 + $0x2a8] sm:$0xf]
    %v203 = vld [vmem:[%s1 + $0x2ac] sm:$0xf]
    %v204 = vld [vmem:[%s1 + $0x2b0] sm:$0xf]
    %v205 = vld [vmem:[%s1 + $0x2b4] sm:$0xf]
    %v206 = vld [vmem:[%s1 + $0x2b8] sm:$0xf]
    %v207 = vld [vmem:[%s1 + $0x2bc] sm:$0xf]
    %v208 = vld [vmem:[%s1 + $0x2c0] sm:$0xf]
    %v209 = vld [vmem:[%s1 + $0x2c4] sm:$0xf]
    %v210 = vld [vmem:[%s1 + $0x2c8] sm:$0xf]
    %v211 = vld [vmem:[%s1 + $0x2cc] sm:$0xf]
    %v212 = vld [vmem:[%s1 + $0x2d0] sm:$0xf]
    %v213 = vld [vmem:[%s1 + $0x2d4] sm:$0xf]
    %v214 = vld [vmem:[%s1 + $0x2d8] sm:$0xf]
    %v215 = vld [vmem:[%s1 + $0x2dc] sm:$0xf]
    %v216 = vld [vmem:[%s1 + $0x2e0] sm:$0xf]
    %v217 = vld [vmem:[%s1 + $0x2e4] sm:$0xf]
    %v218 = vld [vmem:[%s1 + $0x2e8] sm:$0xf]
    %v219 = vld [vmem:[%s1 + $0x2ec] sm:$0xf]
    %v220 = vld [vmem:[%s1 + $0x2f0] sm:$0xf]
    %v221 = vld [vmem:[%s1 + $0x2f4] sm:$0xf]
    %v222 = vld [vmem:[%s1 + $0x2f8] sm:$0xf]
    %v223 = vld [vmem:[%s1 + $0x2fc] sm:$0xf]
    %v224 = vld [vmem:[%s1 + $0x300] sm:$0xf]
    %v225 = vld [vmem:[%s1 + $0x304] sm:$0xf]
    %v226 = vld [vmem:[%s1 + $0x308] sm:$0xf]
    %v227 = vld [vmem:[%s1 + $0x30c] sm:$0xf]
    %v228 = vld [vmem:[%s1 + $0x310] sm:$0xf]
    %v229 = vld [vmem:[%s1 + $0x314] sm:$0xf]
    %v230 = vld [vmem:[%s1 + $0x318] sm:$0xf]
    %v231 = vld [vmem:[%s1 + $0x31c] sm:$0xf]
    %v232 = vld [vmem:[%s1 + $0x320] sm:$0xf]
    %v233 = vld [vmem:[%s1 + $0x324] sm:$0xf]
    %v234 = vld [vmem:[%s1 + $0x328] sm:$0xf]
    %v235 = vld [vmem:[%s1 + $0x32c] sm:$0xf]
    %v236 = vld [vmem:[%s1 + $0x330] sm:$0xf]
    %v237 = vld [vmem:[%s1 + $0x334] sm:$0xf]
    %v238 = vld [vmem:[%s1 + $0x338] sm:$0xf]
    %v239 = vld [vmem:[%s1 + $0x33c] sm:$0xf]
    %v240 = vld [vmem:[%s1 + $0x340] sm:$0xf]
    %v241 = vld [vmem:[%s1 + $0x344] sm:$0xf]
    %v242 = vld [vmem:[%s1 + $0x348] sm:$0xf]
    %v243 = vld [vmem:[%s1 + $0x34c] sm:$0xf]
    %v244 = vld [vmem:[%s1 + $0x350] sm:$0xf]
    %v245 = vld [vmem:[%s1 + $0x354] sm:$0xf]
    %v246 = vld [vmem:[%s1 + $0x358] sm:$0xf]
    %v247 = vld [vmem:[%s1 + $0x35c] sm:$0xf]
    %v248 = vld [vmem:[%s1 + $0x360] sm:$0xf]
    %v249 = vld [vmem:[%s1 + $0x364] sm:$0xf]
    %v250 = vld [vmem:[%s1 + $0x368] sm:$0xf]
    %v251 = vld [vmem:[%s1 + $0x36c] sm:$0xf]
    %v252 = vld [vmem:[%s1 + $0x370] sm:$0xf]
    %v253 = vld [vmem:[%s1 + $0x374] sm:$0xf]
    %v254 = vld [vmem:[%s1 + $0x378] sm:$0xf]
    %v255 = vld [vmem:[%s1 + $0x37c] sm:$0xf]
    %v256 = vld [vmem:[%s1 + $0x380] sm:$0xf]
    %v257 = vld [vmem:[%s1 + $0x384] sm:$0xf]
    %v258 = vld [vmem:[%s1 + $0x388] sm:$0xf]
    %v259 = vld [vmem:[%s1 + $0x38c] sm:$0xf]
    %v260 = vld [vmem:[%s1 + $0x390] sm:$0xf]
    %v261 = vld [vmem:[%s1 + $0x394] sm:$0xf]
    %v262 = vld [vmem:[%s1 + $0x398] sm:$0xf]
    %v263 = vld [vmem:[%s1 + $0x39c] sm:$0xf]
    %v264 = vld [vmem:[%s1 + $0x3a0] sm:$0xf]
    %v265 = vld [vmem:[%s1 + $0x3a4] sm:$0xf]
    %v266 = vld [vmem:[%s1 + $0x3a8] sm:$0xf]
    %v267 = vld [vmem:[%s1 + $0x3ac] sm:$0xf]
    %v268 = vld [vmem:[%s1 + $0x3b0] sm:$0xf]
    %v269 = vld [vmem:[%s1 + $0x3b4] sm:$0xf]
    %v270 = vld [vmem:[%s1 + $0x3b8] sm:$0xf]
    %v271 = vld [vmem:[%s1 + $0x3bc] sm:$0xf]
    %v272 = vld [vmem:[%s1 + $0x3c0] sm:$0xf]
    %v273 = vld [vmem:[%s1 + $0x3c4] sm:$0xf]
    %v274 = vld [vmem:[%s1 + $0x3c8] sm:$0xf]
    %v275 = vld [vmem:[%s1 + $0x3cc] sm:$0xf]
    %v276 = vld [vmem:[%s1 + $0x3d0] sm:$0xf]
    %v277 = vld [vmem:[%s1 + $0x3d4] sm:$0xf]
    %v278 = vld [vmem:[%s1 + $0x3d8] sm:$0xf]
    %v279 = vld [vmem:[%s1 + $0x3dc] sm:$0xf]
    %v280 = vld [vmem:[%s1 + $0x3e0] sm:$0xf]
    %v281 = vld [vmem:[%s1 + $0x3e4] sm:$0xf]
    %v282 = vld [vmem:[%s1 + $0x3e8] sm:$0xf]
    %v283 = vld [vmem:[%s1 + $0x3ec] sm:$0xf]
    %v284 = vld [vmem:[%s1 + $0x3f0] sm:$0xf]
    %v285 = vld [vmem:[%s1 + $0x3f4] sm:$0xf]
    %v286 = vld [vmem:[%s1 + $0x3f8] sm:$0xf]
    %v287 = vld [vmem:[%s1 + $0x3fc] sm:$0xf]
    %v288 = vld [vmem:[%s1 + $0x400] sm:$0xf]
    %v289 = vld [vmem:[%s1 + $0x404] sm:$0xf]
    %v290 = vld [vmem:[%s1 + $0x408] sm:$0xf]
    %v291 = vld [vmem:[%s1 + $0x40c] sm:$0xf]
    %v292 = vld [vmem:[%s1 + $0x410] sm:$0xf]
    %v293 = vld [vmem:[%s1 + $0x414] sm:$0xf]
    %v294 = vld [vmem:[%s1 + $0x418] sm:$0xf]
    %v295 = vld [vmem:[%s1 + $0x41c] sm:$0xf]
    %v296 = vld [vmem:[%s1 + $0x420] sm:$0xf]
    %v297 = vld [vmem:[%s1 + $0x424] sm:$0xf]
    %v298 = vld [vmem:[%s1 + $0x428] sm:$0xf]
    %v299 = vld [vmem:[%s1 + $0x42c] sm:$0xf]
    %v300 = vld [vmem:[%s1 + $0x430] sm:$0xf]
    %v301 = vld [vmem:[%s1 + $0x434] sm:$0xf]
    %v302 = vld [vmem:[%s1 + $0x438] sm:$0xf]
    %v303 = vld [vmem:[%s1 + $0x43c] sm:$0xf]
    %v304 = vld [vmem:[%s1 + $0x440] sm:$0xf]
    %v305 = vld [vmem:[%s1 + $0x444] sm:$0xf]
    %v306 = vld [vmem:[%s1 + $0x448] sm:$0xf]
    %v307 = vld [vmem:[%s1 + $0x44c] sm:$0xf]
    %v308 = vld [vmem:[%s1 + $0x450] sm:$0xf]
    %v309 = vld [vmem:[%s1 + $0x454] sm:$0xf]
    %v310 = vld [vmem:[%s1 + $0x458] sm:$0xf]
    %v311 = vld [vmem:[%s1 + $0x45c] sm:$0xf]
    %v312 = vld [vmem:[%s1 + $0x460] sm:$0xf]
    %v313 = vld [vmem:[%s1 + $0x464] sm:$0xf]
    %v314 = vld [vmem:[%s1 + $0x468] sm:$0xf]
    %v315 = vld [vmem:[%s1 + $0x46c] sm:$0xf]
    %v316 = vld [vmem:[%s1 + $0x470] sm:$0xf]
    %v317 = vld [vmem:[%s1 + $0x474] sm:$0xf]
    %v318 = vld [vmem:[%s1 + $0x478] sm:$0xf]
    %v319 = vld [vmem:[%s1 + $0x47c] sm:$0xf]
    %v320 = vld [vmem:[%s1 + $0x480] sm:$0xf]
    %v321 = vld [vmem:[%s1 + $0x484] sm:$0xf]
    %v322 = vld [vmem:[%s1 + $0x488] sm:$0xf]
    %v323 = vld [vmem:[%s1 + $0x48c] sm:$0xf]
    %v324 = vld [vmem:[%s1 + $0x490] sm:$0xf]
    %v325 = vld [vmem:[%s1 + $0x494] sm:$0xf]
    %v326 = vld [vmem:[%s1 + $0x498] sm:$0xf]
    %v327 = vld [vmem:[%s1 + $0x49c] sm:$0xf]
    %v328 = vld [vmem:[%s1 + $0x4a0] sm:$0xf]
    %v329 = vld [vmem:[%s1 + $0x4a4] sm:$0xf]
    %v330 = vld [vmem:[%s1 + $0x4a8] sm:$0xf]
    %v331 = vld [vmem:[%s1 + $0x4ac] sm:$0xf]
    %v332 = vld [vmem:[%s1 + $0x4b0] sm:$0xf]
    %v333 = vld [vmem:[%s1 + $0x4b4] sm:$0xf]
    %v334 = vld [vmem:[%s1 + $0x4b8] sm:$0xf]
    %v335 = vld [vmem:[%s1 + $0x4bc] sm:$0xf]
    %v336 = vld [vmem:[%s1 + $0x4c0] sm:$0xf]
    %v337 = vld [vmem:[%s1 + $0x4c4] sm:$0xf]
    %v338 = vld [vmem:[%s1 + $0x4c8] sm:$0xf]
    %v339 = vld [vmem:[%s1 + $0x4cc] sm:$0xf]
    %v340 = vld [vmem:[%s1 + $0x4d0] sm:$0xf]
    %v341 = vld [vmem:[%s1 + $0x4d4] sm:$0xf]
    %v342 = vld [vmem:[%s1 + $0x4d8] sm:$0xf]
    %v343 = vld [vmem:[%s1 + $0x4dc] sm:$0xf]
    %v344 = vld [vmem:[%s1 + $0x4e0] sm:$0xf]
    %v345 = vld [vmem:[%s1 + $0x4e4] sm:$0xf]
    %v346 = vld [vmem:[%s1 + $0x4e8] sm:$0xf]
    %v347 = vld [vmem:[%s1 + $0x4ec] sm:$0xf]
    %v348 = vld [vmem:[%s1 + $0x4f0] sm:$0xf]
    %v349 = vld [vmem:[%s1 + $0x4f4] sm:$0xf]
    %v350 = vld [vmem:[%s1 + $0x4f8] sm:$0xf]
    %v351 = vld [vmem:[%s1 + $0x4fc] sm:$0xf]
    %v352 = vld [vmem:[%s1 + $0x500] sm:$0xf]
    %v353 = vld [vmem:[%s1 + $0x504] sm:$0xf]
    %v354 = vld [vmem:[%s1 + $0x508] sm:$0xf]
    %v355 = vld [vmem:[%s1 + $0x50c] sm:$0xf]
    %v356 = vld [vmem:[%s1 + $0x510] sm:$0xf]
    %v357 = vld [vmem:[%s1 + $0x514] sm:$0xf]
    %v358 = vld [vmem:[%s1 + $0x518] sm:$0xf]
    %v359 = vld [vmem:[%s1 + $0x51c] sm:$0xf]
    %v360 = vld [vmem:[%s1 + $0x520] sm:$0xf]
    %v361 = vld [vmem:[%s1 + $0x524] sm:$0xf]
    %v362 = vld [vmem:[%s1 + $0x528] sm:$0xf]
    %v363 = vld [vmem:[%s1 + $0x52c] sm:$0xf]
    %v364 = vld [vmem:[%s1 + $0x530] sm:$0xf]
    %v365 = vld [vmem:[%s1 + $0x534] sm:$0xf]
    %v366 = vld [vmem:[%s1 + $0x538] sm:$0xf]
    %v367 = vld [vmem:[%s1 + $0x53c] sm:$0xf]
    %v368 = vld [vmem:[%s1 + $0x540] sm:$0xf]
    %v369 = vld [vmem:[%s1 + $0x544] sm:$0xf]
    %v370 = vld [vmem:[%s1 + $0x548] sm:$0xf]
    %v371 = vld [vmem:[%s1 + $0x54c] sm:$0xf]
    %v372 = vld [vmem:[%s1 + $0x550] sm:$0xf]
    %v373 = vld [vmem:[%s1 + $0x554] sm:$0xf]
    %v374 = vld [vmem:[%s1 + $0x558] sm:$0xf]
    %v375 = vld [vmem:[%s1 + $0x55c] sm:$0xf]
    %v376 = vld [vmem:[%s1 + $0x560] sm:$0xf]
    %v377 = vld [vmem:[%s1 + $0x564] sm:$0xf]
    %v378 = vld [vmem:[%s1 + $0x568] sm:$0xf]
    %v379 = vld [vmem:[%s1 + $0x56c] sm:$0xf]
    %v380 = vld [vmem:[%s1 + $0x570] sm:$0xf]
    %v381 = vld [vmem:[%s1 + $0x574] sm:$0xf]
    %v382 = vld [vmem:[%s1 + $0x578] sm:$0xf]
    %v383 = vld [vmem:[%s1 + $0x57c] sm:$0xf]
    %v384 = vld [vmem:[%s1 + $0x580] sm:$0xf]
    %v385 = vld [vmem:[%s1 + $0x584] sm:$0xf]
    %v386 = vld [vmem:[%s1 + $0x588] sm:$0xf]
    %v387 = vld [vmem:[%s1 + $0x58c] sm:$0xf]
    %v388 = vld [vmem:[%s1 + $0x590] sm:$0xf]
    %v389 = vld [vmem:[%s1 + $0x594] sm:$0xf]
    %v390 = vld [vmem:[%s1 + $0x598] sm:$0xf]
    %v391 = vld [vmem:[%s1 + $0x59c] sm:$0xf]
    %v392 = vld [vmem:[%s1 + $0x5a0] sm:$0xf]
    %v393 = vld [vmem:[%s1 + $0x5a4] sm:$0xf]
    %v394 = vld [vmem:[%s1 + $0x5a8] sm:$0xf]
    %v395 = vld [vmem:[%s1 + $0x5ac] sm:$0xf]
    %v396 = vld [vmem:[%s1 + $0x5b0] sm:$0xf]
    %v397 = vld [vmem:[%s1 + $0x5b4] sm:$0xf]
    %v398 = vld [vmem:[%s1 + $0x5b8] sm:$0xf]
    %v399 = vld [vmem:[%s1 + $0x5bc] sm:$0xf]
    %v400 = vld [vmem:[%s1 + $0x5c0] sm:$0xf]
    %v401 = vld [vmem:[%s1 + $0x5c4] sm:$0xf]
    %v402 = vld [vmem:[%s1 + $0x5c8] sm:$0xf]
    %v403 = vld [vmem:[%s1 + $0x5cc] sm:$0xf]
    %v404 = vld [vmem:[%s1 + $0x5d0] sm:$0xf]
    %v405 = vld [vmem:[%s1 + $0x5d4] sm:$0xf]
    %v406 = vld [vmem:[%s1 + $0x5d8] sm:$0xf]
    %v407 = vld [vmem:[%s1 + $0x5dc] sm:$0xf]
    %v408 = vld [vmem:[%s1 + $0x5e0] sm:$0xf]
    %v409 = vld [vmem:[%s1 + $0x5e4] sm:$0xf]
    %v410 = vld [vmem:[%s1 + $0x5e8] sm:$0xf]
    %v411 = vld [vmem:[%s1 + $0x5ec] sm:$0xf]
    %v412 = vld [vmem:[%s1 + $0x5f0] sm:$0xf]
    %v413 = vld [vmem:[%s1 + $0x5f4] sm:$0xf]
    %v414 = vld [vmem:[%s1 + $0x5f8] sm:$0xf]
    %v415 = vld [vmem:[%s1 + $0x5fc] sm:$0xf]
    %v416 = vld [vmem:[%s1 + $0x600] sm:$0xf]
    %v417 = vld [vmem:[%s1 + $0x604] sm:$0xf]
    %v418 = vld [vmem:[%s1 + $0x608] sm:$0xf]
    %v419 = vld [vmem:[%s1 + $0x60c] sm:$0xf]
    %v420 = vld [vmem:[%s1 + $0x610] sm:$0xf]
    %v421 = vld [vmem:[%s1 + $0x614] sm:$0xf]
    %v422 = vld [vmem:[%s1 + $0x618] sm:$0xf]
    %v423 = vld [vmem:[%s1 + $0x61c] sm:$0xf]
    %v424 = vld [vmem:[%s1 + $0x620] sm:$0xf]
    %v425 = vld [vmem:[%s1 + $0x624] sm:$0xf]
    %v426 = vld [vmem:[%s1 + $0x628] sm:$0xf]
    %v427 = vld [vmem:[%s1 + $0x62c] sm:$0xf]
    %v428 = vld [vmem:[%s1 + $0x630] sm:$0xf]
    %v429 = vld [vmem:[%s1 + $0x634] sm:$0xf]
    %v430 = vld [vmem:[%s1 + $0x638] sm:$0xf]
    %v431 = vld [vmem:[%s1 + $0x63c] sm:$0xf]
    %v432 = vld [vmem:[%s2] sm:$0x1]
    %v434 = vlaneseq
    %v435 = vshrl.u32 %v434, 7
    %v436 = vsub.s32 0, %v435
    %v437 = vrot.slane %v432, %v436
    %v443 = vcombine.high %v28, %v28
    %v445 = vunpack.c.l.s4 1966171168
    %v446 = vunpack.c.0.s8 %v445
    %v447 = vlaneseq
    %v448 = vshrl.u32 %v447, 7
    %v449 = vsub.s32 %v446, %v448
    %v450 = vrot.slane %v28, %v449
    %v452 = vunpack.c.l.s4 1966171168
    %v453 = vunpack.c.0.s8 %v452
    %v454 = vlaneseq
    %v455 = vshrl.u32 %v454, 7
    %v456 = vsub.s32 %v453, %v455
    %v457 = vrot.slane %v443, %v456
    %v458 = vcombine.high %v450, %v450
    %v459 = vcombine.high %v457, %v457
    %v461 = vunpack.c.l.s4 1966171168
    %v462 = vunpack.c.0.s8 %v461
    %v463 = vlaneseq
    %v464 = vshrl.u32 %v463, 7
    %v465 = vsub.s32 %v462, %v464
    %v466 = vrot.slane %v450, %v465
    %v468 = vunpack.c.l.s4 1966171168
    %v469 = vunpack.c.0.s8 %v468
    %v470 = vlaneseq
    %v471 = vshrl.u32 %v470, 7
    %v472 = vsub.s32 %v469, %v471
    %v473 = vrot.slane %v457, %v472
    %v475 = vunpack.c.l.s4 1966171168
    %v476 = vunpack.c.0.s8 %v475
    %v477 = vlaneseq
    %v478 = vshrl.u32 %v477, 7
    %v479 = vsub.s32 %v476, %v478
    %v480 = vrot.slane %v458, %v479
    %v482 = vunpack.c.l.s4 1966171168
    %v483 = vunpack.c.0.s8 %v482
    %v484 = vlaneseq
    %v485 = vshrl.u32 %v484, 7
    %v486 = vsub.s32 %v483, %v485
    %v487 = vrot.slane %v459, %v486
    %v488 = vcombine.high %v466, %v466
    %v489 = vcombine.high %v473, %v473
    %v490 = vcombine.high %v480, %v480
    %v491 = vcombine.high %v487, %v487
    %v492 = vcombine.high %v29, %v29
    %v494 = vunpack.c.l.s4 1966171168
    %v495 = vunpack.c.0.s8 %v494
    %v496 = vlaneseq
    %v497 = vshrl.u32 %v496, 7
    %v498 = vsub.s32 %v495, %v497
    %v499 = vrot.slane %v29, %v498
    %v501 = vunpack.c.l.s4 1966171168
    %v502 = vunpack.c.0.s8 %v501
    %v503 = vlaneseq
    %v504 = vshrl.u32 %v503, 7
    %v505 = vsub.s32 %v502, %v504
    %v506 = vrot.slane %v492, %v505
    %v507 = vcombine.high %v499, %v499
    %v508 = vcombine.high %v506, %v506
    %v510 = vunpack.c.l.s4 1966171168
    %v511 = vunpack.c.0.s8 %v510
    %v512 = vlaneseq
    %v513 = vshrl.u32 %v512, 7
    %v514 = vsub.s32 %v511, %v513
    %v515 = vrot.slane %v499, %v514
    %v517 = vunpack.c.l.s4 1966171168
    %v518 = vunpack.c.0.s8 %v517
    %v519 = vlaneseq
    %v520 = vshrl.u32 %v519, 7
    %v521 = vsub.s32 %v518, %v520
    %v522 = vrot.slane %v506, %v521
    %v524 = vunpack.c.l.s4 1966171168
    %v525 = vunpack.c.0.s8 %v524
    %v526 = vlaneseq
    %v527 = vshrl.u32 %v526, 7
    %v528 = vsub.s32 %v525, %v527
    %v529 = vrot.slane %v507, %v528
    %v531 = vunpack.c.l.s4 1966171168
    %v532 = vunpack.c.0.s8 %v531
    %v533 = vlaneseq
    %v534 = vshrl.u32 %v533, 7
    %v535 = vsub.s32 %v532, %v534
    %v536 = vrot.slane %v508, %v535
    %v537 = vcombine.high %v515, %v515
    %v538 = vcombine.high %v522, %v522
    %v539 = vcombine.high %v529, %v529
    %v540 = vcombine.high %v536, %v536
    %v541 = vcombine.high %v30, %v30
    %v543 = vunpack.c.l.s4 1966171168
    %v544 = vunpack.c.0.s8 %v543
    %v545 = vlaneseq
    %v546 = vshrl.u32 %v545, 7
    %v547 = vsub.s32 %v544, %v546
    %v548 = vrot.slane %v30, %v547
    %v550 = vunpack.c.l.s4 1966171168
    %v551 = vunpack.c.0.s8 %v550
    %v552 = vlaneseq
    %v553 = vshrl.u32 %v552, 7
    %v554 = vsub.s32 %v551, %v553
    %v555 = vrot.slane %v541, %v554
    %v556 = vcombine.high %v548, %v548
    %v557 = vcombine.high %v555, %v555
    %v559 = vunpack.c.l.s4 1966171168
    %v560 = vunpack.c.0.s8 %v559
    %v561 = vlaneseq
    %v562 = vshrl.u32 %v561, 7
    %v563 = vsub.s32 %v560, %v562
    %v564 = vrot.slane %v548, %v563
    %v566 = vunpack.c.l.s4 1966171168
    %v567 = vunpack.c.0.s8 %v566
    %v568 = vlaneseq
    %v569 = vshrl.u32 %v568, 7
    %v570 = vsub.s32 %v567, %v569
    %v571 = vrot.slane %v555, %v570
    %v573 = vunpack.c.l.s4 1966171168
    %v574 = vunpack.c.0.s8 %v573
    %v575 = vlaneseq
    %v576 = vshrl.u32 %v575, 7
    %v577 = vsub.s32 %v574, %v576
    %v578 = vrot.slane %v556, %v577
    %v580 = vunpack.c.l.s4 1966171168
    %v581 = vunpack.c.0.s8 %v580
    %v582 = vlaneseq
    %v583 = vshrl.u32 %v582, 7
    %v584 = vsub.s32 %v581, %v583
    %v585 = vrot.slane %v557, %v584
    %v586 = vcombine.high %v564, %v564
    %v587 = vcombine.high %v571, %v571
    %v588 = vcombine.high %v578, %v578
    %v589 = vcombine.high %v585, %v585
    %v591 = vunpack.c.l.s4 1966171168
    %v592 = vunpack.c.0.s8 %v591
    %v593 = vlaneseq
    %v594 = vshrl.u32 %v593, 7
    %v595 = vsub.s32 %v592, %v594
    %v596 = vrot.slane %v31, %v595
    %v598 = vunpack.c.l.s4 1966171168
    %v599 = vunpack.c.0.s8 %v598
    %v600 = vlaneseq
    %v601 = vshrl.u32 %v600, 7
    %v602 = vsub.s32 %v599, %v601
    %v603 = vrot.slane %v596, %v602
    %v1029 = vunpack.c.l.b16 %v32
    %v1030 = vunpack.c.l.b16 %v33
    %v1031 = vunpack.c.l.b16 %v34
    %v1032 = vunpack.c.l.b16 %v35
    %v1033 = vunpack.c.l.b16 %v36
    %v1034 = vunpack.c.l.b16 %v37
    %v1035 = vunpack.c.l.b16 %v38
    %v1036 = vunpack.c.l.b16 %v39
    %v1037 = vunpack.c.l.b16 %v40
    %v1038 = vunpack.c.l.b16 %v41
    %v1039 = vunpack.c.l.b16 %v42
    %v1040 = vunpack.c.l.b16 %v43
    %v1041 = vunpack.c.l.b16 %v44
    %v1042 = vunpack.c.l.b16 %v45
    %v1043 = vunpack.c.l.b16 %v46
    %v1044 = vunpack.c.l.b16 %v47
    %v1045 = vunpack.c.l.b16 %v48
    %v1046 = vunpack.c.l.b16 %v49
    %v1047 = vunpack.c.l.b16 %v50
    %v1048 = vunpack.c.l.b16 %v51
    %v1049 = vunpack.c.l.b16 %v52
    %v1050 = vunpack.c.l.b16 %v53
    %v1051 = vunpack.c.l.b16 %v54
    %v1052 = vunpack.c.l.b16 %v55
    %v1053 = vunpack.c.l.b16 %v56
    %v1054 = vunpack.c.l.b16 %v57
    %v1055 = vunpack.c.l.b16 %v58
    %v1056 = vunpack.c.l.b16 %v59
    %v1057 = vunpack.c.l.b16 %v60
    %v1058 = vunpack.c.l.b16 %v61
    %v1059 = vunpack.c.l.b16 %v62
    %v1060 = vunpack.c.l.b16 %v63
    %v1061 = vunpack.c.l.b16 %v64
    %v1062 = vunpack.c.l.b16 %v65
    %v1063 = vunpack.c.l.b16 %v66
    %v1064 = vunpack.c.l.b16 %v67
    %v1065 = vunpack.c.l.b16 %v68
    %v1066 = vunpack.c.l.b16 %v69
    %v1067 = vunpack.c.l.b16 %v70
    %v1068 = vunpack.c.l.b16 %v71
    %v1069 = vunpack.c.l.b16 %v72
    %v1070 = vunpack.c.l.b16 %v73
    %v1071 = vunpack.c.l.b16 %v74
    %v1072 = vunpack.c.l.b16 %v75
    %v1073 = vunpack.c.l.b16 %v76
    %v1074 = vunpack.c.l.b16 %v77
    %v1075 = vunpack.c.l.b16 %v78
    %v1076 = vunpack.c.l.b16 %v79
    %v1077 = vunpack.c.l.b16 %v80
    %v1078 = vunpack.c.l.b16 %v81
    %v1079 = vunpack.c.l.b16 %v82
    %v1080 = vunpack.c.l.b16 %v83
    %v1081 = vunpack.c.l.b16 %v84
    %v1082 = vunpack.c.l.b16 %v85
    %v1083 = vunpack.c.l.b16 %v86
    %v1084 = vunpack.c.l.b16 %v87
    %v1085 = vunpack.c.l.b16 %v88
    %v1086 = vunpack.c.l.b16 %v89
    %v1087 = vunpack.c.l.b16 %v90
    %v1088 = vunpack.c.l.b16 %v91
    %v1089 = vunpack.c.l.b16 %v92
    %v1090 = vunpack.c.l.b16 %v93
    %v1091 = vunpack.c.l.b16 %v94
    %v1092 = vunpack.c.l.b16 %v95
    %v1093 = vunpack.c.l.b16 %v96
    %v1094 = vunpack.c.l.b16 %v97
    %v1095 = vunpack.c.l.b16 %v98
    %v1096 = vunpack.c.l.b16 %v99
    %v1097 = vunpack.c.l.b16 %v100
    %v1098 = vunpack.c.l.b16 %v101
    %v1099 = vunpack.c.l.b16 %v102
    %v1100 = vunpack.c.l.b16 %v103
    %v1101 = vunpack.c.l.b16 %v104
    %v1102 = vunpack.c.l.b16 %v105
    %v1103 = vunpack.c.l.b16 %v106
    %v1104 = vunpack.c.l.b16 %v107
    %v1105 = vunpack.c.l.b16 %v108
    %v1106 = vunpack.c.l.b16 %v109
    %v1107 = vunpack.c.l.b16 %v110
    %v1108 = vunpack.c.l.b16 %v111
    %v1109 = vunpack.c.l.b16 %v112
    %v1110 = vunpack.c.l.b16 %v113
    %v1111 = vunpack.c.l.b16 %v114
    %v1112 = vunpack.c.l.b16 %v115
    %v1113 = vunpack.c.l.b16 %v116
    %v1114 = vunpack.c.l.b16 %v117
    %v1115 = vunpack.c.l.b16 %v118
    %v1116 = vunpack.c.l.b16 %v119
    %v1117 = vunpack.c.l.b16 %v120
    %v1118 = vunpack.c.l.b16 %v121
    %v1119 = vunpack.c.l.b16 %v122
    %v1120 = vunpack.c.l.b16 %v123
    %v1121 = vunpack.c.l.b16 %v124
    %v1122 = vunpack.c.l.b16 %v125
    %v1123 = vunpack.c.l.b16 %v126
    %v1124 = vunpack.c.l.b16 %v127
    %v1125 = vunpack.c.l.b16 %v128
    %v1126 = vunpack.c.l.b16 %v129
    %v1127 = vunpack.c.l.b16 %v130
    %v1128 = vunpack.c.l.b16 %v131
    %v1129 = vunpack.c.l.b16 %v132
    %v1130 = vunpack.c.l.b16 %v133
    %v1131 = vunpack.c.l.b16 %v134
    %v1132 = vunpack.c.l.b16 %v135
    %v1133 = vunpack.c.l.b16 %v136
    %v1134 = vunpack.c.l.b16 %v137
    %v1135 = vunpack.c.l.b16 %v138
    %v1136 = vunpack.c.l.b16 %v139
    %v1137 = vunpack.c.l.b16 %v140
    %v1138 = vunpack.c.l.b16 %v141
    %v1139 = vunpack.c.l.b16 %v142
    %v1140 = vunpack.c.l.b16 %v143
    %v1141 = vunpack.c.l.b16 %v144
    %v1142 = vunpack.c.l.b16 %v145
    %v1143 = vunpack.c.l.b16 %v146
    %v1144 = vunpack.c.l.b16 %v147
    %v1145 = vunpack.c.l.b16 %v148
    %v1146 = vunpack.c.l.b16 %v149
    %v1147 = vunpack.c.l.b16 %v150
    %v1148 = vunpack.c.l.b16 %v151
    %v1149 = vunpack.c.l.b16 %v152
    %v1150 = vunpack.c.l.b16 %v153
    %v1151 = vunpack.c.l.b16 %v154
    %v1152 = vunpack.c.l.b16 %v155
    %v1153 = vunpack.c.l.b16 %v156
    %v1154 = vunpack.c.l.b16 %v157
    %v1155 = vunpack.c.l.b16 %v158
    %v1156 = vunpack.c.l.b16 %v159
    %v1157 = vunpack.c.l.b16 %v160
    %v1158 = vunpack.c.l.b16 %v161
    %v1159 = vunpack.c.l.b16 %v162
    %v1160 = vunpack.c.l.b16 %v163
    %v1161 = vunpack.c.l.b16 %v164
    %v1162 = vunpack.c.l.b16 %v165
    %v1163 = vunpack.c.l.b16 %v166
    %v1164 = vunpack.c.l.b16 %v167
    %v1165 = vunpack.c.l.b16 %v168
    %v1166 = vunpack.c.l.b16 %v169
    %v1167 = vunpack.c.l.b16 %v170
    %v1168 = vunpack.c.l.b16 %v171
    %v1169 = vunpack.c.l.b16 %v172
    %v1170 = vunpack.c.l.b16 %v173
    %v1171 = vunpack.c.l.b16 %v174
    %v1172 = vunpack.c.l.b16 %v175
    %v1173 = vunpack.c.l.b16 %v176
    %v1174 = vunpack.c.l.b16 %v177
    %v1175 = vunpack.c.l.b16 %v178
    %v1176 = vunpack.c.l.b16 %v179
    %v1177 = vunpack.c.l.b16 %v180
    %v1178 = vunpack.c.l.b16 %v181
    %v1179 = vunpack.c.l.b16 %v182
    %v1180 = vunpack.c.l.b16 %v183
    %v1181 = vunpack.c.l.b16 %v184
    %v1182 = vunpack.c.l.b16 %v185
    %v1183 = vunpack.c.l.b16 %v186
    %v1184 = vunpack.c.l.b16 %v187
    %v1185 = vunpack.c.l.b16 %v188
    %v1186 = vunpack.c.l.b16 %v189
    %v1187 = vunpack.c.l.b16 %v190
    %v1188 = vunpack.c.l.b16 %v191
    %v1189 = vunpack.c.l.b16 %v192
    %v1190 = vunpack.c.l.b16 %v193
    %v1191 = vunpack.c.l.b16 %v194
    %v1192 = vunpack.c.l.b16 %v195
    %v1193 = vunpack.c.l.b16 %v196
    %v1194 = vunpack.c.l.b16 %v197
    %v1195 = vunpack.c.l.b16 %v198
    %v1196 = vunpack.c.l.b16 %v199
    %v1197 = vunpack.c.l.b16 %v200
    %v1198 = vunpack.c.l.b16 %v201
    %v1199 = vunpack.c.l.b16 %v202
    %v1200 = vunpack.c.l.b16 %v203
    %v1201 = vunpack.c.l.b16 %v204
    %v1202 = vunpack.c.l.b16 %v205
    %v1203 = vunpack.c.l.b16 %v206
    %v1204 = vunpack.c.l.b16 %v207
    %v1205 = vunpack.c.l.b16 %v208
    %v1206 = vunpack.c.l.b16 %v209
    %v1207 = vunpack.c.l.b16 %v210
    %v1208 = vunpack.c.l.b16 %v211
    %v1209 = vunpack.c.l.b16 %v212
    %v1210 = vunpack.c.l.b16 %v213
    %v1211 = vunpack.c.l.b16 %v214
    %v1212 = vunpack.c.l.b16 %v215
    %v1213 = vunpack.c.l.b16 %v216
    %v1214 = vunpack.c.l.b16 %v217
    %v1215 = vunpack.c.l.b16 %v218
    %v1216 = vunpack.c.l.b16 %v219
    %v1217 = vunpack.c.l.b16 %v220
    %v1218 = vunpack.c.l.b16 %v221
    %v1219 = vunpack.c.l.b16 %v222
    %v1220 = vunpack.c.l.b16 %v223
    %v1221 = vunpack.c.l.b16 %v224
    %v1222 = vunpack.c.l.b16 %v225
    %v1223 = vunpack.c.l.b16 %v226
    %v1224 = vunpack.c.l.b16 %v227
    %v1225 = vunpack.c.l.b16 %v228
    %v1226 = vunpack.c.l.b16 %v229
    %v1227 = vunpack.c.l.b16 %v230
    %v1228 = vunpack.c.l.b16 %v231
    %v1229 = vunpack.c.l.b16 %v232
    %v1230 = vunpack.c.l.b16 %v233
    %v1231 = vunpack.c.l.b16 %v234
    %v1232 = vunpack.c.l.b16 %v235
    %v1233 = vunpack.c.l.b16 %v236
    %v1234 = vunpack.c.l.b16 %v237
    %v1235 = vunpack.c.l.b16 %v238
    %v1236 = vunpack.c.l.b16 %v239
    %v1237 = vunpack.c.l.b16 %v240
    %v1238 = vunpack.c.l.b16 %v241
    %v1239 = vunpack.c.l.b16 %v242
    %v1240 = vunpack.c.l.b16 %v243
    %v1241 = vunpack.c.l.b16 %v244
    %v1242 = vunpack.c.l.b16 %v245
    %v1243 = vunpack.c.l.b16 %v246
    %v1244 = vunpack.c.l.b16 %v247
    %v1245 = vunpack.c.l.b16 %v248
    %v1246 = vunpack.c.l.b16 %v249
    %v1247 = vunpack.c.l.b16 %v250
    %v1248 = vunpack.c.l.b16 %v251
    %v1249 = vunpack.c.l.b16 %v252
    %v1250 = vunpack.c.l.b16 %v253
    %v1251 = vunpack.c.l.b16 %v254
    %v1252 = vunpack.c.l.b16 %v255
    %v1253 = vunpack.c.l.b16 %v256
    %v1254 = vunpack.c.l.b16 %v257
    %v1255 = vunpack.c.l.b16 %v258
    %v1256 = vunpack.c.l.b16 %v259
    %v1257 = vunpack.c.l.b16 %v260
    %v1258 = vunpack.c.l.b16 %v261
    %v1259 = vunpack.c.l.b16 %v262
    %v1260 = vunpack.c.l.b16 %v263
    %v1261 = vunpack.c.l.b16 %v264
    %v1262 = vunpack.c.l.b16 %v265
    %v1263 = vunpack.c.l.b16 %v266
    %v1264 = vunpack.c.l.b16 %v267
    %v1265 = vunpack.c.l.b16 %v268
    %v1266 = vunpack.c.l.b16 %v269
    %v1267 = vunpack.c.l.b16 %v270
    %v1268 = vunpack.c.l.b16 %v271
    %v1269 = vunpack.c.l.b16 %v272
    %v1270 = vunpack.c.l.b16 %v273
    %v1271 = vunpack.c.l.b16 %v274
    %v1272 = vunpack.c.l.b16 %v275
    %v1273 = vunpack.c.l.b16 %v276
    %v1274 = vunpack.c.l.b16 %v277
    %v1275 = vunpack.c.l.b16 %v278
    %v1276 = vunpack.c.l.b16 %v279
    %v1277 = vunpack.c.l.b16 %v280
    %v1278 = vunpack.c.l.b16 %v281
    %v1279 = vunpack.c.l.b16 %v282
    %v1280 = vunpack.c.l.b16 %v283
    %v1281 = vunpack.c.l.b16 %v284
    %v1282 = vunpack.c.l.b16 %v285
    %v1283 = vunpack.c.l.b16 %v286
    %v1284 = vunpack.c.l.b16 %v287
    %v1285 = vunpack.c.l.b16 %v288
    %v1286 = vunpack.c.l.b16 %v289
    %v1287 = vunpack.c.l.b16 %v290
    %v1288 = vunpack.c.l.b16 %v291
    %v1289 = vunpack.c.l.b16 %v292
    %v1290 = vunpack.c.l.b16 %v293
    %v1291 = vunpack.c.l.b16 %v294
    %v1292 = vunpack.c.l.b16 %v295
    %v1293 = vunpack.c.l.b16 %v296
    %v1294 = vunpack.c.l.b16 %v297
    %v1295 = vunpack.c.l.b16 %v298
    %v1296 = vunpack.c.l.b16 %v299
    %v1297 = vunpack.c.l.b16 %v300
    %v1298 = vunpack.c.l.b16 %v301
    %v1299 = vunpack.c.l.b16 %v302
    %v1300 = vunpack.c.l.b16 %v303
    %v1301 = vunpack.c.l.b16 %v304
    %v1302 = vunpack.c.l.b16 %v305
    %v1303 = vunpack.c.l.b16 %v306
    %v1304 = vunpack.c.l.b16 %v307
    %v1305 = vunpack.c.l.b16 %v308
    %v1306 = vunpack.c.l.b16 %v309
    %v1307 = vunpack.c.l.b16 %v310
    %v1308 = vunpack.c.l.b16 %v311
    %v1309 = vunpack.c.l.b16 %v312
    %v1310 = vunpack.c.l.b16 %v313
    %v1311 = vunpack.c.l.b16 %v314
    %v1312 = vunpack.c.l.b16 %v315
    %v1313 = vunpack.c.l.b16 %v316
    %v1314 = vunpack.c.l.b16 %v317
    %v1315 = vunpack.c.l.b16 %v318
    %v1316 = vunpack.c.l.b16 %v319
    %v1317 = vunpack.c.l.b16 %v320
    %v1318 = vunpack.c.l.b16 %v321
    %v1319 = vunpack.c.l.b16 %v322
    %v1320 = vunpack.c.l.b16 %v323
    %v1321 = vunpack.c.l.b16 %v324
    %v1322 = vunpack.c.l.b16 %v325
    %v1323 = vunpack.c.l.b16 %v326
    %v1324 = vunpack.c.l.b16 %v327
    %v1325 = vunpack.c.l.b16 %v328
    %v1326 = vunpack.c.l.b16 %v329
    %v1327 = vunpack.c.l.b16 %v330
    %v1328 = vunpack.c.l.b16 %v331
    %v1329 = vunpack.c.l.b16 %v332
    %v1330 = vunpack.c.l.b16 %v333
    %v1331 = vunpack.c.l.b16 %v334
    %v1332 = vunpack.c.l.b16 %v335
    %v1333 = vunpack.c.l.b16 %v336
    %v1334 = vunpack.c.l.b16 %v337
    %v1335 = vunpack.c.l.b16 %v338
    %v1336 = vunpack.c.l.b16 %v339
    %v1337 = vunpack.c.l.b16 %v340
    %v1338 = vunpack.c.l.b16 %v341
    %v1339 = vunpack.c.l.b16 %v342
    %v1340 = vunpack.c.l.b16 %v343
    %v1341 = vunpack.c.l.b16 %v344
    %v1342 = vunpack.c.l.b16 %v345
    %v1343 = vunpack.c.l.b16 %v346
    %v1344 = vunpack.c.l.b16 %v347
    %v1345 = vunpack.c.l.b16 %v348
    %v1346 = vunpack.c.l.b16 %v349
    %v1347 = vunpack.c.l.b16 %v350
    %v1348 = vunpack.c.l.b16 %v351
    %v1349 = vunpack.c.l.b16 %v352
    %v1350 = vunpack.c.l.b16 %v353
    %v1351 = vunpack.c.l.b16 %v354
    %v1352 = vunpack.c.l.b16 %v355
    %v1353 = vunpack.c.l.b16 %v356
    %v1354 = vunpack.c.l.b16 %v357
    %v1355 = vunpack.c.l.b16 %v358
    %v1356 = vunpack.c.l.b16 %v359
    %v1357 = vunpack.c.l.b16 %v360
    %v1358 = vunpack.c.l.b16 %v361
    %v1359 = vunpack.c.l.b16 %v362
    %v1360 = vunpack.c.l.b16 %v363
    %v1361 = vunpack.c.l.b16 %v364
    %v1362 = vunpack.c.l.b16 %v365
    %v1363 = vunpack.c.l.b16 %v366
    %v1364 = vunpack.c.l.b16 %v367
    %v1365 = vunpack.c.l.b16 %v368
    %v1366 = vunpack.c.l.b16 %v369
    %v1367 = vunpack.c.l.b16 %v370
    %v1368 = vunpack.c.l.b16 %v371
    %v1369 = vunpack.c.l.b16 %v372
    %v1370 = vunpack.c.l.b16 %v373
    %v1371 = vunpack.c.l.b16 %v374
    %v1372 = vunpack.c.l.b16 %v375
    %v1373 = vunpack.c.l.b16 %v376
    %v1374 = vunpack.c.l.b16 %v377
    %v1375 = vunpack.c.l.b16 %v378
    %v1376 = vunpack.c.l.b16 %v379
    %v1377 = vunpack.c.l.b16 %v380
    %v1378 = vunpack.c.l.b16 %v381
    %v1379 = vunpack.c.l.b16 %v382
    %v1380 = vunpack.c.l.b16 %v383
    %v1381 = vunpack.c.l.b16 %v384
    %v1382 = vunpack.c.l.b16 %v385
    %v1383 = vunpack.c.l.b16 %v386
    %v1384 = vunpack.c.l.b16 %v387
    %v1385 = vunpack.c.l.b16 %v388
    %v1386 = vunpack.c.l.b16 %v389
    %v1387 = vunpack.c.l.b16 %v390
    %v1388 = vunpack.c.l.b16 %v391
    %v1389 = vunpack.c.l.b16 %v392
    %v1390 = vunpack.c.l.b16 %v393
    %v1391 = vunpack.c.l.b16 %v394
    %v1392 = vunpack.c.l.b16 %v395
    %v1393 = vunpack.c.l.b16 %v396
    %v1394 = vunpack.c.l.b16 %v397
    %v1395 = vunpack.c.l.b16 %v398
    %v1396 = vunpack.c.l.b16 %v399
    %v1397 = vunpack.c.l.b16 %v400
    %v1398 = vunpack.c.l.b16 %v401
    %v1399 = vunpack.c.l.b16 %v402
    %v1400 = vunpack.c.l.b16 %v403
    %v1401 = vunpack.c.l.b16 %v404
    %v1402 = vunpack.c.l.b16 %v405
    %v1403 = vunpack.c.l.b16 %v406
    %v1404 = vunpack.c.l.b16 %v407
    %v1405 = vunpack.c.l.b16 %v408
    %v1406 = vunpack.c.l.b16 %v409
    %v1407 = vunpack.c.l.b16 %v410
    %v1408 = vunpack.c.l.b16 %v411
    %v1409 = vunpack.c.l.b16 %v412
    %v1410 = vunpack.c.l.b16 %v413
    %v1411 = vunpack.c.l.b16 %v414
    %v1412 = vunpack.c.l.b16 %v415
    %v1413 = vunpack.c.l.b16 %v416
    %v1414 = vunpack.c.l.b16 %v417
    %v1415 = vunpack.c.l.b16 %v418
    %v1416 = vunpack.c.l.b16 %v419
    %v1417 = vunpack.c.l.b16 %v420
    %v1418 = vunpack.c.l.b16 %v421
    %v1419 = vunpack.c.l.b16 %v422
    %v1420 = vunpack.c.l.b16 %v423
    %v1421 = vunpack.c.l.b16 %v424
    %v1422 = vunpack.c.l.b16 %v425
    %v1423 = vunpack.c.l.b16 %v426
    %v1424 = vunpack.c.l.b16 %v427
    %v1425 = vunpack.c.l.b16 %v428
    %v1426 = vunpack.c.l.b16 %v429
    %v1427 = vunpack.c.l.b16 %v430
    %v1428 = vunpack.c.l.b16 %v431
    %v1429 = vpack.c.b16 %v1030, %v1029
    %v1430 = vpack.c.b16 %v1032, %v1031
    %v1431 = vpack.c.b16 %v1034, %v1033
    %v1432 = vpack.c.b16 %v1036, %v1035
    %v1433 = vpack.c.b16 %v1038, %v1037
    %v1434 = vpack.c.b16 %v1040, %v1039
    %v1435 = vpack.c.b16 %v1042, %v1041
    %v1436 = vpack.c.b16 %v1044, %v1043
    %v1437 = vpack.c.b16 %v1046, %v1045
    %v1438 = vpack.c.b16 %v1048, %v1047
    %v1439 = vpack.c.b16 %v1050, %v1049
    %v1440 = vpack.c.b16 %v1052, %v1051
    %v1441 = vpack.c.b16 %v1054, %v1053
    %v1442 = vpack.c.b16 %v1056, %v1055
    %v1443 = vpack.c.b16 %v1058, %v1057
    %v1444 = vpack.c.b16 %v1060, %v1059
    %v1445 = vpack.c.b16 %v1062, %v1061
    %v1446 = vpack.c.b16 %v1064, %v1063
    %v1447 = vpack.c.b16 %v1066, %v1065
    %v1448 = vpack.c.b16 %v1068, %v1067
    %v1449 = vpack.c.b16 %v1070, %v1069
    %v1450 = vpack.c.b16 %v1072, %v1071
    %v1451 = vpack.c.b16 %v1074, %v1073
    %v1452 = vpack.c.b16 %v1076, %v1075
    %v1453 = vpack.c.b16 %v1078, %v1077
    %v1454 = vpack.c.b16 %v1080, %v1079
    %v1455 = vpack.c.b16 %v1082, %v1081
    %v1456 = vpack.c.b16 %v1084, %v1083
    %v1457 = vpack.c.b16 %v1086, %v1085
    %v1458 = vpack.c.b16 %v1088, %v1087
    %v1459 = vpack.c.b16 %v1090, %v1089
    %v1460 = vpack.c.b16 %v1092, %v1091
    %v1461 = vpack.c.b16 %v1094, %v1093
    %v1462 = vpack.c.b16 %v1096, %v1095
    %v1463 = vpack.c.b16 %v1098, %v1097
    %v1464 = vpack.c.b16 %v1100, %v1099
    %v1465 = vpack.c.b16 %v1102, %v1101
    %v1466 = vpack.c.b16 %v1104, %v1103
    %v1467 = vpack.c.b16 %v1106, %v1105
    %v1468 = vpack.c.b16 %v1108, %v1107
    %v1469 = vpack.c.b16 %v1110, %v1109
    %v1470 = vpack.c.b16 %v1112, %v1111
    %v1471 = vpack.c.b16 %v1114, %v1113
    %v1472 = vpack.c.b16 %v1116, %v1115
    %v1473 = vpack.c.b16 %v1118, %v1117
    %v1474 = vpack.c.b16 %v1120, %v1119
    %v1475 = vpack.c.b16 %v1122, %v1121
    %v1476 = vpack.c.b16 %v1124, %v1123
    %v1477 = vpack.c.b16 %v1126, %v1125
    %v1478 = vpack.c.b16 %v1128, %v1127
    %v1479 = vpack.c.b16 %v1130, %v1129
    %v1480 = vpack.c.b16 %v1132, %v1131
    %v1481 = vpack.c.b16 %v1134, %v1133
    %v1482 = vpack.c.b16 %v1136, %v1135
    %v1483 = vpack.c.b16 %v1138, %v1137
    %v1484 = vpack.c.b16 %v1140, %v1139
    %v1485 = vpack.c.b16 %v1142, %v1141
    %v1486 = vpack.c.b16 %v1144, %v1143
    %v1487 = vpack.c.b16 %v1146, %v1145
    %v1488 = vpack.c.b16 %v1148, %v1147
    %v1489 = vpack.c.b16 %v1150, %v1149
    %v1490 = vpack.c.b16 %v1152, %v1151
    %v1491 = vpack.c.b16 %v1154, %v1153
    %v1492 = vpack.c.b16 %v1156, %v1155
    %v1493 = vpack.c.b16 %v1158, %v1157
    %v1494 = vpack.c.b16 %v1160, %v1159
    %v1495 = vpack.c.b16 %v1162, %v1161
    %v1496 = vpack.c.b16 %v1164, %v1163
    %v1497 = vpack.c.b16 %v1166, %v1165
    %v1498 = vpack.c.b16 %v1168, %v1167
    %v1499 = vpack.c.b16 %v1170, %v1169
    %v1500 = vpack.c.b16 %v1172, %v1171
    %v1501 = vpack.c.b16 %v1174, %v1173
    %v1502 = vpack.c.b16 %v1176, %v1175
    %v1503 = vpack.c.b16 %v1178, %v1177
    %v1504 = vpack.c.b16 %v1180, %v1179
    %v1505 = vpack.c.b16 %v1182, %v1181
    %v1506 = vpack.c.b16 %v1184, %v1183
    %v1507 = vpack.c.b16 %v1186, %v1185
    %v1508 = vpack.c.b16 %v1188, %v1187
    %v1509 = vpack.c.b16 %v1190, %v1189
    %v1510 = vpack.c.b16 %v1192, %v1191
    %v1511 = vpack.c.b16 %v1194, %v1193
    %v1512 = vpack.c.b16 %v1196, %v1195
    %v1513 = vpack.c.b16 %v1198, %v1197
    %v1514 = vpack.c.b16 %v1200, %v1199
    %v1515 = vpack.c.b16 %v1202, %v1201
    %v1516 = vpack.c.b16 %v1204, %v1203
    %v1517 = vpack.c.b16 %v1206, %v1205
    %v1518 = vpack.c.b16 %v1208, %v1207
    %v1519 = vpack.c.b16 %v1210, %v1209
    %v1520 = vpack.c.b16 %v1212, %v1211
    %v1521 = vpack.c.b16 %v1214, %v1213
    %v1522 = vpack.c.b16 %v1216, %v1215
    %v1523 = vpack.c.b16 %v1218, %v1217
    %v1524 = vpack.c.b16 %v1220, %v1219
    %v1525 = vpack.c.b16 %v1222, %v1221
    %v1526 = vpack.c.b16 %v1224, %v1223
    %v1527 = vpack.c.b16 %v1226, %v1225
    %v1528 = vpack.c.b16 %v1228, %v1227
    %v1529 = vpack.c.b16 %v1230, %v1229
    %v1530 = vpack.c.b16 %v1232, %v1231
    %v1531 = vpack.c.b16 %v1234, %v1233
    %v1532 = vpack.c.b16 %v1236, %v1235
    %v1533 = vpack.c.b16 %v1238, %v1237
    %v1534 = vpack.c.b16 %v1240, %v1239
    %v1535 = vpack.c.b16 %v1242, %v1241
    %v1536 = vpack.c.b16 %v1244, %v1243
    %v1537 = vpack.c.b16 %v1246, %v1245
    %v1538 = vpack.c.b16 %v1248, %v1247
    %v1539 = vpack.c.b16 %v1250, %v1249
    %v1540 = vpack.c.b16 %v1252, %v1251
    %v1541 = vpack.c.b16 %v1254, %v1253
    %v1542 = vpack.c.b16 %v1256, %v1255
    %v1543 = vpack.c.b16 %v1258, %v1257
    %v1544 = vpack.c.b16 %v1260, %v1259
    %v1545 = vpack.c.b16 %v1262, %v1261
    %v1546 = vpack.c.b16 %v1264, %v1263
    %v1547 = vpack.c.b16 %v1266, %v1265
    %v1548 = vpack.c.b16 %v1268, %v1267
    %v1549 = vpack.c.b16 %v1270, %v1269
    %v1550 = vpack.c.b16 %v1272, %v1271
    %v1551 = vpack.c.b16 %v1274, %v1273
    %v1552 = vpack.c.b16 %v1276, %v1275
    %v1553 = vpack.c.b16 %v1278, %v1277
    %v1554 = vpack.c.b16 %v1280, %v1279
    %v1555 = vpack.c.b16 %v1282, %v1281
    %v1556 = vpack.c.b16 %v1284, %v1283
    %v1557 = vpack.c.b16 %v1286, %v1285
    %v1558 = vpack.c.b16 %v1288, %v1287
    %v1559 = vpack.c.b16 %v1290, %v1289
    %v1560 = vpack.c.b16 %v1292, %v1291
    %v1561 = vpack.c.b16 %v1294, %v1293
    %v1562 = vpack.c.b16 %v1296, %v1295
    %v1563 = vpack.c.b16 %v1298, %v1297
    %v1564 = vpack.c.b16 %v1300, %v1299
    %v1565 = vpack.c.b16 %v1302, %v1301
    %v1566 = vpack.c.b16 %v1304, %v1303
    %v1567 = vpack.c.b16 %v1306, %v1305
    %v1568 = vpack.c.b16 %v1308, %v1307
    %v1569 = vpack.c.b16 %v1310, %v1309
    %v1570 = vpack.c.b16 %v1312, %v1311
    %v1571 = vpack.c.b16 %v1314, %v1313
    %v1572 = vpack.c.b16 %v1316, %v1315
    %v1573 = vpack.c.b16 %v1318, %v1317
    %v1574 = vpack.c.b16 %v1320, %v1319
    %v1575 = vpack.c.b16 %v1322, %v1321
    %v1576 = vpack.c.b16 %v1324, %v1323
    %v1577 = vpack.c.b16 %v1326, %v1325
    %v1578 = vpack.c.b16 %v1328, %v1327
    %v1579 = vpack.c.b16 %v1330, %v1329
    %v1580 = vpack.c.b16 %v1332, %v1331
    %v1581 = vpack.c.b16 %v1334, %v1333
    %v1582 = vpack.c.b16 %v1336, %v1335
    %v1583 = vpack.c.b16 %v1338, %v1337
    %v1584 = vpack.c.b16 %v1340, %v1339
    %v1585 = vpack.c.b16 %v1342, %v1341
    %v1586 = vpack.c.b16 %v1344, %v1343
    %v1587 = vpack.c.b16 %v1346, %v1345
    %v1588 = vpack.c.b16 %v1348, %v1347
    %v1589 = vpack.c.b16 %v1350, %v1349
    %v1590 = vpack.c.b16 %v1352, %v1351
    %v1591 = vpack.c.b16 %v1354, %v1353
    %v1592 = vpack.c.b16 %v1356, %v1355
    %v1593 = vpack.c.b16 %v1358, %v1357
    %v1594 = vpack.c.b16 %v1360, %v1359
    %v1595 = vpack.c.b16 %v1362, %v1361
    %v1596 = vpack.c.b16 %v1364, %v1363
    %v1597 = vpack.c.b16 %v1366, %v1365
    %v1598 = vpack.c.b16 %v1368, %v1367
    %v1599 = vpack.c.b16 %v1370, %v1369
    %v1600 = vpack.c.b16 %v1372, %v1371
    %v1601 = vpack.c.b16 %v1374, %v1373
    %v1602 = vpack.c.b16 %v1376, %v1375
    %v1603 = vpack.c.b16 %v1378, %v1377
    %v1604 = vpack.c.b16 %v1380, %v1379
    %v1605 = vpack.c.b16 %v1382, %v1381
    %v1606 = vpack.c.b16 %v1384, %v1383
    %v1607 = vpack.c.b16 %v1386, %v1385
    %v1608 = vpack.c.b16 %v1388, %v1387
    %v1609 = vpack.c.b16 %v1390, %v1389
    %v1610 = vpack.c.b16 %v1392, %v1391
    %v1611 = vpack.c.b16 %v1394, %v1393
    %v1612 = vpack.c.b16 %v1396, %v1395
    %v1613 = vpack.c.b16 %v1398, %v1397
    %v1614 = vpack.c.b16 %v1400, %v1399
    %v1615 = vpack.c.b16 %v1402, %v1401
    %v1616 = vpack.c.b16 %v1404, %v1403
    %v1617 = vpack.c.b16 %v1406, %v1405
    %v1618 = vpack.c.b16 %v1408, %v1407
    %v1619 = vpack.c.b16 %v1410, %v1409
    %v1620 = vpack.c.b16 %v1412, %v1411
    %v1621 = vpack.c.b16 %v1414, %v1413
    %v1622 = vpack.c.b16 %v1416, %v1415
    %v1623 = vpack.c.b16 %v1418, %v1417
    %v1624 = vpack.c.b16 %v1420, %v1419
    %v1625 = vpack.c.b16 %v1422, %v1421
    %v1626 = vpack.c.b16 %v1424, %v1423
    %v1627 = vpack.c.b16 %v1426, %v1425
    %v1628 = vpack.c.b16 %v1428, %v1427
    %1829 = vmatprep.subr.bf16.mxu0 0
    %1830 = vmatpush1.bf16.msra.mxu0 %v1429
    %1831 = vmatprep.subr.bf16.mxu0 0
    %1832 = vmatpush1.bf16.msra.mxu0 %v1430
    %1833 = vmatprep.subr.bf16.mxu0 0
    %1834 = vmatpush1.bf16.msra.mxu0 %v1431
    %1835 = vmatprep.subr.bf16.mxu0 0
    %1836 = vmatpush1.bf16.msra.mxu0 %v1432
    %1837 = vmatprep.subr.bf16.mxu0 0
    %1838 = vmatpush1.bf16.msra.mxu0 %v1433
    %1839 = vmatprep.subr.bf16.mxu0 0
    %1840 = vmatpush1.bf16.msra.mxu0 %v1434
    %1841 = vmatprep.subr.bf16.mxu0 0
    %1842 = vmatpush1.bf16.msra.mxu0 %v1435
    %1843 = vmatprep.subr.bf16.mxu0 0
    %1844 = vmatpush1.bf16.msra.mxu0 %v1436
    %1845 = vmatprep.subr.bf16.mxu0 0
    %1846 = vmatpush1.bf16.msra.mxu0 %v1437
    %1847 = vmatprep.subr.bf16.mxu0 0
    %1848 = vmatpush1.bf16.msra.mxu0 %v1438
    %1849 = vmatprep.subr.bf16.mxu0 0
    %1850 = vmatpush1.bf16.msra.mxu0 %v1439
    %1851 = vmatprep.subr.bf16.mxu0 0
    %1852 = vmatpush1.bf16.msra.mxu0 %v1440
    %1853 = vmatprep.subr.bf16.mxu0 0
    %1854 = vmatpush1.bf16.msra.mxu0 %v1441
    %1855 = vmatprep.subr.bf16.mxu0 0
    %1856 = vmatpush1.bf16.msra.mxu0 %v1442
    %1857 = vmatprep.subr.bf16.mxu0 0
    %1858 = vmatpush1.bf16.msra.mxu0 %v1443
    %1859 = vmatprep.subr.bf16.mxu0 0
    %1860 = vmatpush1.bf16.msra.mxu0 %v1444
    %1861 = vmatprep.mubr.bf16.mxu0 %v480
    %1862 = vmatmul.mubr.bf16.gmra.mrb[0].mxu0 %v466
    %v1863 = vpop.f32.mrb[0].mxu0
    %v1864 = vadd.f32 %v437, %v1863
    %v1865 = vpop.f32.mrb[0].mxu0
    %v1866 = vpop.f32.mrb[0].mxu0
    %v1867 = vpop.f32.mrb[0].mxu0
    %1868 = vdwg.mxu0
    %1869 = vmatprep.subr.bf16.mxu0 0
    %1870 = vmatpush1.bf16.msra.mxu0 %v1445
    %1871 = vmatprep.subr.bf16.mxu0 0
    %1872 = vmatpush1.bf16.msra.mxu0 %v1446
    %1873 = vmatprep.subr.bf16.mxu0 0
    %1874 = vmatpush1.bf16.msra.mxu0 %v1447
    %1875 = vmatprep.subr.bf16.mxu0 0
    %1876 = vmatpush1.bf16.msra.mxu0 %v1448
    %1877 = vmatprep.subr.bf16.mxu0 0
    %1878 = vmatpush1.bf16.msra.mxu0 %v1449
    %1879 = vmatprep.subr.bf16.mxu0 0
    %1880 = vmatpush1.bf16.msra.mxu0 %v1450
    %1881 = vmatprep.subr.bf16.mxu0 0
    %1882 = vmatpush1.bf16.msra.mxu0 %v1451
    %1883 = vmatprep.subr.bf16.mxu0 0
    %1884 = vmatpush1.bf16.msra.mxu0 %v1452
    %1885 = vmatprep.subr.bf16.mxu0 0
    %1886 = vmatpush1.bf16.msra.mxu0 %v1453
    %1887 = vmatprep.subr.bf16.mxu0 0
    %1888 = vmatpush1.bf16.msra.mxu0 %v1454
    %1889 = vmatprep.subr.bf16.mxu0 0
    %1890 = vmatpush1.bf16.msra.mxu0 %v1455
    %1891 = vmatprep.subr.bf16.mxu0 0
    %1892 = vmatpush1.bf16.msra.mxu0 %v1456
    %1893 = vmatprep.subr.bf16.mxu0 0
    %1894 = vmatpush1.bf16.msra.mxu0 %v1457
    %1895 = vmatprep.subr.bf16.mxu0 0
    %1896 = vmatpush1.bf16.msra.mxu0 %v1458
    %1897 = vmatprep.subr.bf16.mxu0 0
    %1898 = vmatpush1.bf16.msra.mxu0 %v1459
    %1899 = vmatprep.subr.bf16.mxu0 0
    %1900 = vmatpush1.bf16.msra.mxu0 %v1460
    %1901 = vmatprep.mubr.bf16.mxu0 %v490
    %1902 = vmatmul.mubr.bf16.gmra.mrb[0].mxu0 %v488
    %v1903 = vpop.f32.mrb[0].mxu0
    %v1904 = vadd.f32 %v1864, %v1903
    %v1905 = vpop.f32.mrb[0].mxu0
    %v1906 = vpop.f32.mrb[0].mxu0
    %v1907 = vpop.f32.mrb[0].mxu0
    %1908 = vdwg.mxu0
    %1909 = vmatprep.subr.bf16.mxu0 0
    %1910 = vmatpush1.bf16.msra.mxu0 %v1461
    %1911 = vmatprep.subr.bf16.mxu0 0
    %1912 = vmatpush1.bf16.msra.mxu0 %v1462
    %1913 = vmatprep.subr.bf16.mxu0 0
    %1914 = vmatpush1.bf16.msra.mxu0 %v1463
    %1915 = vmatprep.subr.bf16.mxu0 0
    %1916 = vmatpush1.bf16.msra.mxu0 %v1464
    %1917 = vmatprep.subr.bf16.mxu0 0
    %1918 = vmatpush1.bf16.msra.mxu0 %v1465
    %1919 = vmatprep.subr.bf16.mxu0 0
    %1920 = vmatpush1.bf16.msra.mxu0 %v1466
    %1921 = vmatprep.subr.bf16.mxu0 0
    %1922 = vmatpush1.bf16.msra.mxu0 %v1467
    %1923 = vmatprep.subr.bf16.mxu0 0
    %1924 = vmatpush1.bf16.msra.mxu0 %v1468
    %1925 = vmatprep.subr.bf16.mxu0 0
    %1926 = vmatpush1.bf16.msra.mxu0 %v1469
    %1927 = vmatprep.subr.bf16.mxu0 0
    %1928 = vmatpush1.bf16.msra.mxu0 %v1470
    %1929 = vmatprep.subr.bf16.mxu0 0
    %1930 = vmatpush1.bf16.msra.mxu0 %v1471
    %1931 = vmatprep.subr.bf16.mxu0 0
    %1932 = vmatpush1.bf16.msra.mxu0 %v1472
    %1933 = vmatprep.subr.bf16.mxu0 0
    %1934 = vmatpush1.bf16.msra.mxu0 %v1473
    %1935 = vmatprep.subr.bf16.mxu0 0
    %1936 = vmatpush1.bf16.msra.mxu0 %v1474
    %1937 = vmatprep.subr.bf16.mxu0 0
    %1938 = vmatpush1.bf16.msra.mxu0 %v1475
    %1939 = vmatprep.subr.bf16.mxu0 0
    %1940 = vmatpush1.bf16.msra.mxu0 %v1476
    %1941 = vmatprep.mubr.bf16.mxu0 %v487
    %1942 = vmatmul.mubr.bf16.gmra.mrb[0].mxu0 %v473
    %v1943 = vpop.f32.mrb[0].mxu0
    %v1944 = vadd.f32 %v1904, %v1943
    %v1945 = vpop.f32.mrb[0].mxu0
    %v1946 = vpop.f32.mrb[0].mxu0
    %v1947 = vpop.f32.mrb[0].mxu0
    %1948 = vdwg.mxu0
    %1949 = vmatprep.subr.bf16.mxu0 0
    %1950 = vmatpush1.bf16.msra.mxu0 %v1477
    %1951 = vmatprep.subr.bf16.mxu0 0
    %1952 = vmatpush1.bf16.msra.mxu0 %v1478
    %1953 = vmatprep.subr.bf16.mxu0 0
    %1954 = vmatpush1.bf16.msra.mxu0 %v1479
    %1955 = vmatprep.subr.bf16.mxu0 0
    %1956 = vmatpush1.bf16.msra.mxu0 %v1480
    %1957 = vmatprep.subr.bf16.mxu0 0
    %1958 = vmatpush1.bf16.msra.mxu0 %v1481
    %1959 = vmatprep.subr.bf16.mxu0 0
    %1960 = vmatpush1.bf16.msra.mxu0 %v1482
    %1961 = vmatprep.subr.bf16.mxu0 0
    %1962 = vmatpush1.bf16.msra.mxu0 %v1483
    %1963 = vmatprep.subr.bf16.mxu0 0
    %1964 = vmatpush1.bf16.msra.mxu0 %v1484
    %1965 = vmatprep.subr.bf16.mxu0 0
    %1966 = vmatpush1.bf16.msra.mxu0 %v1485
    %1967 = vmatprep.subr.bf16.mxu0 0
    %1968 = vmatpush1.bf16.msra.mxu0 %v1486
    %1969 = vmatprep.subr.bf16.mxu0 0
    %1970 = vmatpush1.bf16.msra.mxu0 %v1487
    %1971 = vmatprep.subr.bf16.mxu0 0
    %1972 = vmatpush1.bf16.msra.mxu0 %v1488
    %1973 = vmatprep.subr.bf16.mxu0 0
    %1974 = vmatpush1.bf16.msra.mxu0 %v1489
    %1975 = vmatprep.subr.bf16.mxu0 0
    %1976 = vmatpush1.bf16.msra.mxu0 %v1490
    %1977 = vmatprep.subr.bf16.mxu0 0
    %1978 = vmatpush1.bf16.msra.mxu0 %v1491
    %1979 = vmatprep.subr.bf16.mxu0 0
    %1980 = vmatpush1.bf16.msra.mxu0 %v1492
    %1981 = vmatprep.mubr.bf16.mxu0 %v491
    %1982 = vmatmul.mubr.bf16.gmra.mrb[0].mxu0 %v489
    %v1983 = vpop.f32.mrb[0].mxu0
    %v1984 = vadd.f32 %v1944, %v1983
    %v1985 = vpop.f32.mrb[0].mxu0
    %v1986 = vpop.f32.mrb[0].mxu0
    %v1987 = vpop.f32.mrb[0].mxu0
    %1988 = vdwg.mxu0
    %1989 = vmatprep.subr.bf16.mxu0 0
    %1990 = vmatpush1.bf16.msra.mxu0 %v1493
    %1991 = vmatprep.subr.bf16.mxu0 0
    %1992 = vmatpush1.bf16.msra.mxu0 %v1494
    %1993 = vmatprep.subr.bf16.mxu0 0
    %1994 = vmatpush1.bf16.msra.mxu0 %v1495
    %1995 = vmatprep.subr.bf16.mxu0 0
    %1996 = vmatpush1.bf16.msra.mxu0 %v1496
    %1997 = vmatprep.subr.bf16.mxu0 0
    %1998 = vmatpush1.bf16.msra.mxu0 %v1497
    %1999 = vmatprep.subr.bf16.mxu0 0
    %2000 = vmatpush1.bf16.msra.mxu0 %v1498
    %2001 = vmatprep.subr.bf16.mxu0 0
    %2002 = vmatpush1.bf16.msra.mxu0 %v1499
    %2003 = vmatprep.subr.bf16.mxu0 0
    %2004 = vmatpush1.bf16.msra.mxu0 %v1500
    %2005 = vmatprep.subr.bf16.mxu0 0
    %2006 = vmatpush1.bf16.msra.mxu0 %v1501
    %2007 = vmatprep.subr.bf16.mxu0 0
    %2008 = vmatpush1.bf16.msra.mxu0 %v1502
    %2009 = vmatprep.subr.bf16.mxu0 0
    %2010 = vmatpush1.bf16.msra.mxu0 %v1503
    %2011 = vmatprep.subr.bf16.mxu0 0
    %2012 = vmatpush1.bf16.msra.mxu0 %v1504
    %2013 = vmatprep.subr.bf16.mxu0 0
    %2014 = vmatpush1.bf16.msra.mxu0 %v1505
    %2015 = vmatprep.subr.bf16.mxu0 0
    %2016 = vmatpush1.bf16.msra.mxu0 %v1506
    %2017 = vmatprep.subr.bf16.mxu0 0
    %2018 = vmatpush1.bf16.msra.mxu0 %v1507
    %2019 = vmatprep.subr.bf16.mxu0 0
    %2020 = vmatpush1.bf16.msra.mxu0 %v1508
    %2021 = vmatprep.mubr.bf16.mxu0 %v529
    %2022 = vmatmul.mubr.bf16.gmra.mrb[0].mxu0 %v515
    %v2023 = vpop.f32.mrb[0].mxu0
    %v2024 = vadd.f32 %v1984, %v2023
    %v2025 = vpop.f32.mrb[0].mxu0
    %v2026 = vpop.f32.mrb[0].mxu0
    %v2027 = vpop.f32.mrb[0].mxu0
    %2028 = vdwg.mxu0
    %2029 = vmatprep.subr.bf16.mxu0 0
    %2030 = vmatpush1.bf16.msra.mxu0 %v1509
    %2031 = vmatprep.subr.bf16.mxu0 0
    %2032 = vmatpush1.bf16.msra.mxu0 %v1510
    %2033 = vmatprep.subr.bf16.mxu0 0
    %2034 = vmatpush1.bf16.msra.mxu0 %v1511
    %2035 = vmatprep.subr.bf16.mxu0 0
    %2036 = vmatpush1.bf16.msra.mxu0 %v1512
    %2037 = vmatprep.subr.bf16.mxu0 0
    %2038 = vmatpush1.bf16.msra.mxu0 %v1513
    %2039 = vmatprep.subr.bf16.mxu0 0
    %2040 = vmatpush1.bf16.msra.mxu0 %v1514
    %2041 = vmatprep.subr.bf16.mxu0 0
    %2042 = vmatpush1.bf16.msra.mxu0 %v1515
    %2043 = vmatprep.subr.bf16.mxu0 0
    %2044 = vmatpush1.bf16.msra.mxu0 %v1516
    %2045 = vmatprep.subr.bf16.mxu0 0
    %2046 = vmatpush1.bf16.msra.mxu0 %v1517
    %2047 = vmatprep.subr.bf16.mxu0 0
    %2048 = vmatpush1.bf16.msra.mxu0 %v1518
    %2049 = vmatprep.subr.bf16.mxu0 0
    %2050 = vmatpush1.bf16.msra.mxu0 %v1519
    %2051 = vmatprep.subr.bf16.mxu0 0
    %2052 = vmatpush1.bf16.msra.mxu0 %v1520
    %2053 = vmatprep.subr.bf16.mxu0 0
    %2054 = vmatpush1.bf16.msra.mxu0 %v1521
    %2055 = vmatprep.subr.bf16.mxu0 0
    %2056 = vmatpush1.bf16.msra.mxu0 %v1522
    %2057 = vmatprep.subr.bf16.mxu0 0
    %2058 = vmatpush1.bf16.msra.mxu0 %v1523
    %2059 = vmatprep.subr.bf16.mxu0 0
    %2060 = vmatpush1.bf16.msra.mxu0 %v1524
    %2061 = vmatprep.mubr.bf16.mxu0 %v539
    %2062 = vmatmul.mubr.bf16.gmra.mrb[0].mxu0 %v537
    %v2063 = vpop.f32.mrb[0].mxu0
    %v2064 = vadd.f32 %v2024, %v2063
    %v2065 = vpop.f32.mrb[0].mxu0
    %v2066 = vpop.f32.mrb[0].mxu0
    %v2067 = vpop.f32.mrb[0].mxu0
    %2068 = vdwg.mxu0
    %2069 = vmatprep.subr.bf16.mxu0 0
    %2070 = vmatpush1.bf16.msra.mxu0 %v1525
    %2071 = vmatprep.subr.bf16.mxu0 0
    %2072 = vmatpush1.bf16.msra.mxu0 %v1526
    %2073 = vmatprep.subr.bf16.mxu0 0
    %2074 = vmatpush1.bf16.msra.mxu0 %v1527
    %2075 = vmatprep.subr.bf16.mxu0 0
    %2076 = vmatpush1.bf16.msra.mxu0 %v1528
    %2077 = vmatprep.subr.bf16.mxu0 0
    %2078 = vmatpush1.bf16.msra.mxu0 %v1529
    %2079 = vmatprep.subr.bf16.mxu0 0
    %2080 = vmatpush1.bf16.msra.mxu0 %v1530
    %2081 = vmatprep.subr.bf16.mxu0 0
    %2082 = vmatpush1.bf16.msra.mxu0 %v1531
    %2083 = vmatprep.subr.bf16.mxu0 0
    %2084 = vmatpush1.bf16.msra.mxu0 %v1532
    %2085 = vmatprep.subr.bf16.mxu0 0
    %2086 = vmatpush1.bf16.msra.mxu0 %v1533
    %2087 = vmatprep.subr.bf16.mxu0 0
    %2088 = vmatpush1.bf16.msra.mxu0 %v1534
    %2089 = vmatprep.subr.bf16.mxu0 0
    %2090 = vmatpush1.bf16.msra.mxu0 %v1535
    %2091 = vmatprep.subr.bf16.mxu0 0
    %2092 = vmatpush1.bf16.msra.mxu0 %v1536
    %2093 = vmatprep.subr.bf16.mxu0 0
    %2094 = vmatpush1.bf16.msra.mxu0 %v1537
    %2095 = vmatprep.subr.bf16.mxu0 0
    %2096 = vmatpush1.bf16.msra.mxu0 %v1538
    %2097 = vmatprep.subr.bf16.mxu0 0
    %2098 = vmatpush1.bf16.msra.mxu0 %v1539
    %2099 = vmatprep.subr.bf16.mxu0 0
    %2100 = vmatpush1.bf16.msra.mxu0 %v1540
    %2101 = vmatprep.mubr.bf16.mxu0 %v536
    %2102 = vmatmul.mubr.bf16.gmra.mrb[0].mxu0 %v522
    %v2103 = vpop.f32.mrb[0].mxu0
    %v2104 = vadd.f32 %v2064, %v2103
    %v2105 = vpop.f32.mrb[0].mxu0
    %v2106 = vpop.f32.mrb[0].mxu0
    %v2107 = vpop.f32.mrb[0].mxu0
    %2108 = vdwg.mxu0
    %2109 = vmatprep.subr.bf16.mxu0 0
    %2110 = vmatpush1.bf16.msra.mxu0 %v1541
    %2111 = vmatprep.subr.bf16.mxu0 0
    %2112 = vmatpush1.bf16.msra.mxu0 %v1542
    %2113 = vmatprep.subr.bf16.mxu0 0
    %2114 = vmatpush1.bf16.msra.mxu0 %v1543
    %2115 = vmatprep.subr.bf16.mxu0 0
    %2116 = vmatpush1.bf16.msra.mxu0 %v1544
    %2117 = vmatprep.subr.bf16.mxu0 0
    %2118 = vmatpush1.bf16.msra.mxu0 %v1545
    %2119 = vmatprep.subr.bf16.mxu0 0
    %2120 = vmatpush1.bf16.msra.mxu0 %v1546
    %2121 = vmatprep.subr.bf16.mxu0 0
    %2122 = vmatpush1.bf16.msra.mxu0 %v1547
    %2123 = vmatprep.subr.bf16.mxu0 0
    %2124 = vmatpush1.bf16.msra.mxu0 %v1548
    %2125 = vmatprep.subr.bf16.mxu0 0
    %2126 = vmatpush1.bf16.msra.mxu0 %v1549
    %2127 = vmatprep.subr.bf16.mxu0 0
    %2128 = vmatpush1.bf16.msra.mxu0 %v1550
    %2129 = vmatprep.subr.bf16.mxu0 0
    %2130 = vmatpush1.bf16.msra.mxu0 %v1551
    %2131 = vmatprep.subr.bf16.mxu0 0
    %2132 = vmatpush1.bf16.msra.mxu0 %v1552
    %2133 = vmatprep.subr.bf16.mxu0 0
    %2134 = vmatpush1.bf16.msra.mxu0 %v1553
    %2135 = vmatprep.subr.bf16.mxu0 0
    %2136 = vmatpush1.bf16.msra.mxu0 %v1554
    %2137 = vmatprep.subr.bf16.mxu0 0
    %2138 = vmatpush1.bf16.msra.mxu0 %v1555
    %2139 = vmatprep.subr.bf16.mxu0 0
    %2140 = vmatpush1.bf16.msra.mxu0 %v1556
    %2141 = vmatprep.mubr.bf16.mxu0 %v540
    %2142 = vmatmul.mubr.bf16.gmra.mrb[0].mxu0 %v538
    %v2143 = vpop.f32.mrb[0].mxu0
    %v2144 = vadd.f32 %v2104, %v2143
    %v2145 = vpop.f32.mrb[0].mxu0
    %v2146 = vpop.f32.mrb[0].mxu0
    %v2147 = vpop.f32.mrb[0].mxu0
    %2148 = vdwg.mxu0
    %2149 = vmatprep.subr.bf16.mxu0 0
    %2150 = vmatpush1.bf16.msra.mxu0 %v1557
    %2151 = vmatprep.subr.bf16.mxu0 0
    %2152 = vmatpush1.bf16.msra.mxu0 %v1558
    %2153 = vmatprep.subr.bf16.mxu0 0
    %2154 = vmatpush1.bf16.msra.mxu0 %v1559
    %2155 = vmatprep.subr.bf16.mxu0 0
    %2156 = vmatpush1.bf16.msra.mxu0 %v1560
    %2157 = vmatprep.subr.bf16.mxu0 0
    %2158 = vmatpush1.bf16.msra.mxu0 %v1561
    %2159 = vmatprep.subr.bf16.mxu0 0
    %2160 = vmatpush1.bf16.msra.mxu0 %v1562
    %2161 = vmatprep.subr.bf16.mxu0 0
    %2162 = vmatpush1.bf16.msra.mxu0 %v1563
    %2163 = vmatprep.subr.bf16.mxu0 0
    %2164 = vmatpush1.bf16.msra.mxu0 %v1564
    %2165 = vmatprep.subr.bf16.mxu0 0
    %2166 = vmatpush1.bf16.msra.mxu0 %v1565
    %2167 = vmatprep.subr.bf16.mxu0 0
    %2168 = vmatpush1.bf16.msra.mxu0 %v1566
    %2169 = vmatprep.subr.bf16.mxu0 0
    %2170 = vmatpush1.bf16.msra.mxu0 %v1567
    %2171 = vmatprep.subr.bf16.mxu0 0
    %2172 = vmatpush1.bf16.msra.mxu0 %v1568
    %2173 = vmatprep.subr.bf16.mxu0 0
    %2174 = vmatpush1.bf16.msra.mxu0 %v1569
    %2175 = vmatprep.subr.bf16.mxu0 0
    %2176 = vmatpush1.bf16.msra.mxu0 %v1570
    %2177 = vmatprep.subr.bf16.mxu0 0
    %2178 = vmatpush1.bf16.msra.mxu0 %v1571
    %2179 = vmatprep.subr.bf16.mxu0 0
    %2180 = vmatpush1.bf16.msra.mxu0 %v1572
    %2181 = vmatprep.mubr.bf16.mxu0 %v578
    %2182 = vmatmul.mubr.bf16.gmra.mrb[0].mxu0 %v564
    %v2183 = vpop.f32.mrb[0].mxu0
    %v2184 = vadd.f32 %v2144, %v2183
    %v2185 = vpop.f32.mrb[0].mxu0
    %v2186 = vpop.f32.mrb[0].mxu0
    %v2187 = vpop.f32.mrb[0].mxu0
    %2188 = vdwg.mxu0
    %2189 = vmatprep.subr.bf16.mxu0 0
    %2190 = vmatpush1.bf16.msra.mxu0 %v1573
    %2191 = vmatprep.subr.bf16.mxu0 0
    %2192 = vmatpush1.bf16.msra.mxu0 %v1574
    %2193 = vmatprep.subr.bf16.mxu0 0
    %2194 = vmatpush1.bf16.msra.mxu0 %v1575
    %2195 = vmatprep.subr.bf16.mxu0 0
    %2196 = vmatpush1.bf16.msra.mxu0 %v1576
    %2197 = vmatprep.subr.bf16.mxu0 0
    %2198 = vmatpush1.bf16.msra.mxu0 %v1577
    %2199 = vmatprep.subr.bf16.mxu0 0
    %2200 = vmatpush1.bf16.msra.mxu0 %v1578
    %2201 = vmatprep.subr.bf16.mxu0 0
    %2202 = vmatpush1.bf16.msra.mxu0 %v1579
    %2203 = vmatprep.subr.bf16.mxu0 0
    %2204 = vmatpush1.bf16.msra.mxu0 %v1580
    %2205 = vmatprep.subr.bf16.mxu0 0
    %2206 = vmatpush1.bf16.msra.mxu0 %v1581
    %2207 = vmatprep.subr.bf16.mxu0 0
    %2208 = vmatpush1.bf16.msra.mxu0 %v1582
    %2209 = vmatprep.subr.bf16.mxu0 0
    %2210 = vmatpush1.bf16.msra.mxu0 %v1583
    %2211 = vmatprep.subr.bf16.mxu0 0
    %2212 = vmatpush1.bf16.msra.mxu0 %v1584
    %2213 = vmatprep.subr.bf16.mxu0 0
    %2214 = vmatpush1.bf16.msra.mxu0 %v1585
    %2215 = vmatprep.subr.bf16.mxu0 0
    %2216 = vmatpush1.bf16.msra.mxu0 %v1586
    %2217 = vmatprep.subr.bf16.mxu0 0
    %2218 = vmatpush1.bf16.msra.mxu0 %v1587
    %2219 = vmatprep.subr.bf16.mxu0 0
    %2220 = vmatpush1.bf16.msra.mxu0 %v1588
    %2221 = vmatprep.mubr.bf16.mxu0 %v588
    %2222 = vmatmul.mubr.bf16.gmra.mrb[0].mxu0 %v586
    %v2223 = vpop.f32.mrb[0].mxu0
    %v2224 = vadd.f32 %v2184, %v2223
    %v2225 = vpop.f32.mrb[0].mxu0
    %v2226 = vpop.f32.mrb[0].mxu0
    %v2227 = vpop.f32.mrb[0].mxu0
    %2228 = vdwg.mxu0
    %2229 = vmatprep.subr.bf16.mxu0 0
    %2230 = vmatpush1.bf16.msra.mxu0 %v1589
    %2231 = vmatprep.subr.bf16.mxu0 0
    %2232 = vmatpush1.bf16.msra.mxu0 %v1590
    %2233 = vmatprep.subr.bf16.mxu0 0
    %2234 = vmatpush1.bf16.msra.mxu0 %v1591
    %2235 = vmatprep.subr.bf16.mxu0 0
    %2236 = vmatpush1.bf16.msra.mxu0 %v1592
    %2237 = vmatprep.subr.bf16.mxu0 0
    %2238 = vmatpush1.bf16.msra.mxu0 %v1593
    %2239 = vmatprep.subr.bf16.mxu0 0
    %2240 = vmatpush1.bf16.msra.mxu0 %v1594
    %2241 = vmatprep.subr.bf16.mxu0 0
    %2242 = vmatpush1.bf16.msra.mxu0 %v1595
    %2243 = vmatprep.subr.bf16.mxu0 0
    %2244 = vmatpush1.bf16.msra.mxu0 %v1596
    %2245 = vmatprep.subr.bf16.mxu0 0
    %2246 = vmatpush1.bf16.msra.mxu0 %v1597
    %2247 = vmatprep.subr.bf16.mxu0 0
    %2248 = vmatpush1.bf16.msra.mxu0 %v1598
    %2249 = vmatprep.subr.bf16.mxu0 0
    %2250 = vmatpush1.bf16.msra.mxu0 %v1599
    %2251 = vmatprep.subr.bf16.mxu0 0
    %2252 = vmatpush1.bf16.msra.mxu0 %v1600
    %2253 = vmatprep.subr.bf16.mxu0 0
    %2254 = vmatpush1.bf16.msra.mxu0 %v1601
    %2255 = vmatprep.subr.bf16.mxu0 0
    %2256 = vmatpush1.bf16.msra.mxu0 %v1602
    %2257 = vmatprep.subr.bf16.mxu0 0
    %2258 = vmatpush1.bf16.msra.mxu0 %v1603
    %2259 = vmatprep.subr.bf16.mxu0 0
    %2260 = vmatpush1.bf16.msra.mxu0 %v1604
    %2261 = vmatprep.mubr.bf16.mxu0 %v585
    %2262 = vmatmul.mubr.bf16.gmra.mrb[0].mxu0 %v571
    %v2263 = vpop.f32.mrb[0].mxu0
    %v2264 = vadd.f32 %v2224, %v2263
    %v2265 = vpop.f32.mrb[0].mxu0
    %v2266 = vpop.f32.mrb[0].mxu0
    %v2267 = vpop.f32.mrb[0].mxu0
    %2268 = vdwg.mxu0
    %2269 = vmatprep.subr.bf16.mxu0 0
    %2270 = vmatpush1.bf16.msra.mxu0 %v1605
    %2271 = vmatprep.subr.bf16.mxu0 0
    %2272 = vmatpush1.bf16.msra.mxu0 %v1606
    %2273 = vmatprep.subr.bf16.mxu0 0
    %2274 = vmatpush1.bf16.msra.mxu0 %v1607
    %2275 = vmatprep.subr.bf16.mxu0 0
    %2276 = vmatpush1.bf16.msra.mxu0 %v1608
    %2277 = vmatprep.subr.bf16.mxu0 0
    %2278 = vmatpush1.bf16.msra.mxu0 %v1609
    %2279 = vmatprep.subr.bf16.mxu0 0
    %2280 = vmatpush1.bf16.msra.mxu0 %v1610
    %2281 = vmatprep.subr.bf16.mxu0 0
    %2282 = vmatpush1.bf16.msra.mxu0 %v1611
    %2283 = vmatprep.subr.bf16.mxu0 0
    %2284 = vmatpush1.bf16.msra.mxu0 %v1612
    %2285 = vmatprep.subr.bf16.mxu0 0
    %2286 = vmatpush1.bf16.msra.mxu0 %v1613
    %2287 = vmatprep.subr.bf16.mxu0 0
    %2288 = vmatpush1.bf16.msra.mxu0 %v1614
    %2289 = vmatprep.subr.bf16.mxu0 0
    %2290 = vmatpush1.bf16.msra.mxu0 %v1615
    %2291 = vmatprep.subr.bf16.mxu0 0
    %2292 = vmatpush1.bf16.msra.mxu0 %v1616
    %2293 = vmatprep.subr.bf16.mxu0 0
    %2294 = vmatpush1.bf16.msra.mxu0 %v1617
    %2295 = vmatprep.subr.bf16.mxu0 0
    %2296 = vmatpush1.bf16.msra.mxu0 %v1618
    %2297 = vmatprep.subr.bf16.mxu0 0
    %2298 = vmatpush1.bf16.msra.mxu0 %v1619
    %2299 = vmatprep.subr.bf16.mxu0 0
    %2300 = vmatpush1.bf16.msra.mxu0 %v1620
    %2301 = vmatprep.mubr.bf16.mxu0 %v589
    %2302 = vmatmul.mubr.bf16.gmra.mrb[0].mxu0 %v587
    %v2303 = vpop.f32.mrb[0].mxu0
    %v2304 = vadd.f32 %v2264, %v2303
    %v2305 = vpop.f32.mrb[0].mxu0
    %v2306 = vpop.f32.mrb[0].mxu0
    %v2307 = vpop.f32.mrb[0].mxu0
    %2308 = vdwg.mxu0
    %2309 = vmatprep.subr.bf16.mxu0 0
    %2310 = vmatpush1.bf16.msra.mxu0 %v1621
    %2311 = vmatprep.subr.bf16.mxu0 0
    %2312 = vmatpush1.bf16.msra.mxu0 %v1622
    %2313 = vmatprep.subr.bf16.mxu0 0
    %2314 = vmatpush1.bf16.msra.mxu0 %v1623
    %2315 = vmatprep.subr.bf16.mxu0 0
    %2316 = vmatpush1.bf16.msra.mxu0 %v1624
    %2317 = vmatprep.subr.bf16.mxu0 0
    %2318 = vmatpush1.bf16.msra.mxu0 %v1625
    %2319 = vmatprep.subr.bf16.mxu0 0
    %2320 = vmatpush1.bf16.msra.mxu0 %v1626
    %2321 = vmatprep.subr.bf16.mxu0 0
    %2322 = vmatpush1.bf16.msra.mxu0 %v1627
    %2323 = vmatprep.subr.bf16.mxu0 0
    %2324 = vmatpush1.bf16.msra.mxu0 %v1628
    %2325 = vmatprep.subr.bf16.mxu0 0
    %2326 = vmatpush1.bf16.msra.mxu0 0
    %2327 = vmatprep.subr.bf16.mxu0 0
    %2328 = vmatpush1.bf16.msra.mxu0 0
    %2329 = vmatprep.subr.bf16.mxu0 0
    %2330 = vmatpush1.bf16.msra.mxu0 0
    %2331 = vmatprep.subr.bf16.mxu0 0
    %2332 = vmatpush1.bf16.msra.mxu0 0
    %2333 = vmatprep.subr.bf16.mxu0 0
    %2334 = vmatpush1.bf16.msra.mxu0 0
    %2335 = vmatprep.subr.bf16.mxu0 0
    %2336 = vmatpush1.bf16.msra.mxu0 0
    %2337 = vmatprep.subr.bf16.mxu0 0
    %2338 = vmatpush1.bf16.msra.mxu0 0
    %2339 = vmatprep.subr.bf16.mxu0 0
    %2340 = vmatpush1.bf16.msra.mxu0 0
    %2341 = vmatprep.mubr.bf16.mxu0 0
    %2342 = vmatmul.mubr.bf16.gmra.mrb[0].mxu0 %v603
    %v2343 = vpop.f32.mrb[0].mxu0
    %v2344 = vadd.f32 %v2304, %v2343
    %v2345 = vpop.f32.mrb[0].mxu0
    %v2346 = vpop.f32.mrb[0].mxu0
    %v2347 = vpop.f32.mrb[0].mxu0
    %2348 = vdwg.mxu0
    %v2349 = vmax.f32 %v2344, 0.0
    %v2350 = vpack.c.bf16 %v2349, %v2349
    %v2351 = vld [vmem:[%s3] sm:$0xf]
    %v2352 = vld [vmem:[%s3 + $0x4] sm:$0xf]
    %v2353 = vld [vmem:[%s3 + $0x8] sm:$0xf]
    %v2354 = vld [vmem:[%s3 + $0xc] sm:$0xf]
    %v2355 = vld [vmem:[%s3 + $0x10] sm:$0xf]
    %v2356 = vld [vmem:[%s3 + $0x14] sm:$0xf]
    %v2357 = vld [vmem:[%s3 + $0x18] sm:$0xf]
    %v2358 = vld [vmem:[%s3 + $0x1c] sm:$0xf]
    %v2359 = vld [vmem:[%s3 + $0x20] sm:$0xf]
    %v2360 = vld [vmem:[%s3 + $0x24] sm:$0xf]
    %v2361 = vld [vmem:[%s3 + $0x28] sm:$0xf]
    %v2362 = vld [vmem:[%s3 + $0x2c] sm:$0xf]
    %v2363 = vld [vmem:[%s3 + $0x30] sm:$0xf]
    %v2364 = vld [vmem:[%s3 + $0x34] sm:$0xf]
    %v2365 = vld [vmem:[%s3 + $0x38] sm:$0xf]
    %v2366 = vld [vmem:[%s3 + $0x3c] sm:$0xf]
    %v2367 = vld [vmem:[%s4] sm:$0x1]
    %v2369 = vlaneseq
    %v2370 = vshrl.u32 %v2369, 7
    %v2371 = vsub.s32 0, %v2370
    %v2372 = vrot.slane %v2367, %v2371
    %v2390 = vunpack.c.l.b16 %v2351
    %v2391 = vunpack.c.l.b16 %v2352
    %v2392 = vunpack.c.l.b16 %v2353
    %v2393 = vunpack.c.l.b16 %v2354
    %v2394 = vunpack.c.l.b16 %v2355
    %v2395 = vunpack.c.l.b16 %v2356
    %v2396 = vunpack.c.l.b16 %v2357
    %v2397 = vunpack.c.l.b16 %v2358
    %v2398 = vunpack.c.l.b16 %v2359
    %v2399 = vunpack.c.l.b16 %v2360
    %v2400 = vunpack.c.l.b16 %v2361
    %v2401 = vunpack.c.l.b16 %v2362
    %v2402 = vunpack.c.l.b16 %v2363
    %v2403 = vunpack.c.l.b16 %v2364
    %v2404 = vunpack.c.l.b16 %v2365
    %v2405 = vunpack.c.l.b16 %v2366
    %v2406 = vpack.c.b16 %v2391, %v2390
    %v2407 = vpack.c.b16 %v2393, %v2392
    %v2408 = vpack.c.b16 %v2395, %v2394
    %v2409 = vpack.c.b16 %v2397, %v2396
    %v2410 = vpack.c.b16 %v2399, %v2398
    %v2411 = vpack.c.b16 %v2401, %v2400
    %v2412 = vpack.c.b16 %v2403, %v2402
    %v2413 = vpack.c.b16 %v2405, %v2404
    %2422 = vmatprep.subr.bf16.mxu0 0
    %2423 = vmatpush1.bf16.msra.mxu0 %v2406
    %2424 = vmatprep.subr.bf16.mxu0 0
    %2425 = vmatpush1.bf16.msra.mxu0 %v2407
    %2426 = vmatprep.subr.bf16.mxu0 0
    %2427 = vmatpush1.bf16.msra.mxu0 %v2408
    %2428 = vmatprep.subr.bf16.mxu0 0
    %2429 = vmatpush1.bf16.msra.mxu0 %v2409
    %2430 = vmatprep.subr.bf16.mxu0 0
    %2431 = vmatpush1.bf16.msra.mxu0 %v2410
    %2432 = vmatprep.subr.bf16.mxu0 0
    %2433 = vmatpush1.bf16.msra.mxu0 %v2411
    %2434 = vmatprep.subr.bf16.mxu0 0
    %2435 = vmatpush1.bf16.msra.mxu0 %v2412
    %2436 = vmatprep.subr.bf16.mxu0 0
    %2437 = vmatpush1.bf16.msra.mxu0 %v2413
    %2438 = vmatprep.subr.bf16.mxu0 0
    %2439 = vmatpush1.bf16.msra.mxu0 0
    %2440 = vmatprep.subr.bf16.mxu0 0
    %2441 = vmatpush1.bf16.msra.mxu0 0
    %2442 = vmatprep.subr.bf16.mxu0 0
    %2443 = vmatpush1.bf16.msra.mxu0 0
    %2444 = vmatprep.subr.bf16.mxu0 0
    %2445 = vmatpush1.bf16.msra.mxu0 0
    %2446 = vmatprep.subr.bf16.mxu0 0
    %2447 = vmatpush1.bf16.msra.mxu0 0
    %2448 = vmatprep.subr.bf16.mxu0 0
    %2449 = vmatpush1.bf16.msra.mxu0 0
    %2450 = vmatprep.subr.bf16.mxu0 0
    %2451 = vmatpush1.bf16.msra.mxu0 0
    %2452 = vmatprep.subr.bf16.mxu0 0
    %2453 = vmatpush1.bf16.msra.mxu0 0
    %2454 = vmatprep.mubr.bf16.mxu0 0
    %2455 = vmatmul.mubr.bf16.gmra.mrb[0].mxu0 %v2350
    %v2456 = vpop.f32.mrb[0].mxu0
    %v2457 = vadd.f32 %v2372, %v2456
    %v2458 = vpop.f32.mrb[0].mxu0
    %v2459 = vpop.f32.mrb[0].mxu0
    %v2460 = vpop.f32.mrb[0].mxu0
    %2461 = vdwg.mxu0
    %v2462 = vmax.f32 %v2457, 0.0
    %v2463 = vpack.c.bf16 %v2462, %v2462
    %v2464 = vld [vmem:[%s5] sm:$0xf]
    %v2465 = vld [vmem:[%s5 + $0x4] sm:$0xf]
    %v2466 = vld [vmem:[%s5 + $0x8] sm:$0xf]
    %v2467 = vld [vmem:[%s5 + $0xc] sm:$0xf]
    %v2468 = vld [vmem:[%s5 + $0x10] sm:$0xf]
    %v2469 = vld [vmem:[%s5 + $0x14] sm:$0xf]
    %v2470 = vld [vmem:[%s5 + $0x18] sm:$0xf]
    %v2471 = vld [vmem:[%s5 + $0x1c] sm:$0xf]
    %v2472 = vld [vmem:[%s5 + $0x20] sm:$0xf]
    %v2473 = vld [vmem:[%s5 + $0x24] sm:$0xf]
    %v2474 = vld [vmem:[%s5 + $0x28] sm:$0xf]
    %v2475 = vld [vmem:[%s5 + $0x2c] sm:$0xf]
    %v2476 = vld [vmem:[%s5 + $0x30] sm:$0xf]
    %v2477 = vld [vmem:[%s5 + $0x34] sm:$0xf]
    %v2478 = vld [vmem:[%s5 + $0x38] sm:$0xf]
    %v2479 = vld [vmem:[%s5 + $0x3c] sm:$0xf]
    %v2480 = vld [vmem:[%s6] sm:$0x1]
    %v2482 = vlaneseq
    %v2483 = vshrl.u32 %v2482, 7
    %v2484 = vsub.s32 0, %v2483
    %v2485 = vrot.slane %v2480, %v2484
    %v2503 = vunpack.c.l.b16 %v2464
    %v2504 = vunpack.c.l.b16 %v2465
    %v2505 = vunpack.c.l.b16 %v2466
    %v2506 = vunpack.c.l.b16 %v2467
    %v2507 = vunpack.c.l.b16 %v2468
    %v2508 = vunpack.c.l.b16 %v2469
    %v2509 = vunpack.c.l.b16 %v2470
    %v2510 = vunpack.c.l.b16 %v2471
    %v2511 = vunpack.c.l.b16 %v2472
    %v2512 = vunpack.c.l.b16 %v2473
    %v2513 = vunpack.c.l.b16 %v2474
    %v2514 = vunpack.c.l.b16 %v2475
    %v2515 = vunpack.c.l.b16 %v2476
    %v2516 = vunpack.c.l.b16 %v2477
    %v2517 = vunpack.c.l.b16 %v2478
    %v2518 = vunpack.c.l.b16 %v2479
    %v2519 = vpack.c.b16 %v2504, %v2503
    %v2520 = vpack.c.b16 %v2506, %v2505
    %v2521 = vpack.c.b16 %v2508, %v2507
    %v2522 = vpack.c.b16 %v2510, %v2509
    %v2523 = vpack.c.b16 %v2512, %v2511
    %v2524 = vpack.c.b16 %v2514, %v2513
    %v2525 = vpack.c.b16 %v2516, %v2515
    %v2526 = vpack.c.b16 %v2518, %v2517
    %2535 = vmatprep.subr.bf16.mxu0 0
    %2536 = vmatpush1.bf16.msra.mxu0 %v2519
    %2537 = vmatprep.subr.bf16.mxu0 0
    %2538 = vmatpush1.bf16.msra.mxu0 %v2520
    %2539 = vmatprep.subr.bf16.mxu0 0
    %2540 = vmatpush1.bf16.msra.mxu0 %v2521
    %2541 = vmatprep.subr.bf16.mxu0 0
    %2542 = vmatpush1.bf16.msra.mxu0 %v2522
    %2543 = vmatprep.subr.bf16.mxu0 0
    %2544 = vmatpush1.bf16.msra.mxu0 %v2523
    %2545 = vmatprep.subr.bf16.mxu0 0
    %2546 = vmatpush1.bf16.msra.mxu0 %v2524
    %2547 = vmatprep.subr.bf16.mxu0 0
    %2548 = vmatpush1.bf16.msra.mxu0 %v2525
    %2549 = vmatprep.subr.bf16.mxu0 0
    %2550 = vmatpush1.bf16.msra.mxu0 %v2526
    %2551 = vmatprep.subr.bf16.mxu0 0
    %2552 = vmatpush1.bf16.msra.mxu0 0
    %2553 = vmatprep.subr.bf16.mxu0 0
    %2554 = vmatpush1.bf16.msra.mxu0 0
    %2555 = vmatprep.subr.bf16.mxu0 0
    %2556 = vmatpush1.bf16.msra.mxu0 0
    %2557 = vmatprep.subr.bf16.mxu0 0
    %2558 = vmatpush1.bf16.msra.mxu0 0
    %2559 = vmatprep.subr.bf16.mxu0 0
    %2560 = vmatpush1.bf16.msra.mxu0 0
    %2561 = vmatprep.subr.bf16.mxu0 0
    %2562 = vmatpush1.bf16.msra.mxu0 0
    %2563 = vmatprep.subr.bf16.mxu0 0
    %2564 = vmatpush1.bf16.msra.mxu0 0
    %2565 = vmatprep.subr.bf16.mxu0 0
    %2566 = vmatpush1.bf16.msra.mxu0 0
    %2567 = vmatprep.mubr.bf16.mxu0 0
    %2568 = vmatmul.mubr.bf16.gmra.mrb[0].mxu0 %v2463
    %v2569 = vpop.f32.mrb[0].mxu0
    %v2570 = vadd.f32 %v2485, %v2569
    %v2571 = vpop.f32.mrb[0].mxu0
    %v2572 = vpop.f32.mrb[0].mxu0
    %v2573 = vpop.f32.mrb[0].mxu0
    %2574 = vdwg.mxu0
    %2575 = vst [vmem:[#allocation2] sm:$0x3] %v2570
    // Predicated region
    $region30: #{net_forward.5} parent=1 // pred_check
      _
    $region31: #{net_forward.5} parent=1 // pred_check_branch
      %2577 = sbr.rel (0) target = $region33
    $region32: #{net_forward.5} parent=1 // pred_region
      %s2579 = ssub.s32 32, 32
      %2580 = vsyncadd [#allocation3], %s2579
      %s2582 = sshll.u32 [#allocation2], 4
      %s2583 = int_to_ptr.vmem [resolvable:$true] %s2582
      %2585 = dma.vmem_to_hbm [thread:$0]  %s2583, 32, %s7, [#allocation3]
    $region33: #{net_forward.5} parent=1 // pred_fallthru
      _
    // Predicated region
    $region34: #{net_forward.5} parent=1 // pred_check
      _
    $region35: #{net_forward.5} parent=1 // pred_check_branch
      %2587 = sbr.rel (0) target = $region37
    $region36: #{net_forward.5} parent=1 // pred_region
      %2588 = dma.done [#allocation3], 32
    $region37: #{net_forward.5} parent=1 // pred_fallthru
      _
    %2589 = vsyncpa [#allocation3], 1

</llo_original>
